<compile_context>
chip_gen: v7x
topology: tpu7x:2x2x1
jax: 0.10.0
libtpu: 0.0.40
codegen_flags: <defaults>
</compile_context>

<pallas_src>
import jax
import jax.numpy as jnp
from jax import lax
from jax.experimental import pallas as pl
from jax.experimental.pallas import tpu as pltpu

N, C, H, W = 2, 16, 16, 16        # batch, channels, height, width
R = 8                             # number of ROI proposals
POOL = 2                          # ROI pooling output_size
NBIN = POOL * POOL                # 4 bins per proposal
FEAT = C * NBIN                   # 64 per branch
FC_IN, FC_OUT = 2 * FEAT, 64      # Linear(128, 64)
NPIX = N * H * W                  # 512 flat pixels (both images)


def fused_roi_kernel(xpad_ref, xcp_ref, rois_ref, w9_ref, bconv_ref,
                     wfc_ref, bfc_ref, out_ref):
    # ---------- conv branch prep: 3x3 conv (pad=1) + ReLU as ONE im2col matmul ----------
    xpad = xpad_ref[...]                                    # (N, H+2, W+2, C)
    cols = []
    for k in range(9):                                      # static 3x3 tap unroll
        dh, dw = k // 3, k % 3
        cols.append(xpad[:, dh:dh + H, dw:dw + W, :].reshape(NPIX, C))
    im2col = jnp.concatenate(cols, axis=-1)                 # (512, 144)
    conv_flat = jnp.maximum(
        jnp.dot(im2col, w9_ref[...], preferred_element_type=jnp.float32)
        + bconv_ref[...], 0.0)                              # (512, 16); row = n*H*W + h*W + w

    # ---------- proposal boxes as (R, 1) float vectors ----------
    p = jnp.floor(rois_ref[...] + 0.5)                      # round(), like torch roi_pool
    bidx = p[:, 0:1]
    x1, y1, x2, y2 = p[:, 1:2], p[:, 2:3], p[:, 3:4], p[:, 4:5]
    roi_w = jnp.maximum(x2 - x1 + 1.0, 1.0)
    roi_h = jnp.maximum(y2 - y1 + 1.0, 1.0)

    # ---------- flat pixel coordinates, (1, NPIX) ----------
    pix = lax.broadcasted_iota(jnp.int32, (1, NPIX), 1).astype(jnp.float32)
    pix_n = jnp.floor(pix / (H * W))
    rem = pix - pix_n * (H * W)
    pix_h = jnp.floor(rem / W)
    pix_w = rem - pix_h * W

    x_cp = xcp_ref[...]                                     # (C, NPIX) lane-dense raw input

    avg_bins, max_bins = [], []
    for ph in range(POOL):                                  # static 2x2 bin unroll
        for pw in range(POOL):
            hs = jnp.clip(y1 + jnp.floor(ph * roi_h / POOL), 0.0, H - 1.0)
            ws = jnp.clip(x1 + jnp.floor(pw * roi_w / POOL), 0.0, W - 1.0)
            he = jnp.clip(y1 + jnp.ceil((ph + 1) * roi_h / POOL), hs + 1.0, float(H))
            we = jnp.clip(x1 + jnp.ceil((pw + 1) * roi_w / POOL), ws + 1.0, float(W))
            # (R, NPIX) mask selects the proposal's image AND its bin window.
            mask = ((pix_n == bidx) & (pix_h >= hs) & (pix_h < he) &
                    (pix_w >= ws) & (pix_w < we))
            maskf = mask.astype(jnp.float32)
            cnt = jnp.maximum(jnp.sum(maskf, axis=-1, keepdims=True), 1.0)
            # conv branch: ROI average pool == normalized-mask matmul on the MXU.
            avg_bins.append(jnp.dot(maskf / cnt, conv_flat,
                                    preferred_element_type=jnp.float32))   # (R, C)
            # roi branch: masked max over pixels, lane-dense along NPIX.
            masked = jnp.where(mask[:, None, :], x_cp[None, :, :], -jnp.inf)
            max_bins.append(jnp.max(masked, axis=-1))                      # (R, C)

    # ---------- batched FC + L2 normalize ----------
    # Features are bin-major per branch; w_fc rows were pre-permuted in the wrapper so the
    # math matches torch's channel-major [C, 2, 2].flatten() + hstack((conv_x, roi_x)).
    feats = jnp.concatenate(avg_bins + max_bins, axis=-1)   # (R, 128): [conv | roi]
    y = jnp.dot(feats, wfc_ref[...],
                preferred_element_type=jnp.float32) + bfc_ref[...]         # (R, 64)
    inv = lax.rsqrt(jnp.maximum(jnp.sum(y * y, axis=-1, keepdims=True), 1e-24))
    out_ref[...] = y * inv


def init_params(key):
    k1, k2, k3 = jax.random.split(key, 3)
    # Conv2d(16, 16, 3, padding=1): weight (kh, kw, cin, cout) -> im2col layout (144, 16)
    w_conv = jax.random.normal(k1, (3, 3, C, C), jnp.float32) * 0.1
    w9 = w_conv.reshape(9 * C, C)
    b_conv = jnp.zeros((1, C), jnp.float32)
    # nn.Linear(128, 64): torch weight (64, 128). Kernel consumes its transpose with rows
    # permuted from torch's channel-major pooled-feature order to the kernel's bin-major order.
    w_fc_torch = jax.random.normal(k2, (FC_OUT, FC_IN), jnp.float32) * 0.05
    b_fc = jax.random.normal(k3, (FC_OUT,), jnp.float32) * 0.05
    w_fc = jnp.transpose(w_fc_torch)                        # (128, 64)
    perm = [o + c * NBIN + b for o in (0, FEAT) for b in range(NBIN) for c in range(C)]
    w_fc_k = w_fc[jnp.array(perm, jnp.int32), :]
    return w9, b_conv, w_fc_k, b_fc.reshape(1, FC_OUT)


@jax.jit
def baseline_roi_forward(x_nchw, proposals, w9, b_conv, w_fc_k, b_fc):
    # Layout plumbing (pure XLA glue): halo-padded NHWC for the im2col conv, plus a
    # lane-dense (C, N*H*W) copy for the vectorized ROI max branch.
    x_nhwc = jnp.transpose(x_nchw, (0, 2, 3, 1))
    x_pad = jnp.pad(x_nhwc, ((0, 0), (1, 1), (1, 1), (0, 0)))
    x_cp = jnp.transpose(x_nchw, (1, 0, 2, 3)).reshape(C, NPIX)
    return pl.pallas_call(
        fused_roi_kernel,
        out_shape=jax.ShapeDtypeStruct((R, FC_OUT), jnp.float32),
        grid=(1,),
        in_specs=[
            pl.BlockSpec((N, H + 2, W + 2, C), lambda i: (0, 0, 0, 0)),
            pl.BlockSpec((C, NPIX), lambda i: (0, 0)),
            pl.BlockSpec((R, 5), lambda i: (0, 0)),
            pl.BlockSpec((9 * C, C), lambda i: (0, 0)),
            pl.BlockSpec((1, C), lambda i: (0, 0)),
            pl.BlockSpec((FC_IN, FC_OUT), lambda i: (0, 0)),
            pl.BlockSpec((1, FC_OUT), lambda i: (0, 0)),
        ],
        out_specs=pl.BlockSpec((R, FC_OUT), lambda i: (0, 0)),
        compiler_params=pltpu.CompilerParams(
            dimension_semantics=("arbitrary",)),
    )(x_pad, x_cp, proposals.astype(jnp.float32), w9, b_conv, w_fc_k, b_fc)


if __name__ == "__main__":
    key = jax.random.PRNGKey(0)
    kx, kp, kparams = jax.random.split(key, 3)

    x = jax.random.normal(kx, (N, C, H, W), jnp.float32)    # NCHW like PyTorch

    kb, k1, k2, k3, k4 = jax.random.split(kp, 5)
    bidx = jax.random.randint(kb, (R,), 0, N)
    xa = jax.random.randint(k1, (R,), 0, W)
    xb = jax.random.randint(k2, (R,), 0, W)
    ya = jax.random.randint(k3, (R,), 0, H)
    yb = jax.random.randint(k4, (R,), 0, H)
    proposals = jnp.stack(
        [bidx, jnp.minimum(xa, xb), jnp.minimum(ya, yb),
         jnp.maximum(xa, xb), jnp.maximum(ya, yb)], axis=1
    ).astype(jnp.float32)                                   # [R, 5] = (batch, x1, y1, x2, y2)

    w9, b_conv, w_fc_k, b_fc = init_params(kparams)

    out = baseline_roi_forward(x, proposals, w9, b_conv, w_fc_k, b_fc)
    out = jax.block_until_ready(out)

    assert out.shape == (R, FC_OUT)
    assert bool(jnp.all(jnp.isfinite(out)))
    # rows are L2-normalized
    assert jnp.allclose(jnp.linalg.norm(out, axis=1), 1.0, atol=1e-4)
    print("KERNEL_OK")
</pallas_src>

<mosaic_0001>
module attributes {stable_mosaic.version = 11 : i64} {
  func.func @fused_roi_kernel(%arg0: i32, %arg1: memref<2x18x18x16xf32, #tpu.memory_space<vmem>>, %arg2: memref<16x512xf32, #tpu.memory_space<vmem>>, %arg3: memref<8x5xf32, #tpu.memory_space<vmem>>, %arg4: memref<144x16xf32, #tpu.memory_space<vmem>>, %arg5: memref<1x16xf32, #tpu.memory_space<vmem>>, %arg6: memref<128x64xf32, #tpu.memory_space<vmem>>, %arg7: memref<1x64xf32, #tpu.memory_space<vmem>>, %arg8: memref<8x64xf32, #tpu.memory_space<vmem>>) attributes {dimension_semantics = [#tpu.dimension_semantics<arbitrary>], iteration_bounds = array<i64: 1>, scalar_prefetch = 0 : i64, scratch_operands = 0 : i64, tpu.core_type = #tpu.core_type<tc>, window_params = [{pipeline_mode = #tpu.pipeline_mode<synchronous>, transform_indices = @transform_0, window_bounds = array<i64: 2, 18, 18, 16>}, {pipeline_mode = #tpu.pipeline_mode<synchronous>, transform_indices = @transform_1, window_bounds = array<i64: 16, 512>}, {pipeline_mode = #tpu.pipeline_mode<synchronous>, transform_indices = @transform_2, window_bounds = array<i64: 8, 5>}, {pipeline_mode = #tpu.pipeline_mode<synchronous>, transform_indices = @transform_3, window_bounds = array<i64: 144, 16>}, {pipeline_mode = #tpu.pipeline_mode<synchronous>, transform_indices = @transform_4, window_bounds = array<i64: 1, 16>}, {pipeline_mode = #tpu.pipeline_mode<synchronous>, transform_indices = @transform_5, window_bounds = array<i64: 128, 64>}, {pipeline_mode = #tpu.pipeline_mode<synchronous>, transform_indices = @transform_6, window_bounds = array<i64: 1, 64>}, {pipeline_mode = #tpu.pipeline_mode<synchronous>, transform_indices = @transform_7, window_bounds = array<i64: 8, 64>}]} {
    %c0 = arith.constant 0 : index
    %c0_0 = arith.constant 0 : index
    %c0_1 = arith.constant 0 : index
    %c0_2 = arith.constant 0 : index
    %0 = vector.load %arg1[%c0, %c0_0, %c0_1, %c0_2] : memref<2x18x18x16xf32, #tpu.memory_space<vmem>>, vector<2x18x18x16xf32>
    %1 = vector.extract_strided_slice %0 {offsets = [0, 0, 0, 0], sizes = [2, 16, 16, 16], strides = [1, 1, 1, 1]} : vector<2x18x18x16xf32> to vector<2x16x16x16xf32>
    %2 = vector.shape_cast %1 : vector<2x16x16x16xf32> to vector<512x16xf32>
    %3 = vector.extract_strided_slice %0 {offsets = [0, 0, 1, 0], sizes = [2, 16, 16, 16], strides = [1, 1, 1, 1]} : vector<2x18x18x16xf32> to vector<2x16x16x16xf32>
    %4 = vector.shape_cast %3 : vector<2x16x16x16xf32> to vector<512x16xf32>
    %5 = vector.extract_strided_slice %0 {offsets = [0, 0, 2, 0], sizes = [2, 16, 16, 16], strides = [1, 1, 1, 1]} : vector<2x18x18x16xf32> to vector<2x16x16x16xf32>
    %6 = vector.shape_cast %5 : vector<2x16x16x16xf32> to vector<512x16xf32>
    %7 = vector.extract_strided_slice %0 {offsets = [0, 1, 0, 0], sizes = [2, 16, 16, 16], strides = [1, 1, 1, 1]} : vector<2x18x18x16xf32> to vector<2x16x16x16xf32>
    %8 = vector.shape_cast %7 : vector<2x16x16x16xf32> to vector<512x16xf32>
    %9 = vector.extract_strided_slice %0 {offsets = [0, 1, 1, 0], sizes = [2, 16, 16, 16], strides = [1, 1, 1, 1]} : vector<2x18x18x16xf32> to vector<2x16x16x16xf32>
    %10 = vector.shape_cast %9 : vector<2x16x16x16xf32> to vector<512x16xf32>
    %11 = vector.extract_strided_slice %0 {offsets = [0, 1, 2, 0], sizes = [2, 16, 16, 16], strides = [1, 1, 1, 1]} : vector<2x18x18x16xf32> to vector<2x16x16x16xf32>
    %12 = vector.shape_cast %11 : vector<2x16x16x16xf32> to vector<512x16xf32>
    %13 = vector.extract_strided_slice %0 {offsets = [0, 2, 0, 0], sizes = [2, 16, 16, 16], strides = [1, 1, 1, 1]} : vector<2x18x18x16xf32> to vector<2x16x16x16xf32>
    %14 = vector.shape_cast %13 : vector<2x16x16x16xf32> to vector<512x16xf32>
    %15 = vector.extract_strided_slice %0 {offsets = [0, 2, 1, 0], sizes = [2, 16, 16, 16], strides = [1, 1, 1, 1]} : vector<2x18x18x16xf32> to vector<2x16x16x16xf32>
    %16 = vector.shape_cast %15 : vector<2x16x16x16xf32> to vector<512x16xf32>
    %17 = vector.extract_strided_slice %0 {offsets = [0, 2, 2, 0], sizes = [2, 16, 16, 16], strides = [1, 1, 1, 1]} : vector<2x18x18x16xf32> to vector<2x16x16x16xf32>
    %18 = vector.shape_cast %17 : vector<2x16x16x16xf32> to vector<512x16xf32>
    %19 = tpu.concatenate %2, %4, %6, %8, %10, %12, %14, %16, %18 in 1 : vector<512x16xf32>, vector<512x16xf32>, vector<512x16xf32>, vector<512x16xf32>, vector<512x16xf32>, vector<512x16xf32>, vector<512x16xf32>, vector<512x16xf32>, vector<512x16xf32> -> vector<512x144xf32>
    %c0_3 = arith.constant 0 : index
    %c0_4 = arith.constant 0 : index
    %20 = vector.load %arg4[%c0_3, %c0_4] : memref<144x16xf32, #tpu.memory_space<vmem>>, vector<144x16xf32>
    %cst = arith.constant dense<0.000000e+00> : vector<512x16xf32>
    %21 = tpu.matmul %19, %20, %cst {dimension_numbers = #tpu.dot_dimension_numbers<[1], [0], [0], [1], [0, 0, 1, 1], [], []>} : vector<512x144xf32>, vector<144x16xf32>, vector<512x16xf32> -> vector<512x16xf32>
    %c0_5 = arith.constant 0 : index
    %c0_6 = arith.constant 0 : index
    %22 = vector.load %arg5[%c0_5, %c0_6] : memref<1x16xf32, #tpu.memory_space<vmem>>, vector<1x16xf32>
    %23 = vector.broadcast %22 : vector<1x16xf32> to vector<512x16xf32>
    %24 = arith.addf %21, %23 : vector<512x16xf32>
    %cst_7 = arith.constant 0.000000e+00 : f32
    %25 = vector.broadcast %cst_7 : f32 to vector<512x16xf32>
    %26 = arith.maximumf %24, %25 : vector<512x16xf32>
    %c0_8 = arith.constant 0 : index
    %c0_9 = arith.constant 0 : index
    %27 = vector.load %arg3[%c0_8, %c0_9] : memref<8x5xf32, #tpu.memory_space<vmem>>, vector<8x5xf32>
    %cst_10 = arith.constant 5.000000e-01 : f32
    %28 = vector.broadcast %cst_10 : f32 to vector<8x5xf32>
    %29 = arith.addf %27, %28 : vector<8x5xf32>
    %30 = math.floor %29 : vector<8x5xf32>
    %31 = vector.extract_strided_slice %30 {offsets = [0, 0], sizes = [8, 1], strides = [1, 1]} : vector<8x5xf32> to vector<8x1xf32>
    %32 = vector.extract_strided_slice %30 {offsets = [0, 1], sizes = [8, 1], strides = [1, 1]} : vector<8x5xf32> to vector<8x1xf32>
    %33 = vector.extract_strided_slice %30 {offsets = [0, 2], sizes = [8, 1], strides = [1, 1]} : vector<8x5xf32> to vector<8x1xf32>
    %34 = vector.extract_strided_slice %30 {offsets = [0, 3], sizes = [8, 1], strides = [1, 1]} : vector<8x5xf32> to vector<8x1xf32>
    %35 = vector.extract_strided_slice %30 {offsets = [0, 4], sizes = [8, 1], strides = [1, 1]} : vector<8x5xf32> to vector<8x1xf32>
    %36 = arith.subf %34, %32 : vector<8x1xf32>
    %cst_11 = arith.constant 1.000000e+00 : f32
    %37 = vector.broadcast %cst_11 : f32 to vector<8x1xf32>
    %38 = arith.addf %36, %37 : vector<8x1xf32>
    %cst_12 = arith.constant 1.000000e+00 : f32
    %39 = vector.broadcast %cst_12 : f32 to vector<8x1xf32>
    %40 = arith.maximumf %38, %39 : vector<8x1xf32>
    %41 = arith.subf %35, %33 : vector<8x1xf32>
    %cst_13 = arith.constant 1.000000e+00 : f32
    %42 = vector.broadcast %cst_13 : f32 to vector<8x1xf32>
    %43 = arith.addf %41, %42 : vector<8x1xf32>
    %cst_14 = arith.constant 1.000000e+00 : f32
    %44 = vector.broadcast %cst_14 : f32 to vector<8x1xf32>
    %45 = arith.maximumf %43, %44 : vector<8x1xf32>
    %46 = tpu.iota {dimensions = array<i32: 1>} : vector<1x512xi32>
    %47 = arith.sitofp %46 : vector<1x512xi32> to vector<1x512xf32>
    %cst_15 = arith.constant 2.560000e+02 : f32
    %48 = vector.broadcast %cst_15 : f32 to vector<1x512xf32>
    %49 = arith.divf %47, %48 : vector<1x512xf32>
    %50 = math.floor %49 : vector<1x512xf32>
    %cst_16 = arith.constant 2.560000e+02 : f32
    %51 = vector.broadcast %cst_16 : f32 to vector<1x512xf32>
    %52 = arith.mulf %50, %51 : vector<1x512xf32>
    %53 = arith.subf %47, %52 : vector<1x512xf32>
    %cst_17 = arith.constant 1.600000e+01 : f32
    %54 = vector.broadcast %cst_17 : f32 to vector<1x512xf32>
    %55 = arith.divf %53, %54 : vector<1x512xf32>
    %56 = math.floor %55 : vector<1x512xf32>
    %cst_18 = arith.constant 1.600000e+01 : f32
    %57 = vector.broadcast %cst_18 : f32 to vector<1x512xf32>
    %58 = arith.mulf %56, %57 : vector<1x512xf32>
    %59 = arith.subf %53, %58 : vector<1x512xf32>
    %c0_19 = arith.constant 0 : index
    %c0_20 = arith.constant 0 : index
    %60 = vector.load %arg2[%c0_19, %c0_20] : memref<16x512xf32, #tpu.memory_space<vmem>>, vector<16x512xf32>
    %cst_21 = arith.constant 0.000000e+00 : f32
    %61 = vector.broadcast %cst_21 : f32 to vector<8x1xf32>
    %62 = arith.mulf %61, %45 : vector<8x1xf32>
    %cst_22 = arith.constant 2.000000e+00 : f32
    %63 = vector.broadcast %cst_22 : f32 to vector<8x1xf32>
    %64 = arith.divf %62, %63 : vector<8x1xf32>
    %65 = math.floor %64 : vector<8x1xf32>
    %66 = arith.addf %33, %65 : vector<8x1xf32>
    %cst_23 = arith.constant 0.000000e+00 : f32
    %cst_24 = arith.constant 1.500000e+01 : f32
    %67 = vector.broadcast %cst_23 : f32 to vector<8x1xf32>
    %68 = arith.maximumf %67, %66 : vector<8x1xf32>
    %69 = vector.broadcast %cst_24 : f32 to vector<8x1xf32>
    %70 = arith.minimumf %69, %68 : vector<8x1xf32>
    %cst_25 = arith.constant 0.000000e+00 : f32
    %71 = vector.broadcast %cst_25 : f32 to vector<8x1xf32>
    %72 = arith.mulf %71, %40 : vector<8x1xf32>
    %cst_26 = arith.constant 2.000000e+00 : f32
    %73 = vector.broadcast %cst_26 : f32 to vector<8x1xf32>
    %74 = arith.divf %72, %73 : vector<8x1xf32>
    %75 = math.floor %74 : vector<8x1xf32>
    %76 = arith.addf %32, %75 : vector<8x1xf32>
    %cst_27 = arith.constant 0.000000e+00 : f32
    %cst_28 = arith.constant 1.500000e+01 : f32
    %77 = vector.broadcast %cst_27 : f32 to vector<8x1xf32>
    %78 = arith.maximumf %77, %76 : vector<8x1xf32>
    %79 = vector.broadcast %cst_28 : f32 to vector<8x1xf32>
    %80 = arith.minimumf %79, %78 : vector<8x1xf32>
    %cst_29 = arith.constant 1.000000e+00 : f32
    %81 = vector.broadcast %cst_29 : f32 to vector<8x1xf32>
    %82 = arith.mulf %81, %45 : vector<8x1xf32>
    %cst_30 = arith.constant 2.000000e+00 : f32
    %83 = vector.broadcast %cst_30 : f32 to vector<8x1xf32>
    %84 = arith.divf %82, %83 : vector<8x1xf32>
    %85 = math.ceil %84 : vector<8x1xf32>
    %86 = arith.addf %33, %85 : vector<8x1xf32>
    %cst_31 = arith.constant 1.000000e+00 : f32
    %87 = vector.broadcast %cst_31 : f32 to vector<8x1xf32>
    %88 = arith.addf %70, %87 : vector<8x1xf32>
    %cst_32 = arith.constant 1.600000e+01 : f32
    %89 = arith.maximumf %88, %86 : vector<8x1xf32>
    %90 = vector.broadcast %cst_32 : f32 to vector<8x1xf32>
    %91 = arith.minimumf %90, %89 : vector<8x1xf32>
    %cst_33 = arith.constant 1.000000e+00 : f32
    %92 = vector.broadcast %cst_33 : f32 to vector<8x1xf32>
    %93 = arith.mulf %92, %40 : vector<8x1xf32>
    %cst_34 = arith.constant 2.000000e+00 : f32
    %94 = vector.broadcast %cst_34 : f32 to vector<8x1xf32>
    %95 = arith.divf %93, %94 : vector<8x1xf32>
    %96 = math.ceil %95 : vector<8x1xf32>
    %97 = arith.addf %32, %96 : vector<8x1xf32>
    %cst_35 = arith.constant 1.000000e+00 : f32
    %98 = vector.broadcast %cst_35 : f32 to vector<8x1xf32>
    %99 = arith.addf %80, %98 : vector<8x1xf32>
    %cst_36 = arith.constant 1.600000e+01 : f32
    %100 = arith.maximumf %99, %97 : vector<8x1xf32>
    %101 = vector.broadcast %cst_36 : f32 to vector<8x1xf32>
    %102 = arith.minimumf %101, %100 : vector<8x1xf32>
    %103 = vector.broadcast %50 : vector<1x512xf32> to vector<8x512xf32>
    %104 = vector.broadcast %31 : vector<8x1xf32> to vector<8x512xf32>
    %105 = arith.cmpf oeq, %103, %104 : vector<8x512xf32>
    %106 = vector.broadcast %56 : vector<1x512xf32> to vector<8x512xf32>
    %107 = vector.broadcast %70 : vector<8x1xf32> to vector<8x512xf32>
    %108 = arith.cmpf oge, %106, %107 : vector<8x512xf32>
    %109 = arith.andi %105, %108 : vector<8x512xi1>
    %110 = vector.broadcast %56 : vector<1x512xf32> to vector<8x512xf32>
    %111 = vector.broadcast %91 : vector<8x1xf32> to vector<8x512xf32>
    %112 = arith.cmpf olt, %110, %111 : vector<8x512xf32>
    %113 = arith.andi %109, %112 : vector<8x512xi1>
    %114 = vector.broadcast %59 : vector<1x512xf32> to vector<8x512xf32>
    %115 = vector.broadcast %80 : vector<8x1xf32> to vector<8x512xf32>
    %116 = arith.cmpf oge, %114, %115 : vector<8x512xf32>
    %117 = arith.andi %113, %116 : vector<8x512xi1>
    %118 = vector.broadcast %59 : vector<1x512xf32> to vector<8x512xf32>
    %119 = vector.broadcast %102 : vector<8x1xf32> to vector<8x512xf32>
    %120 = arith.cmpf olt, %118, %119 : vector<8x512xf32>
    %121 = arith.andi %117, %120 : vector<8x512xi1>
    %122 = arith.extui %121 : vector<8x512xi1> to vector<8x512xi32>
    %123 = arith.sitofp %122 : vector<8x512xi32> to vector<8x512xf32>
    %cst_37 = arith.constant dense<0.000000e+00> : vector<8xf32>
    %124 = vector.multi_reduction <add>, %123, %cst_37 [1] : vector<8x512xf32> to vector<8xf32>
    %125 = vector.shape_cast %124 : vector<8xf32> to vector<8x1xf32>
    %cst_38 = arith.constant 1.000000e+00 : f32
    %126 = vector.broadcast %cst_38 : f32 to vector<8x1xf32>
    %127 = arith.maximumf %125, %126 : vector<8x1xf32>
    %128 = vector.broadcast %127 : vector<8x1xf32> to vector<8x512xf32>
    %129 = arith.divf %123, %128 : vector<8x512xf32>
    %cst_39 = arith.constant dense<0.000000e+00> : vector<8x16xf32>
    %130 = tpu.matmul %129, %26, %cst_39 {dimension_numbers = #tpu.dot_dimension_numbers<[1], [0], [0], [1], [0, 0, 1, 1], [], []>} : vector<8x512xf32>, vector<512x16xf32>, vector<8x16xf32> -> vector<8x16xf32>
    %131 = vector.shape_cast %121 : vector<8x512xi1> to vector<8x1x512xi1>
    %132 = vector.shape_cast %60 : vector<16x512xf32> to vector<1x16x512xf32>
    %cst_40 = arith.constant 0xFF800000 : f32
    %133 = vector.shape_cast %131 : vector<8x1x512xi1> to vector<8x1x512xi1>
    %134 = vector.broadcast %133 : vector<8x1x512xi1> to vector<8x16x512xi1>
    %135 = vector.shape_cast %132 : vector<1x16x512xf32> to vector<1x16x512xf32>
    %136 = vector.broadcast %135 : vector<1x16x512xf32> to vector<8x16x512xf32>
    %137 = vector.broadcast %cst_40 : f32 to vector<8x16x512xf32>
    %138 = arith.select %134, %136, %137 : vector<8x16x512xi1>, vector<8x16x512xf32>
    %cst_41 = arith.constant dense<0xFF800000> : vector<8x16xf32>
    %139 = vector.multi_reduction <maximumf>, %138, %cst_41 [2] : vector<8x16x512xf32> to vector<8x16xf32>
    %cst_42 = arith.constant 0.000000e+00 : f32
    %140 = vector.broadcast %cst_42 : f32 to vector<8x1xf32>
    %141 = arith.mulf %140, %45 : vector<8x1xf32>
    %cst_43 = arith.constant 2.000000e+00 : f32
    %142 = vector.broadcast %cst_43 : f32 to vector<8x1xf32>
    %143 = arith.divf %141, %142 : vector<8x1xf32>
    %144 = math.floor %143 : vector<8x1xf32>
    %145 = arith.addf %33, %144 : vector<8x1xf32>
    %cst_44 = arith.constant 0.000000e+00 : f32
    %cst_45 = arith.constant 1.500000e+01 : f32
    %146 = vector.broadcast %cst_44 : f32 to vector<8x1xf32>
    %147 = arith.maximumf %146, %145 : vector<8x1xf32>
    %148 = vector.broadcast %cst_45 : f32 to vector<8x1xf32>
    %149 = arith.minimumf %148, %147 : vector<8x1xf32>
    %cst_46 = arith.constant 1.000000e+00 : f32
    %150 = vector.broadcast %cst_46 : f32 to vector<8x1xf32>
    %151 = arith.mulf %150, %40 : vector<8x1xf32>
    %cst_47 = arith.constant 2.000000e+00 : f32
    %152 = vector.broadcast %cst_47 : f32 to vector<8x1xf32>
    %153 = arith.divf %151, %152 : vector<8x1xf32>
    %154 = math.floor %153 : vector<8x1xf32>
    %155 = arith.addf %32, %154 : vector<8x1xf32>
    %cst_48 = arith.constant 0.000000e+00 : f32
    %cst_49 = arith.constant 1.500000e+01 : f32
    %156 = vector.broadcast %cst_48 : f32 to vector<8x1xf32>
    %157 = arith.maximumf %156, %155 : vector<8x1xf32>
    %158 = vector.broadcast %cst_49 : f32 to vector<8x1xf32>
    %159 = arith.minimumf %158, %157 : vector<8x1xf32>
    %cst_50 = arith.constant 1.000000e+00 : f32
    %160 = vector.broadcast %cst_50 : f32 to vector<8x1xf32>
    %161 = arith.mulf %160, %45 : vector<8x1xf32>
    %cst_51 = arith.constant 2.000000e+00 : f32
    %162 = vector.broadcast %cst_51 : f32 to vector<8x1xf32>
    %163 = arith.divf %161, %162 : vector<8x1xf32>
    %164 = math.ceil %163 : vector<8x1xf32>
    %165 = arith.addf %33, %164 : vector<8x1xf32>
    %cst_52 = arith.constant 1.000000e+00 : f32
    %166 = vector.broadcast %cst_52 : f32 to vector<8x1xf32>
    %167 = arith.addf %149, %166 : vector<8x1xf32>
    %cst_53 = arith.constant 1.600000e+01 : f32
    %168 = arith.maximumf %167, %165 : vector<8x1xf32>
    %169 = vector.broadcast %cst_53 : f32 to vector<8x1xf32>
    %170 = arith.minimumf %169, %168 : vector<8x1xf32>
    %cst_54 = arith.constant 2.000000e+00 : f32
    %171 = vector.broadcast %cst_54 : f32 to vector<8x1xf32>
    %172 = arith.mulf %171, %40 : vector<8x1xf32>
    %cst_55 = arith.constant 2.000000e+00 : f32
    %173 = vector.broadcast %cst_55 : f32 to vector<8x1xf32>
    %174 = arith.divf %172, %173 : vector<8x1xf32>
    %175 = math.ceil %174 : vector<8x1xf32>
    %176 = arith.addf %32, %175 : vector<8x1xf32>
    %cst_56 = arith.constant 1.000000e+00 : f32
    %177 = vector.broadcast %cst_56 : f32 to vector<8x1xf32>
    %178 = arith.addf %159, %177 : vector<8x1xf32>
    %cst_57 = arith.constant 1.600000e+01 : f32
    %179 = arith.maximumf %178, %176 : vector<8x1xf32>
    %180 = vector.broadcast %cst_57 : f32 to vector<8x1xf32>
    %181 = arith.minimumf %180, %179 : vector<8x1xf32>
    %182 = vector.broadcast %50 : vector<1x512xf32> to vector<8x512xf32>
    %183 = vector.broadcast %31 : vector<8x1xf32> to vector<8x512xf32>
    %184 = arith.cmpf oeq, %182, %183 : vector<8x512xf32>
    %185 = vector.broadcast %56 : vector<1x512xf32> to vector<8x512xf32>
    %186 = vector.broadcast %149 : vector<8x1xf32> to vector<8x512xf32>
    %187 = arith.cmpf oge, %185, %186 : vector<8x512xf32>
    %188 = arith.andi %184, %187 : vector<8x512xi1>
    %189 = vector.broadcast %56 : vector<1x512xf32> to vector<8x512xf32>
    %190 = vector.broadcast %170 : vector<8x1xf32> to vector<8x512xf32>
    %191 = arith.cmpf olt, %189, %190 : vector<8x512xf32>
    %192 = arith.andi %188, %191 : vector<8x512xi1>
    %193 = vector.broadcast %59 : vector<1x512xf32> to vector<8x512xf32>
    %194 = vector.broadcast %159 : vector<8x1xf32> to vector<8x512xf32>
    %195 = arith.cmpf oge, %193, %194 : vector<8x512xf32>
    %196 = arith.andi %192, %195 : vector<8x512xi1>
    %197 = vector.broadcast %59 : vector<1x512xf32> to vector<8x512xf32>
    %198 = vector.broadcast %181 : vector<8x1xf32> to vector<8x512xf32>
    %199 = arith.cmpf olt, %197, %198 : vector<8x512xf32>
    %200 = arith.andi %196, %199 : vector<8x512xi1>
    %201 = arith.extui %200 : vector<8x512xi1> to vector<8x512xi32>
    %202 = arith.sitofp %201 : vector<8x512xi32> to vector<8x512xf32>
    %cst_58 = arith.constant dense<0.000000e+00> : vector<8xf32>
    %203 = vector.multi_reduction <add>, %202, %cst_58 [1] : vector<8x512xf32> to vector<8xf32>
    %204 = vector.shape_cast %203 : vector<8xf32> to vector<8x1xf32>
    %cst_59 = arith.constant 1.000000e+00 : f32
    %205 = vector.broadcast %cst_59 : f32 to vector<8x1xf32>
    %206 = arith.maximumf %204, %205 : vector<8x1xf32>
    %207 = vector.broadcast %206 : vector<8x1xf32> to vector<8x512xf32>
    %208 = arith.divf %202, %207 : vector<8x512xf32>
    %cst_60 = arith.constant dense<0.000000e+00> : vector<8x16xf32>
    %209 = tpu.matmul %208, %26, %cst_60 {dimension_numbers = #tpu.dot_dimension_numbers<[1], [0], [0], [1], [0, 0, 1, 1], [], []>} : vector<8x512xf32>, vector<512x16xf32>, vector<8x16xf32> -> vector<8x16xf32>
    %210 = vector.shape_cast %200 : vector<8x512xi1> to vector<8x1x512xi1>
    %211 = vector.shape_cast %60 : vector<16x512xf32> to vector<1x16x512xf32>
    %cst_61 = arith.constant 0xFF800000 : f32
    %212 = vector.shape_cast %210 : vector<8x1x512xi1> to vector<8x1x512xi1>
    %213 = vector.broadcast %212 : vector<8x1x512xi1> to vector<8x16x512xi1>
    %214 = vector.shape_cast %211 : vector<1x16x512xf32> to vector<1x16x512xf32>
    %215 = vector.broadcast %214 : vector<1x16x512xf32> to vector<8x16x512xf32>
    %216 = vector.broadcast %cst_61 : f32 to vector<8x16x512xf32>
    %217 = arith.select %213, %215, %216 : vector<8x16x512xi1>, vector<8x16x512xf32>
    %cst_62 = arith.constant dense<0xFF800000> : vector<8x16xf32>
    %218 = vector.multi_reduction <maximumf>, %217, %cst_62 [2] : vector<8x16x512xf32> to vector<8x16xf32>
    %cst_63 = arith.constant 1.000000e+00 : f32
    %219 = vector.broadcast %cst_63 : f32 to vector<8x1xf32>
    %220 = arith.mulf %219, %45 : vector<8x1xf32>
    %cst_64 = arith.constant 2.000000e+00 : f32
    %221 = vector.broadcast %cst_64 : f32 to vector<8x1xf32>
    %222 = arith.divf %220, %221 : vector<8x1xf32>
    %223 = math.floor %222 : vector<8x1xf32>
    %224 = arith.addf %33, %223 : vector<8x1xf32>
    %cst_65 = arith.constant 0.000000e+00 : f32
    %cst_66 = arith.constant 1.500000e+01 : f32
    %225 = vector.broadcast %cst_65 : f32 to vector<8x1xf32>
    %226 = arith.maximumf %225, %224 : vector<8x1xf32>
    %227 = vector.broadcast %cst_66 : f32 to vector<8x1xf32>
    %228 = arith.minimumf %227, %226 : vector<8x1xf32>
    %cst_67 = arith.constant 0.000000e+00 : f32
    %229 = vector.broadcast %cst_67 : f32 to vector<8x1xf32>
    %230 = arith.mulf %229, %40 : vector<8x1xf32>
    %cst_68 = arith.constant 2.000000e+00 : f32
    %231 = vector.broadcast %cst_68 : f32 to vector<8x1xf32>
    %232 = arith.divf %230, %231 : vector<8x1xf32>
    %233 = math.floor %232 : vector<8x1xf32>
    %234 = arith.addf %32, %233 : vector<8x1xf32>
    %cst_69 = arith.constant 0.000000e+00 : f32
    %cst_70 = arith.constant 1.500000e+01 : f32
    %235 = vector.broadcast %cst_69 : f32 to vector<8x1xf32>
    %236 = arith.maximumf %235, %234 : vector<8x1xf32>
    %237 = vector.broadcast %cst_70 : f32 to vector<8x1xf32>
    %238 = arith.minimumf %237, %236 : vector<8x1xf32>
    %cst_71 = arith.constant 2.000000e+00 : f32
    %239 = vector.broadcast %cst_71 : f32 to vector<8x1xf32>
    %240 = arith.mulf %239, %45 : vector<8x1xf32>
    %cst_72 = arith.constant 2.000000e+00 : f32
    %241 = vector.broadcast %cst_72 : f32 to vector<8x1xf32>
    %242 = arith.divf %240, %241 : vector<8x1xf32>
    %243 = math.ceil %242 : vector<8x1xf32>
    %244 = arith.addf %33, %243 : vector<8x1xf32>
    %cst_73 = arith.constant 1.000000e+00 : f32
    %245 = vector.broadcast %cst_73 : f32 to vector<8x1xf32>
    %246 = arith.addf %228, %245 : vector<8x1xf32>
    %cst_74 = arith.constant 1.600000e+01 : f32
    %247 = arith.maximumf %246, %244 : vector<8x1xf32>
    %248 = vector.broadcast %cst_74 : f32 to vector<8x1xf32>
    %249 = arith.minimumf %248, %247 : vector<8x1xf32>
    %cst_75 = arith.constant 1.000000e+00 : f32
    %250 = vector.broadcast %cst_75 : f32 to vector<8x1xf32>
    %251 = arith.mulf %250, %40 : vector<8x1xf32>
    %cst_76 = arith.constant 2.000000e+00 : f32
    %252 = vector.broadcast %cst_76 : f32 to vector<8x1xf32>
    %253 = arith.divf %251, %252 : vector<8x1xf32>
    %254 = math.ceil %253 : vector<8x1xf32>
    %255 = arith.addf %32, %254 : vector<8x1xf32>
    %cst_77 = arith.constant 1.000000e+00 : f32
    %256 = vector.broadcast %cst_77 : f32 to vector<8x1xf32>
    %257 = arith.addf %238, %256 : vector<8x1xf32>
    %cst_78 = arith.constant 1.600000e+01 : f32
    %258 = arith.maximumf %257, %255 : vector<8x1xf32>
    %259 = vector.broadcast %cst_78 : f32 to vector<8x1xf32>
    %260 = arith.minimumf %259, %258 : vector<8x1xf32>
    %261 = vector.broadcast %50 : vector<1x512xf32> to vector<8x512xf32>
    %262 = vector.broadcast %31 : vector<8x1xf32> to vector<8x512xf32>
    %263 = arith.cmpf oeq, %261, %262 : vector<8x512xf32>
    %264 = vector.broadcast %56 : vector<1x512xf32> to vector<8x512xf32>
    %265 = vector.broadcast %228 : vector<8x1xf32> to vector<8x512xf32>
    %266 = arith.cmpf oge, %264, %265 : vector<8x512xf32>
    %267 = arith.andi %263, %266 : vector<8x512xi1>
    %268 = vector.broadcast %56 : vector<1x512xf32> to vector<8x512xf32>
    %269 = vector.broadcast %249 : vector<8x1xf32> to vector<8x512xf32>
    %270 = arith.cmpf olt, %268, %269 : vector<8x512xf32>
    %271 = arith.andi %267, %270 : vector<8x512xi1>
    %272 = vector.broadcast %59 : vector<1x512xf32> to vector<8x512xf32>
    %273 = vector.broadcast %238 : vector<8x1xf32> to vector<8x512xf32>
    %274 = arith.cmpf oge, %272, %273 : vector<8x512xf32>
    %275 = arith.andi %271, %274 : vector<8x512xi1>
    %276 = vector.broadcast %59 : vector<1x512xf32> to vector<8x512xf32>
    %277 = vector.broadcast %260 : vector<8x1xf32> to vector<8x512xf32>
    %278 = arith.cmpf olt, %276, %277 : vector<8x512xf32>
    %279 = arith.andi %275, %278 : vector<8x512xi1>
    %280 = arith.extui %279 : vector<8x512xi1> to vector<8x512xi32>
    %281 = arith.sitofp %280 : vector<8x512xi32> to vector<8x512xf32>
    %cst_79 = arith.constant dense<0.000000e+00> : vector<8xf32>
    %282 = vector.multi_reduction <add>, %281, %cst_79 [1] : vector<8x512xf32> to vector<8xf32>
    %283 = vector.shape_cast %282 : vector<8xf32> to vector<8x1xf32>
    %cst_80 = arith.constant 1.000000e+00 : f32
    %284 = vector.broadcast %cst_80 : f32 to vector<8x1xf32>
    %285 = arith.maximumf %283, %284 : vector<8x1xf32>
    %286 = vector.broadcast %285 : vector<8x1xf32> to vector<8x512xf32>
    %287 = arith.divf %281, %286 : vector<8x512xf32>
    %cst_81 = arith.constant dense<0.000000e+00> : vector<8x16xf32>
    %288 = tpu.matmul %287, %26, %cst_81 {dimension_numbers = #tpu.dot_dimension_numbers<[1], [0], [0], [1], [0, 0, 1, 1], [], []>} : vector<8x512xf32>, vector<512x16xf32>, vector<8x16xf32> -> vector<8x16xf32>
    %289 = vector.shape_cast %279 : vector<8x512xi1> to vector<8x1x512xi1>
    %290 = vector.shape_cast %60 : vector<16x512xf32> to vector<1x16x512xf32>
    %cst_82 = arith.constant 0xFF800000 : f32
    %291 = vector.shape_cast %289 : vector<8x1x512xi1> to vector<8x1x512xi1>
    %292 = vector.broadcast %291 : vector<8x1x512xi1> to vector<8x16x512xi1>
    %293 = vector.shape_cast %290 : vector<1x16x512xf32> to vector<1x16x512xf32>
    %294 = vector.broadcast %293 : vector<1x16x512xf32> to vector<8x16x512xf32>
    %295 = vector.broadcast %cst_82 : f32 to vector<8x16x512xf32>
    %296 = arith.select %292, %294, %295 : vector<8x16x512xi1>, vector<8x16x512xf32>
    %cst_83 = arith.constant dense<0xFF800000> : vector<8x16xf32>
    %297 = vector.multi_reduction <maximumf>, %296, %cst_83 [2] : vector<8x16x512xf32> to vector<8x16xf32>
    %cst_84 = arith.constant 1.000000e+00 : f32
    %298 = vector.broadcast %cst_84 : f32 to vector<8x1xf32>
    %299 = arith.mulf %298, %45 : vector<8x1xf32>
    %cst_85 = arith.constant 2.000000e+00 : f32
    %300 = vector.broadcast %cst_85 : f32 to vector<8x1xf32>
    %301 = arith.divf %299, %300 : vector<8x1xf32>
    %302 = math.floor %301 : vector<8x1xf32>
    %303 = arith.addf %33, %302 : vector<8x1xf32>
    %cst_86 = arith.constant 0.000000e+00 : f32
    %cst_87 = arith.constant 1.500000e+01 : f32
    %304 = vector.broadcast %cst_86 : f32 to vector<8x1xf32>
    %305 = arith.maximumf %304, %303 : vector<8x1xf32>
    %306 = vector.broadcast %cst_87 : f32 to vector<8x1xf32>
    %307 = arith.minimumf %306, %305 : vector<8x1xf32>
    %cst_88 = arith.constant 1.000000e+00 : f32
    %308 = vector.broadcast %cst_88 : f32 to vector<8x1xf32>
    %309 = arith.mulf %308, %40 : vector<8x1xf32>
    %cst_89 = arith.constant 2.000000e+00 : f32
    %310 = vector.broadcast %cst_89 : f32 to vector<8x1xf32>
    %311 = arith.divf %309, %310 : vector<8x1xf32>
    %312 = math.floor %311 : vector<8x1xf32>
    %313 = arith.addf %32, %312 : vector<8x1xf32>
    %cst_90 = arith.constant 0.000000e+00 : f32
    %cst_91 = arith.constant 1.500000e+01 : f32
    %314 = vector.broadcast %cst_90 : f32 to vector<8x1xf32>
    %315 = arith.maximumf %314, %313 : vector<8x1xf32>
    %316 = vector.broadcast %cst_91 : f32 to vector<8x1xf32>
    %317 = arith.minimumf %316, %315 : vector<8x1xf32>
    %cst_92 = arith.constant 2.000000e+00 : f32
    %318 = vector.broadcast %cst_92 : f32 to vector<8x1xf32>
    %319 = arith.mulf %318, %45 : vector<8x1xf32>
    %cst_93 = arith.constant 2.000000e+00 : f32
    %320 = vector.broadcast %cst_93 : f32 to vector<8x1xf32>
    %321 = arith.divf %319, %320 : vector<8x1xf32>
    %322 = math.ceil %321 : vector<8x1xf32>
    %323 = arith.addf %33, %322 : vector<8x1xf32>
    %cst_94 = arith.constant 1.000000e+00 : f32
    %324 = vector.broadcast %cst_94 : f32 to vector<8x1xf32>
    %325 = arith.addf %307, %324 : vector<8x1xf32>
    %cst_95 = arith.constant 1.600000e+01 : f32
    %326 = arith.maximumf %325, %323 : vector<8x1xf32>
    %327 = vector.broadcast %cst_95 : f32 to vector<8x1xf32>
    %328 = arith.minimumf %327, %326 : vector<8x1xf32>
    %cst_96 = arith.constant 2.000000e+00 : f32
    %329 = vector.broadcast %cst_96 : f32 to vector<8x1xf32>
    %330 = arith.mulf %329, %40 : vector<8x1xf32>
    %cst_97 = arith.constant 2.000000e+00 : f32
    %331 = vector.broadcast %cst_97 : f32 to vector<8x1xf32>
    %332 = arith.divf %330, %331 : vector<8x1xf32>
    %333 = math.ceil %332 : vector<8x1xf32>
    %334 = arith.addf %32, %333 : vector<8x1xf32>
    %cst_98 = arith.constant 1.000000e+00 : f32
    %335 = vector.broadcast %cst_98 : f32 to vector<8x1xf32>
    %336 = arith.addf %317, %335 : vector<8x1xf32>
    %cst_99 = arith.constant 1.600000e+01 : f32
    %337 = arith.maximumf %336, %334 : vector<8x1xf32>
    %338 = vector.broadcast %cst_99 : f32 to vector<8x1xf32>
    %339 = arith.minimumf %338, %337 : vector<8x1xf32>
    %340 = vector.broadcast %50 : vector<1x512xf32> to vector<8x512xf32>
    %341 = vector.broadcast %31 : vector<8x1xf32> to vector<8x512xf32>
    %342 = arith.cmpf oeq, %340, %341 : vector<8x512xf32>
    %343 = vector.broadcast %56 : vector<1x512xf32> to vector<8x512xf32>
    %344 = vector.broadcast %307 : vector<8x1xf32> to vector<8x512xf32>
    %345 = arith.cmpf oge, %343, %344 : vector<8x512xf32>
    %346 = arith.andi %342, %345 : vector<8x512xi1>
    %347 = vector.broadcast %56 : vector<1x512xf32> to vector<8x512xf32>
    %348 = vector.broadcast %328 : vector<8x1xf32> to vector<8x512xf32>
    %349 = arith.cmpf olt, %347, %348 : vector<8x512xf32>
    %350 = arith.andi %346, %349 : vector<8x512xi1>
    %351 = vector.broadcast %59 : vector<1x512xf32> to vector<8x512xf32>
    %352 = vector.broadcast %317 : vector<8x1xf32> to vector<8x512xf32>
    %353 = arith.cmpf oge, %351, %352 : vector<8x512xf32>
    %354 = arith.andi %350, %353 : vector<8x512xi1>
    %355 = vector.broadcast %59 : vector<1x512xf32> to vector<8x512xf32>
    %356 = vector.broadcast %339 : vector<8x1xf32> to vector<8x512xf32>
    %357 = arith.cmpf olt, %355, %356 : vector<8x512xf32>
    %358 = arith.andi %354, %357 : vector<8x512xi1>
    %359 = arith.extui %358 : vector<8x512xi1> to vector<8x512xi32>
    %360 = arith.sitofp %359 : vector<8x512xi32> to vector<8x512xf32>
    %cst_100 = arith.constant dense<0.000000e+00> : vector<8xf32>
    %361 = vector.multi_reduction <add>, %360, %cst_100 [1] : vector<8x512xf32> to vector<8xf32>
    %362 = vector.shape_cast %361 : vector<8xf32> to vector<8x1xf32>
    %cst_101 = arith.constant 1.000000e+00 : f32
    %363 = vector.broadcast %cst_101 : f32 to vector<8x1xf32>
    %364 = arith.maximumf %362, %363 : vector<8x1xf32>
    %365 = vector.broadcast %364 : vector<8x1xf32> to vector<8x512xf32>
    %366 = arith.divf %360, %365 : vector<8x512xf32>
    %cst_102 = arith.constant dense<0.000000e+00> : vector<8x16xf32>
    %367 = tpu.matmul %366, %26, %cst_102 {dimension_numbers = #tpu.dot_dimension_numbers<[1], [0], [0], [1], [0, 0, 1, 1], [], []>} : vector<8x512xf32>, vector<512x16xf32>, vector<8x16xf32> -> vector<8x16xf32>
    %368 = vector.shape_cast %358 : vector<8x512xi1> to vector<8x1x512xi1>
    %369 = vector.shape_cast %60 : vector<16x512xf32> to vector<1x16x512xf32>
    %cst_103 = arith.constant 0xFF800000 : f32
    %370 = vector.shape_cast %368 : vector<8x1x512xi1> to vector<8x1x512xi1>
    %371 = vector.broadcast %370 : vector<8x1x512xi1> to vector<8x16x512xi1>
    %372 = vector.shape_cast %369 : vector<1x16x512xf32> to vector<1x16x512xf32>
    %373 = vector.broadcast %372 : vector<1x16x512xf32> to vector<8x16x512xf32>
    %374 = vector.broadcast %cst_103 : f32 to vector<8x16x512xf32>
    %375 = arith.select %371, %373, %374 : vector<8x16x512xi1>, vector<8x16x512xf32>
    %cst_104 = arith.constant dense<0xFF800000> : vector<8x16xf32>
    %376 = vector.multi_reduction <maximumf>, %375, %cst_104 [2] : vector<8x16x512xf32> to vector<8x16xf32>
    %377 = tpu.concatenate %130, %209, %288, %367, %139, %218, %297, %376 in 1 : vector<8x16xf32>, vector<8x16xf32>, vector<8x16xf32>, vector<8x16xf32>, vector<8x16xf32>, vector<8x16xf32>, vector<8x16xf32>, vector<8x16xf32> -> vector<8x128xf32>
    %c0_105 = arith.constant 0 : index
    %c0_106 = arith.constant 0 : index
    %378 = vector.load %arg6[%c0_105, %c0_106] : memref<128x64xf32, #tpu.memory_space<vmem>>, vector<128x64xf32>
    %cst_107 = arith.constant dense<0.000000e+00> : vector<8x64xf32>
    %379 = tpu.matmul %377, %378, %cst_107 {dimension_numbers = #tpu.dot_dimension_numbers<[1], [0], [0], [1], [0, 0, 1, 1], [], []>} : vector<8x128xf32>, vector<128x64xf32>, vector<8x64xf32> -> vector<8x64xf32>
    %c0_108 = arith.constant 0 : index
    %c0_109 = arith.constant 0 : index
    %380 = vector.load %arg7[%c0_108, %c0_109] : memref<1x64xf32, #tpu.memory_space<vmem>>, vector<1x64xf32>
    %381 = vector.broadcast %380 : vector<1x64xf32> to vector<8x64xf32>
    %382 = arith.addf %379, %381 : vector<8x64xf32>
    %383 = arith.mulf %382, %382 : vector<8x64xf32>
    %cst_110 = arith.constant dense<0.000000e+00> : vector<8xf32>
    %384 = vector.multi_reduction <add>, %383, %cst_110 [1] : vector<8x64xf32> to vector<8xf32>
    %385 = vector.shape_cast %384 : vector<8xf32> to vector<8x1xf32>
    %cst_111 = arith.constant 1.000000e-24 : f32
    %386 = vector.broadcast %cst_111 : f32 to vector<8x1xf32>
    %387 = arith.maximumf %385, %386 : vector<8x1xf32>
    %388 = math.rsqrt %387 : vector<8x1xf32>
    %389 = vector.broadcast %388 : vector<8x1xf32> to vector<8x64xf32>
    %390 = arith.mulf %382, %389 : vector<8x64xf32>
    %c0_112 = arith.constant 0 : index
    %c0_113 = arith.constant 0 : index
    %391 = vector.load %arg8[%c0_112, %c0_113] : memref<8x64xf32, #tpu.memory_space<vmem>>, vector<8x64xf32>
    tpu.vector_store %arg8[%c0_112, %c0_113], %390 {strides = array<i32>} : memref<8x64xf32, #tpu.memory_space<vmem>>, vector<8x64xf32>,
    return
  }
  func.func @transform_0(%arg0: i32) -> (i32, i32, i32, i32) {
    %c0_i32 = arith.constant 0 : i32
    %c0_i32_0 = arith.constant 0 : i32
    %c0_i32_1 = arith.constant 0 : i32
    %c0_i32_2 = arith.constant 0 : i32
    %c0_i32_3 = arith.constant 0 : i32
    return %c0_i32, %c0_i32_0, %c0_i32_1, %c0_i32_2 : i32, i32, i32, i32
  }
  func.func @transform_1(%arg0: i32) -> (i32, i32) {
    %c0_i32 = arith.constant 0 : i32
    %c0_i32_0 = arith.constant 0 : i32
    %c0_i32_1 = arith.constant 0 : i32
    return %c0_i32, %c0_i32_0 : i32, i32
  }
  func.func @transform_2(%arg0: i32) -> (i32, i32) {
    %c0_i32 = arith.constant 0 : i32
    %c0_i32_0 = arith.constant 0 : i32
    %c0_i32_1 = arith.constant 0 : i32
    return %c0_i32, %c0_i32_0 : i32, i32
  }
  func.func @transform_3(%arg0: i32) -> (i32, i32) {
    %c0_i32 = arith.constant 0 : i32
    %c0_i32_0 = arith.constant 0 : i32
    %c0_i32_1 = arith.constant 0 : i32
    return %c0_i32, %c0_i32_0 : i32, i32
  }
  func.func @transform_4(%arg0: i32) -> (i32, i32) {
    %c0_i32 = arith.constant 0 : i32
    %c0_i32_0 = arith.constant 0 : i32
    %c0_i32_1 = arith.constant 0 : i32
    return %c0_i32, %c0_i32_0 : i32, i32
  }
  func.func @transform_5(%arg0: i32) -> (i32, i32) {
    %c0_i32 = arith.constant 0 : i32
    %c0_i32_0 = arith.constant 0 : i32
    %c0_i32_1 = arith.constant 0 : i32
    return %c0_i32, %c0_i32_0 : i32, i32
  }
  func.func @transform_6(%arg0: i32) -> (i32, i32) {
    %c0_i32 = arith.constant 0 : i32
    %c0_i32_0 = arith.constant 0 : i32
    %c0_i32_1 = arith.constant 0 : i32
    return %c0_i32, %c0_i32_0 : i32, i32
  }
  func.func @transform_7(%arg0: i32) -> (i32, i32) {
    %c0_i32 = arith.constant 0 : i32
    %c0_i32_0 = arith.constant 0 : i32
    %c0_i32_1 = arith.constant 0 : i32
    return %c0_i32, %c0_i32_0 : i32, i32
  }
}

</mosaic_0001>

<llo_original>
// kernel: baseline_roi_forward.1
$region0: #{baseline_roi_forward.1}
  #allocation0 [shape = 'u32[]', space=smem, size = 0x4, offset = 0x4, fixed_abs, tag = 'smem constant byte address 0x4 - core index']
  #allocation1 [shape = 'u32[144,128]{1,0:T(1,128)}', space=vmem, size = 0x12000, scoped, tag = 'internal scratch']
  %s0 = inlined_call_operand.vmem [shape: f32[2,18,18,16], index: 0, kind: input, shape index: {}]
  %s1 = inlined_call_operand.vmem [shape: f32[16,512], index: 1, kind: input, shape index: {}]
  %s2 = inlined_call_operand.vmem [shape: f32[8,5], index: 2, kind: input, shape index: {}]
  %s3 = inlined_call_operand.vmem [shape: f32[144,16], index: 3, kind: input, shape index: {}]
  %s4 = inlined_call_operand.vmem [shape: f32[1,16], index: 4, kind: input, shape index: {}]
  %s5 = inlined_call_operand.vmem [shape: f32[128,64], index: 5, kind: input, shape index: {}]
  %s6 = inlined_call_operand.vmem [shape: f32[1,64], index: 6, kind: input, shape index: {}]
  %s7 = inlined_call_operand.hbm [shape: f32[8,64], index: 7, kind: output, shape index: {}]
  %s8 = sld [smem:[#allocation0]]
  $region38: #{baseline_roi_forward.1} parent=0
    _
  %s10 = ssub.s32 1, %s8
  %s11 = scalar_select 0, %s10, %s8
  $region1: #{baseline_roi_forward.1} parent=0
    #allocation2 [shape = 'u8[4096]{0}', space=vmem, size = 0x1000, scoped, tag = 'output window, operand 0, single buffered']
    #allocation3 [shape = 's32[1]{0}', space=sflag, size = 0x4, scoped, tag = 'scoped memory for baseline_roi_forward.1']
    %12 = vsyncpa [#allocation3], 0
    // Predicated region
    $region2: #{baseline_roi_forward.1} parent=1 // pred_check
      _
    $region3: #{baseline_roi_forward.1} parent=1 // pred_check_branch
      %14 = sbr.rel (0) target = $region5
    $region4: #{baseline_roi_forward.1} parent=1 // pred_region
      _
    $region5: #{baseline_roi_forward.1} parent=1 // pred_fallthru
      _
    // Predicated region
    $region6: #{baseline_roi_forward.1} parent=1 // pred_check
      _
    $region7: #{baseline_roi_forward.1} parent=1 // pred_check_branch
      %16 = sbr.rel (0) target = $region9
    $region8: #{baseline_roi_forward.1} parent=1 // pred_region
      _
    $region9: #{baseline_roi_forward.1} parent=1 // pred_fallthru
      _
    // Predicated region
    $region10: #{baseline_roi_forward.1} parent=1 // pred_check
      _
    $region11: #{baseline_roi_forward.1} parent=1 // pred_check_branch
      %18 = sbr.rel (0) target = $region13
    $region12: #{baseline_roi_forward.1} parent=1 // pred_region
      _
    $region13: #{baseline_roi_forward.1} parent=1 // pred_fallthru
      _
    // Predicated region
    $region14: #{baseline_roi_forward.1} parent=1 // pred_check
      _
    $region15: #{baseline_roi_forward.1} parent=1 // pred_check_branch
      %20 = sbr.rel (0) target = $region17
    $region16: #{baseline_roi_forward.1} parent=1 // pred_region
      _
    $region17: #{baseline_roi_forward.1} parent=1 // pred_fallthru
      _
    // Predicated region
    $region18: #{baseline_roi_forward.1} parent=1 // pred_check
      _
    $region19: #{baseline_roi_forward.1} parent=1 // pred_check_branch
      %22 = sbr.rel (0) target = $region21
    $region20: #{baseline_roi_forward.1} parent=1 // pred_region
      _
    $region21: #{baseline_roi_forward.1} parent=1 // pred_fallthru
      _
    // Predicated region
    $region22: #{baseline_roi_forward.1} parent=1 // pred_check
      _
    $region23: #{baseline_roi_forward.1} parent=1 // pred_check_branch
      %24 = sbr.rel (0) target = $region25
    $region24: #{baseline_roi_forward.1} parent=1 // pred_region
      _
    $region25: #{baseline_roi_forward.1} parent=1 // pred_fallthru
      _
    // Predicated region
    $region26: #{baseline_roi_forward.1} parent=1 // pred_check
      _
    $region27: #{baseline_roi_forward.1} parent=1 // pred_check_branch
      %26 = sbr.rel (0) target = $region29
    $region28: #{baseline_roi_forward.1} parent=1 // pred_region
      _
    $region29: #{baseline_roi_forward.1} parent=1 // pred_fallthru
      _
    %v27 = vld [vmem:[%s0] sm:$0xff]
    %v28 = vld [vmem:[%s0 + $0x8] sm:$0xff]
    %v29 = vld [vmem:[%s0 + $0x10] sm:$0x3]
    %v30 = vld [vmem:[%s0 + $0x18] sm:$0xff]
    %v31 = vld [vmem:[%s0 + $0x20] sm:$0xff]
    %v32 = vld [vmem:[%s0 + $0x28] sm:$0x3]
    %v33 = vld [vmem:[%s0 + $0x30] sm:$0xff]
    %v34 = vld [vmem:[%s0 + $0x38] sm:$0xff]
    %v35 = vld [vmem:[%s0 + $0x40] sm:$0x3]
    %v36 = vld [vmem:[%s0 + $0x48] sm:$0xff]
    %v37 = vld [vmem:[%s0 + $0x50] sm:$0xff]
    %v38 = vld [vmem:[%s0 + $0x58] sm:$0x3]
    %v39 = vld [vmem:[%s0 + $0x60] sm:$0xff]
    %v40 = vld [vmem:[%s0 + $0x68] sm:$0xff]
    %v41 = vld [vmem:[%s0 + $0x70] sm:$0x3]
    %v42 = vld [vmem:[%s0 + $0x78] sm:$0xff]
    %v43 = vld [vmem:[%s0 + $0x80] sm:$0xff]
    %v44 = vld [vmem:[%s0 + $0x88] sm:$0x3]
    %v45 = vld [vmem:[%s0 + $0x90] sm:$0xff]
    %v46 = vld [vmem:[%s0 + $0x98] sm:$0xff]
    %v47 = vld [vmem:[%s0 + $0xa0] sm:$0x3]
    %v48 = vld [vmem:[%s0 + $0xa8] sm:$0xff]
    %v49 = vld [vmem:[%s0 + $0xb0] sm:$0xff]
    %v50 = vld [vmem:[%s0 + $0xb8] sm:$0x3]
    %v51 = vld [vmem:[%s0 + $0xc0] sm:$0xff]
    %v52 = vld [vmem:[%s0 + $0xc8] sm:$0xff]
    %v53 = vld [vmem:[%s0 + $0xd0] sm:$0x3]
    %v54 = vld [vmem:[%s0 + $0xd8] sm:$0xff]
    %v55 = vld [vmem:[%s0 + $0xe0] sm:$0xff]
    %v56 = vld [vmem:[%s0 + $0xe8] sm:$0x3]
    %v57 = vld [vmem:[%s0 + $0xf0] sm:$0xff]
    %v58 = vld [vmem:[%s0 + $0xf8] sm:$0xff]
    %v59 = vld [vmem:[%s0 + $0x100] sm:$0x3]
    %v60 = vld [vmem:[%s0 + $0x108] sm:$0xff]
    %v61 = vld [vmem:[%s0 + $0x110] sm:$0xff]
    %v62 = vld [vmem:[%s0 + $0x118] sm:$0x3]
    %v63 = vld [vmem:[%s0 + $0x120] sm:$0xff]
    %v64 = vld [vmem:[%s0 + $0x128] sm:$0xff]
    %v65 = vld [vmem:[%s0 + $0x130] sm:$0x3]
    %v66 = vld [vmem:[%s0 + $0x138] sm:$0xff]
    %v67 = vld [vmem:[%s0 + $0x140] sm:$0xff]
    %v68 = vld [vmem:[%s0 + $0x148] sm:$0x3]
    %v69 = vld [vmem:[%s0 + $0x150] sm:$0xff]
    %v70 = vld [vmem:[%s0 + $0x158] sm:$0xff]
    %v71 = vld [vmem:[%s0 + $0x160] sm:$0x3]
    %v72 = vld [vmem:[%s0 + $0x168] sm:$0xff]
    %v73 = vld [vmem:[%s0 + $0x170] sm:$0xff]
    %v74 = vld [vmem:[%s0 + $0x178] sm:$0x3]
    %v75 = vld [vmem:[%s0 + $0x180] sm:$0xff]
    %v76 = vld [vmem:[%s0 + $0x188] sm:$0xff]
    %v77 = vld [vmem:[%s0 + $0x190] sm:$0x3]
    %v78 = vld [vmem:[%s0 + $0x198] sm:$0xff]
    %v79 = vld [vmem:[%s0 + $0x1a0] sm:$0xff]
    %v80 = vld [vmem:[%s0 + $0x1a8] sm:$0x3]
    %v81 = vld [vmem:[%s0 + $0x1b0] sm:$0xff]
    %v82 = vld [vmem:[%s0 + $0x1b8] sm:$0xff]
    %v83 = vld [vmem:[%s0 + $0x1c0] sm:$0x3]
    %v84 = vld [vmem:[%s0 + $0x1c8] sm:$0xff]
    %v85 = vld [vmem:[%s0 + $0x1d0] sm:$0xff]
    %v86 = vld [vmem:[%s0 + $0x1d8] sm:$0x3]
    %v87 = vld [vmem:[%s0 + $0x1e0] sm:$0xff]
    %v88 = vld [vmem:[%s0 + $0x1e8] sm:$0xff]
    %v89 = vld [vmem:[%s0 + $0x1f0] sm:$0x3]
    %v90 = vld [vmem:[%s0 + $0x1f8] sm:$0xff]
    %v91 = vld [vmem:[%s0 + $0x200] sm:$0xff]
    %v92 = vld [vmem:[%s0 + $0x208] sm:$0x3]
    %v93 = vld [vmem:[%s0 + $0x210] sm:$0xff]
    %v94 = vld [vmem:[%s0 + $0x218] sm:$0xff]
    %v95 = vld [vmem:[%s0 + $0x220] sm:$0x3]
    %v96 = vld [vmem:[%s0 + $0x228] sm:$0xff]
    %v97 = vld [vmem:[%s0 + $0x230] sm:$0xff]
    %v98 = vld [vmem:[%s0 + $0x238] sm:$0x3]
    %v99 = vld [vmem:[%s0 + $0x240] sm:$0xff]
    %v100 = vld [vmem:[%s0 + $0x248] sm:$0xff]
    %v101 = vld [vmem:[%s0 + $0x250] sm:$0x3]
    %v102 = vld [vmem:[%s0 + $0x258] sm:$0xff]
    %v103 = vld [vmem:[%s0 + $0x260] sm:$0xff]
    %v104 = vld [vmem:[%s0 + $0x268] sm:$0x3]
    %v105 = vld [vmem:[%s0 + $0x270] sm:$0xff]
    %v106 = vld [vmem:[%s0 + $0x278] sm:$0xff]
    %v107 = vld [vmem:[%s0 + $0x280] sm:$0x3]
    %v108 = vld [vmem:[%s0 + $0x288] sm:$0xff]
    %v109 = vld [vmem:[%s0 + $0x290] sm:$0xff]
    %v110 = vld [vmem:[%s0 + $0x298] sm:$0x3]
    %v111 = vld [vmem:[%s0 + $0x2a0] sm:$0xff]
    %v112 = vld [vmem:[%s0 + $0x2a8] sm:$0xff]
    %v113 = vld [vmem:[%s0 + $0x2b0] sm:$0x3]
    %v114 = vld [vmem:[%s0 + $0x2b8] sm:$0xff]
    %v115 = vld [vmem:[%s0 + $0x2c0] sm:$0xff]
    %v116 = vld [vmem:[%s0 + $0x2c8] sm:$0x3]
    %v117 = vld [vmem:[%s0 + $0x2d0] sm:$0xff]
    %v118 = vld [vmem:[%s0 + $0x2d8] sm:$0xff]
    %v119 = vld [vmem:[%s0 + $0x2e0] sm:$0x3]
    %v120 = vld [vmem:[%s0 + $0x2e8] sm:$0xff]
    %v121 = vld [vmem:[%s0 + $0x2f0] sm:$0xff]
    %v122 = vld [vmem:[%s0 + $0x2f8] sm:$0x3]
    %v123 = vld [vmem:[%s0 + $0x300] sm:$0xff]
    %v124 = vld [vmem:[%s0 + $0x308] sm:$0xff]
    %v125 = vld [vmem:[%s0 + $0x310] sm:$0x3]
    %v126 = vld [vmem:[%s0 + $0x318] sm:$0xff]
    %v127 = vld [vmem:[%s0 + $0x320] sm:$0xff]
    %v128 = vld [vmem:[%s0 + $0x328] sm:$0x3]
    %v129 = vld [vmem:[%s0 + $0x330] sm:$0xff]
    %v130 = vld [vmem:[%s0 + $0x338] sm:$0xff]
    %v131 = vld [vmem:[%s0 + $0x340] sm:$0x3]
    %v132 = vld [vmem:[%s0 + $0x348] sm:$0xff]
    %v133 = vld [vmem:[%s0 + $0x350] sm:$0xff]
    %v134 = vld [vmem:[%s0 + $0x358] sm:$0x3]
    %vm231 = vcmask 1046528
    %v232 = vrot.slane %v27, 1
    %v233 = vrot.slane %v28, 1
    %v234 = vsel %vm231, %v232, %v233
    %v235 = vrot.slane %v29, 1
    %v236 = vsel %vm231, %v233, %v235
    %v237 = vrot.slane %v30, 1
    %v238 = vrot.slane %v31, 1
    %v239 = vsel %vm231, %v237, %v238
    %v240 = vrot.slane %v32, 1
    %v241 = vsel %vm231, %v238, %v240
    %v242 = vrot.slane %v33, 1
    %v243 = vrot.slane %v34, 1
    %v244 = vsel %vm231, %v242, %v243
    %v245 = vrot.slane %v35, 1
    %v246 = vsel %vm231, %v243, %v245
    %v247 = vrot.slane %v36, 1
    %v248 = vrot.slane %v37, 1
    %v249 = vsel %vm231, %v247, %v248
    %v250 = vrot.slane %v38, 1
    %v251 = vsel %vm231, %v248, %v250
    %v252 = vrot.slane %v39, 1
    %v253 = vrot.slane %v40, 1
    %v254 = vsel %vm231, %v252, %v253
    %v255 = vrot.slane %v41, 1
    %v256 = vsel %vm231, %v253, %v255
    %v257 = vrot.slane %v42, 1
    %v258 = vrot.slane %v43, 1
    %v259 = vsel %vm231, %v257, %v258
    %v260 = vrot.slane %v44, 1
    %v261 = vsel %vm231, %v258, %v260
    %v262 = vrot.slane %v45, 1
    %v263 = vrot.slane %v46, 1
    %v264 = vsel %vm231, %v262, %v263
    %v265 = vrot.slane %v47, 1
    %v266 = vsel %vm231, %v263, %v265
    %v267 = vrot.slane %v48, 1
    %v268 = vrot.slane %v49, 1
    %v269 = vsel %vm231, %v267, %v268
    %v270 = vrot.slane %v50, 1
    %v271 = vsel %vm231, %v268, %v270
    %v272 = vrot.slane %v51, 1
    %v273 = vrot.slane %v52, 1
    %v274 = vsel %vm231, %v272, %v273
    %v275 = vrot.slane %v53, 1
    %v276 = vsel %vm231, %v273, %v275
    %v277 = vrot.slane %v54, 1
    %v278 = vrot.slane %v55, 1
    %v279 = vsel %vm231, %v277, %v278
    %v280 = vrot.slane %v56, 1
    %v281 = vsel %vm231, %v278, %v280
    %v282 = vrot.slane %v57, 1
    %v283 = vrot.slane %v58, 1
    %v284 = vsel %vm231, %v282, %v283
    %v285 = vrot.slane %v59, 1
    %v286 = vsel %vm231, %v283, %v285
    %v287 = vrot.slane %v60, 1
    %v288 = vrot.slane %v61, 1
    %v289 = vsel %vm231, %v287, %v288
    %v290 = vrot.slane %v62, 1
    %v291 = vsel %vm231, %v288, %v290
    %v292 = vrot.slane %v63, 1
    %v293 = vrot.slane %v64, 1
    %v294 = vsel %vm231, %v292, %v293
    %v295 = vrot.slane %v65, 1
    %v296 = vsel %vm231, %v293, %v295
    %v297 = vrot.slane %v66, 1
    %v298 = vrot.slane %v67, 1
    %v299 = vsel %vm231, %v297, %v298
    %v300 = vrot.slane %v68, 1
    %v301 = vsel %vm231, %v298, %v300
    %v302 = vrot.slane %v69, 1
    %v303 = vrot.slane %v70, 1
    %v304 = vsel %vm231, %v302, %v303
    %v305 = vrot.slane %v71, 1
    %v306 = vsel %vm231, %v303, %v305
    %v307 = vrot.slane %v72, 1
    %v308 = vrot.slane %v73, 1
    %v309 = vsel %vm231, %v307, %v308
    %v310 = vrot.slane %v74, 1
    %v311 = vsel %vm231, %v308, %v310
    %v312 = vrot.slane %v81, 1
    %v313 = vrot.slane %v82, 1
    %v314 = vsel %vm231, %v312, %v313
    %v315 = vrot.slane %v83, 1
    %v316 = vsel %vm231, %v313, %v315
    %v317 = vrot.slane %v84, 1
    %v318 = vrot.slane %v85, 1
    %v319 = vsel %vm231, %v317, %v318
    %v320 = vrot.slane %v86, 1
    %v321 = vsel %vm231, %v318, %v320
    %v322 = vrot.slane %v87, 1
    %v323 = vrot.slane %v88, 1
    %v324 = vsel %vm231, %v322, %v323
    %v325 = vrot.slane %v89, 1
    %v326 = vsel %vm231, %v323, %v325
    %v327 = vrot.slane %v90, 1
    %v328 = vrot.slane %v91, 1
    %v329 = vsel %vm231, %v327, %v328
    %v330 = vrot.slane %v92, 1
    %v331 = vsel %vm231, %v328, %v330
    %v332 = vrot.slane %v93, 1
    %v333 = vrot.slane %v94, 1
    %v334 = vsel %vm231, %v332, %v333
    %v335 = vrot.slane %v95, 1
    %v336 = vsel %vm231, %v333, %v335
    %v337 = vrot.slane %v96, 1
    %v338 = vrot.slane %v97, 1
    %v339 = vsel %vm231, %v337, %v338
    %v340 = vrot.slane %v98, 1
    %v341 = vsel %vm231, %v338, %v340
    %v342 = vrot.slane %v99, 1
    %v343 = vrot.slane %v100, 1
    %v344 = vsel %vm231, %v342, %v343
    %v345 = vrot.slane %v101, 1
    %v346 = vsel %vm231, %v343, %v345
    %v347 = vrot.slane %v102, 1
    %v348 = vrot.slane %v103, 1
    %v349 = vsel %vm231, %v347, %v348
    %v350 = vrot.slane %v104, 1
    %v351 = vsel %vm231, %v348, %v350
    %v352 = vrot.slane %v105, 1
    %v353 = vrot.slane %v106, 1
    %v354 = vsel %vm231, %v352, %v353
    %v355 = vrot.slane %v107, 1
    %v356 = vsel %vm231, %v353, %v355
    %v357 = vrot.slane %v108, 1
    %v358 = vrot.slane %v109, 1
    %v359 = vsel %vm231, %v357, %v358
    %v360 = vrot.slane %v110, 1
    %v361 = vsel %vm231, %v358, %v360
    %v362 = vrot.slane %v111, 1
    %v363 = vrot.slane %v112, 1
    %v364 = vsel %vm231, %v362, %v363
    %v365 = vrot.slane %v113, 1
    %v366 = vsel %vm231, %v363, %v365
    %v367 = vrot.slane %v114, 1
    %v368 = vrot.slane %v115, 1
    %v369 = vsel %vm231, %v367, %v368
    %v370 = vrot.slane %v116, 1
    %v371 = vsel %vm231, %v368, %v370
    %v372 = vrot.slane %v117, 1
    %v373 = vrot.slane %v118, 1
    %v374 = vsel %vm231, %v372, %v373
    %v375 = vrot.slane %v119, 1
    %v376 = vsel %vm231, %v373, %v375
    %v377 = vrot.slane %v120, 1
    %v378 = vrot.slane %v121, 1
    %v379 = vsel %vm231, %v377, %v378
    %v380 = vrot.slane %v122, 1
    %v381 = vsel %vm231, %v378, %v380
    %v382 = vrot.slane %v123, 1
    %v383 = vrot.slane %v124, 1
    %v384 = vsel %vm231, %v382, %v383
    %v385 = vrot.slane %v125, 1
    %v386 = vsel %vm231, %v383, %v385
    %v387 = vrot.slane %v126, 1
    %v388 = vrot.slane %v127, 1
    %v389 = vsel %vm231, %v387, %v388
    %v390 = vrot.slane %v128, 1
    %v391 = vsel %vm231, %v388, %v390
    %vm392 = vcmask 1045504
    %v393 = vrot.slane %v27, 2
    %v394 = vrot.slane %v28, 2
    %v395 = vsel %vm392, %v393, %v394
    %v396 = vrot.slane %v29, 2
    %v397 = vsel %vm392, %v394, %v396
    %v398 = vrot.slane %v30, 2
    %v399 = vrot.slane %v31, 2
    %v400 = vsel %vm392, %v398, %v399
    %v401 = vrot.slane %v32, 2
    %v402 = vsel %vm392, %v399, %v401
    %v403 = vrot.slane %v33, 2
    %v404 = vrot.slane %v34, 2
    %v405 = vsel %vm392, %v403, %v404
    %v406 = vrot.slane %v35, 2
    %v407 = vsel %vm392, %v404, %v406
    %v408 = vrot.slane %v36, 2
    %v409 = vrot.slane %v37, 2
    %v410 = vsel %vm392, %v408, %v409
    %v411 = vrot.slane %v38, 2
    %v412 = vsel %vm392, %v409, %v411
    %v413 = vrot.slane %v39, 2
    %v414 = vrot.slane %v40, 2
    %v415 = vsel %vm392, %v413, %v414
    %v416 = vrot.slane %v41, 2
    %v417 = vsel %vm392, %v414, %v416
    %v418 = vrot.slane %v42, 2
    %v419 = vrot.slane %v43, 2
    %v420 = vsel %vm392, %v418, %v419
    %v421 = vrot.slane %v44, 2
    %v422 = vsel %vm392, %v419, %v421
    %v423 = vrot.slane %v45, 2
    %v424 = vrot.slane %v46, 2
    %v425 = vsel %vm392, %v423, %v424
    %v426 = vrot.slane %v47, 2
    %v427 = vsel %vm392, %v424, %v426
    %v428 = vrot.slane %v48, 2
    %v429 = vrot.slane %v49, 2
    %v430 = vsel %vm392, %v428, %v429
    %v431 = vrot.slane %v50, 2
    %v432 = vsel %vm392, %v429, %v431
    %v433 = vrot.slane %v51, 2
    %v434 = vrot.slane %v52, 2
    %v435 = vsel %vm392, %v433, %v434
    %v436 = vrot.slane %v53, 2
    %v437 = vsel %vm392, %v434, %v436
    %v438 = vrot.slane %v54, 2
    %v439 = vrot.slane %v55, 2
    %v440 = vsel %vm392, %v438, %v439
    %v441 = vrot.slane %v56, 2
    %v442 = vsel %vm392, %v439, %v441
    %v443 = vrot.slane %v57, 2
    %v444 = vrot.slane %v58, 2
    %v445 = vsel %vm392, %v443, %v444
    %v446 = vrot.slane %v59, 2
    %v447 = vsel %vm392, %v444, %v446
    %v448 = vrot.slane %v60, 2
    %v449 = vrot.slane %v61, 2
    %v450 = vsel %vm392, %v448, %v449
    %v451 = vrot.slane %v62, 2
    %v452 = vsel %vm392, %v449, %v451
    %v453 = vrot.slane %v63, 2
    %v454 = vrot.slane %v64, 2
    %v455 = vsel %vm392, %v453, %v454
    %v456 = vrot.slane %v65, 2
    %v457 = vsel %vm392, %v454, %v456
    %v458 = vrot.slane %v66, 2
    %v459 = vrot.slane %v67, 2
    %v460 = vsel %vm392, %v458, %v459
    %v461 = vrot.slane %v68, 2
    %v462 = vsel %vm392, %v459, %v461
    %v463 = vrot.slane %v69, 2
    %v464 = vrot.slane %v70, 2
    %v465 = vsel %vm392, %v463, %v464
    %v466 = vrot.slane %v71, 2
    %v467 = vsel %vm392, %v464, %v466
    %v468 = vrot.slane %v72, 2
    %v469 = vrot.slane %v73, 2
    %v470 = vsel %vm392, %v468, %v469
    %v471 = vrot.slane %v74, 2
    %v472 = vsel %vm392, %v469, %v471
    %v473 = vrot.slane %v81, 2
    %v474 = vrot.slane %v82, 2
    %v475 = vsel %vm392, %v473, %v474
    %v476 = vrot.slane %v83, 2
    %v477 = vsel %vm392, %v474, %v476
    %v478 = vrot.slane %v84, 2
    %v479 = vrot.slane %v85, 2
    %v480 = vsel %vm392, %v478, %v479
    %v481 = vrot.slane %v86, 2
    %v482 = vsel %vm392, %v479, %v481
    %v483 = vrot.slane %v87, 2
    %v484 = vrot.slane %v88, 2
    %v485 = vsel %vm392, %v483, %v484
    %v486 = vrot.slane %v89, 2
    %v487 = vsel %vm392, %v484, %v486
    %v488 = vrot.slane %v90, 2
    %v489 = vrot.slane %v91, 2
    %v490 = vsel %vm392, %v488, %v489
    %v491 = vrot.slane %v92, 2
    %v492 = vsel %vm392, %v489, %v491
    %v493 = vrot.slane %v93, 2
    %v494 = vrot.slane %v94, 2
    %v495 = vsel %vm392, %v493, %v494
    %v496 = vrot.slane %v95, 2
    %v497 = vsel %vm392, %v494, %v496
    %v498 = vrot.slane %v96, 2
    %v499 = vrot.slane %v97, 2
    %v500 = vsel %vm392, %v498, %v499
    %v501 = vrot.slane %v98, 2
    %v502 = vsel %vm392, %v499, %v501
    %v503 = vrot.slane %v99, 2
    %v504 = vrot.slane %v100, 2
    %v505 = vsel %vm392, %v503, %v504
    %v506 = vrot.slane %v101, 2
    %v507 = vsel %vm392, %v504, %v506
    %v508 = vrot.slane %v102, 2
    %v509 = vrot.slane %v103, 2
    %v510 = vsel %vm392, %v508, %v509
    %v511 = vrot.slane %v104, 2
    %v512 = vsel %vm392, %v509, %v511
    %v513 = vrot.slane %v105, 2
    %v514 = vrot.slane %v106, 2
    %v515 = vsel %vm392, %v513, %v514
    %v516 = vrot.slane %v107, 2
    %v517 = vsel %vm392, %v514, %v516
    %v518 = vrot.slane %v108, 2
    %v519 = vrot.slane %v109, 2
    %v520 = vsel %vm392, %v518, %v519
    %v521 = vrot.slane %v110, 2
    %v522 = vsel %vm392, %v519, %v521
    %v523 = vrot.slane %v111, 2
    %v524 = vrot.slane %v112, 2
    %v525 = vsel %vm392, %v523, %v524
    %v526 = vrot.slane %v113, 2
    %v527 = vsel %vm392, %v524, %v526
    %v528 = vrot.slane %v114, 2
    %v529 = vrot.slane %v115, 2
    %v530 = vsel %vm392, %v528, %v529
    %v531 = vrot.slane %v116, 2
    %v532 = vsel %vm392, %v529, %v531
    %v533 = vrot.slane %v117, 2
    %v534 = vrot.slane %v118, 2
    %v535 = vsel %vm392, %v533, %v534
    %v536 = vrot.slane %v119, 2
    %v537 = vsel %vm392, %v534, %v536
    %v538 = vrot.slane %v120, 2
    %v539 = vrot.slane %v121, 2
    %v540 = vsel %vm392, %v538, %v539
    %v541 = vrot.slane %v122, 2
    %v542 = vsel %vm392, %v539, %v541
    %v543 = vrot.slane %v123, 2
    %v544 = vrot.slane %v124, 2
    %v545 = vsel %vm392, %v543, %v544
    %v546 = vrot.slane %v125, 2
    %v547 = vsel %vm392, %v544, %v546
    %v548 = vrot.slane %v126, 2
    %v549 = vrot.slane %v127, 2
    %v550 = vsel %vm392, %v548, %v549
    %v551 = vrot.slane %v128, 2
    %v552 = vsel %vm392, %v549, %v551
    %v559 = vrot.slane %v75, 1
    %v560 = vrot.slane %v76, 1
    %v561 = vsel %vm231, %v559, %v560
    %v562 = vrot.slane %v77, 1
    %v563 = vsel %vm231, %v560, %v562
    %v564 = vrot.slane %v129, 1
    %v565 = vrot.slane %v130, 1
    %v566 = vsel %vm231, %v564, %v565
    %v567 = vrot.slane %v131, 1
    %v568 = vsel %vm231, %v565, %v567
    %v569 = vrot.slane %v75, 2
    %v570 = vrot.slane %v76, 2
    %v571 = vsel %vm392, %v569, %v570
    %v572 = vrot.slane %v77, 2
    %v573 = vsel %vm392, %v570, %v572
    %v574 = vrot.slane %v129, 2
    %v575 = vrot.slane %v130, 2
    %v576 = vsel %vm392, %v574, %v575
    %v577 = vrot.slane %v131, 2
    %v578 = vsel %vm392, %v575, %v577
    %v585 = vrot.slane %v78, 1
    %v586 = vrot.slane %v79, 1
    %v587 = vsel %vm231, %v585, %v586
    %v588 = vrot.slane %v80, 1
    %v589 = vsel %vm231, %v586, %v588
    %v590 = vrot.slane %v132, 1
    %v591 = vrot.slane %v133, 1
    %v592 = vsel %vm231, %v590, %v591
    %v593 = vrot.slane %v134, 1
    %v594 = vsel %vm231, %v591, %v593
    %v595 = vrot.slane %v78, 2
    %v596 = vrot.slane %v79, 2
    %v597 = vsel %vm392, %v595, %v596
    %v598 = vrot.slane %v80, 2
    %v599 = vsel %vm392, %v596, %v598
    %v600 = vrot.slane %v132, 2
    %v601 = vrot.slane %v133, 2
    %v602 = vsel %vm392, %v600, %v601
    %v603 = vrot.slane %v134, 2
    %v604 = vsel %vm392, %v601, %v603
    %605 = vrot.lane.b32.xlu0 %v234, 16
    %v606 = vpop.permute.xlu0 %605
    %607 = vrot.lane.b32.xlu0 %v236, 16
    %v608 = vpop.permute.xlu0 %607
    %609 = vrot.lane.b32.xlu0 %v239, 16
    %v610 = vpop.permute.xlu0 %609
    %611 = vrot.lane.b32.xlu0 %v241, 16
    %v612 = vpop.permute.xlu0 %611
    %613 = vrot.lane.b32.xlu0 %v244, 16
    %v614 = vpop.permute.xlu0 %613
    %615 = vrot.lane.b32.xlu0 %v246, 16
    %v616 = vpop.permute.xlu0 %615
    %617 = vrot.lane.b32.xlu0 %v249, 16
    %v618 = vpop.permute.xlu0 %617
    %619 = vrot.lane.b32.xlu0 %v251, 16
    %v620 = vpop.permute.xlu0 %619
    %621 = vrot.lane.b32.xlu0 %v254, 16
    %v622 = vpop.permute.xlu0 %621
    %623 = vrot.lane.b32.xlu0 %v256, 16
    %v624 = vpop.permute.xlu0 %623
    %625 = vrot.lane.b32.xlu0 %v259, 16
    %v626 = vpop.permute.xlu0 %625
    %627 = vrot.lane.b32.xlu0 %v261, 16
    %v628 = vpop.permute.xlu0 %627
    %629 = vrot.lane.b32.xlu0 %v264, 16
    %v630 = vpop.permute.xlu0 %629
    %631 = vrot.lane.b32.xlu0 %v266, 16
    %v632 = vpop.permute.xlu0 %631
    %633 = vrot.lane.b32.xlu0 %v269, 16
    %v634 = vpop.permute.xlu0 %633
    %635 = vrot.lane.b32.xlu0 %v271, 16
    %v636 = vpop.permute.xlu0 %635
    %637 = vrot.lane.b32.xlu0 %v274, 16
    %v638 = vpop.permute.xlu0 %637
    %639 = vrot.lane.b32.xlu0 %v276, 16
    %v640 = vpop.permute.xlu0 %639
    %641 = vrot.lane.b32.xlu0 %v279, 16
    %v642 = vpop.permute.xlu0 %641
    %643 = vrot.lane.b32.xlu0 %v281, 16
    %v644 = vpop.permute.xlu0 %643
    %645 = vrot.lane.b32.xlu0 %v284, 16
    %v646 = vpop.permute.xlu0 %645
    %647 = vrot.lane.b32.xlu0 %v286, 16
    %v648 = vpop.permute.xlu0 %647
    %649 = vrot.lane.b32.xlu0 %v289, 16
    %v650 = vpop.permute.xlu0 %649
    %651 = vrot.lane.b32.xlu0 %v291, 16
    %v652 = vpop.permute.xlu0 %651
    %653 = vrot.lane.b32.xlu0 %v294, 16
    %v654 = vpop.permute.xlu0 %653
    %655 = vrot.lane.b32.xlu0 %v296, 16
    %v656 = vpop.permute.xlu0 %655
    %657 = vrot.lane.b32.xlu0 %v299, 16
    %v658 = vpop.permute.xlu0 %657
    %659 = vrot.lane.b32.xlu0 %v301, 16
    %v660 = vpop.permute.xlu0 %659
    %661 = vrot.lane.b32.xlu0 %v304, 16
    %v662 = vpop.permute.xlu0 %661
    %663 = vrot.lane.b32.xlu0 %v306, 16
    %v664 = vpop.permute.xlu0 %663
    %665 = vrot.lane.b32.xlu0 %v309, 16
    %v666 = vpop.permute.xlu0 %665
    %667 = vrot.lane.b32.xlu0 %v311, 16
    %v668 = vpop.permute.xlu0 %667
    %669 = vrot.lane.b32.xlu0 %v314, 16
    %v670 = vpop.permute.xlu0 %669
    %671 = vrot.lane.b32.xlu0 %v316, 16
    %v672 = vpop.permute.xlu0 %671
    %673 = vrot.lane.b32.xlu0 %v319, 16
    %v674 = vpop.permute.xlu0 %673
    %675 = vrot.lane.b32.xlu0 %v321, 16
    %v676 = vpop.permute.xlu0 %675
    %677 = vrot.lane.b32.xlu0 %v324, 16
    %v678 = vpop.permute.xlu0 %677
    %679 = vrot.lane.b32.xlu0 %v326, 16
    %v680 = vpop.permute.xlu0 %679
    %681 = vrot.lane.b32.xlu0 %v329, 16
    %v682 = vpop.permute.xlu0 %681
    %683 = vrot.lane.b32.xlu0 %v331, 16
    %v684 = vpop.permute.xlu0 %683
    %685 = vrot.lane.b32.xlu0 %v334, 16
    %v686 = vpop.permute.xlu0 %685
    %687 = vrot.lane.b32.xlu0 %v336, 16
    %v688 = vpop.permute.xlu0 %687
    %689 = vrot.lane.b32.xlu0 %v339, 16
    %v690 = vpop.permute.xlu0 %689
    %691 = vrot.lane.b32.xlu0 %v341, 16
    %v692 = vpop.permute.xlu0 %691
    %693 = vrot.lane.b32.xlu0 %v344, 16
    %v694 = vpop.permute.xlu0 %693
    %695 = vrot.lane.b32.xlu0 %v346, 16
    %v696 = vpop.permute.xlu0 %695
    %697 = vrot.lane.b32.xlu0 %v349, 16
    %v698 = vpop.permute.xlu0 %697
    %699 = vrot.lane.b32.xlu0 %v351, 16
    %v700 = vpop.permute.xlu0 %699
    %701 = vrot.lane.b32.xlu0 %v354, 16
    %v702 = vpop.permute.xlu0 %701
    %703 = vrot.lane.b32.xlu0 %v356, 16
    %v704 = vpop.permute.xlu0 %703
    %705 = vrot.lane.b32.xlu0 %v359, 16
    %v706 = vpop.permute.xlu0 %705
    %707 = vrot.lane.b32.xlu0 %v361, 16
    %v708 = vpop.permute.xlu0 %707
    %709 = vrot.lane.b32.xlu0 %v364, 16
    %v710 = vpop.permute.xlu0 %709
    %711 = vrot.lane.b32.xlu0 %v366, 16
    %v712 = vpop.permute.xlu0 %711
    %713 = vrot.lane.b32.xlu0 %v369, 16
    %v714 = vpop.permute.xlu0 %713
    %715 = vrot.lane.b32.xlu0 %v371, 16
    %v716 = vpop.permute.xlu0 %715
    %717 = vrot.lane.b32.xlu0 %v374, 16
    %v718 = vpop.permute.xlu0 %717
    %719 = vrot.lane.b32.xlu0 %v376, 16
    %v720 = vpop.permute.xlu0 %719
    %721 = vrot.lane.b32.xlu0 %v379, 16
    %v722 = vpop.permute.xlu0 %721
    %723 = vrot.lane.b32.xlu0 %v381, 16
    %v724 = vpop.permute.xlu0 %723
    %725 = vrot.lane.b32.xlu0 %v384, 16
    %v726 = vpop.permute.xlu0 %725
    %727 = vrot.lane.b32.xlu0 %v386, 16
    %v728 = vpop.permute.xlu0 %727
    %729 = vrot.lane.b32.xlu0 %v389, 16
    %v730 = vpop.permute.xlu0 %729
    %731 = vrot.lane.b32.xlu0 %v391, 16
    %v732 = vpop.permute.xlu0 %731
    %797 = vrot.lane.b32.xlu0 %v395, 32
    %v798 = vpop.permute.xlu0 %797
    %799 = vrot.lane.b32.xlu0 %v397, 32
    %v800 = vpop.permute.xlu0 %799
    %801 = vrot.lane.b32.xlu0 %v400, 32
    %v802 = vpop.permute.xlu0 %801
    %803 = vrot.lane.b32.xlu0 %v402, 32
    %v804 = vpop.permute.xlu0 %803
    %805 = vrot.lane.b32.xlu0 %v405, 32
    %v806 = vpop.permute.xlu0 %805
    %807 = vrot.lane.b32.xlu0 %v407, 32
    %v808 = vpop.permute.xlu0 %807
    %809 = vrot.lane.b32.xlu0 %v410, 32
    %v810 = vpop.permute.xlu0 %809
    %811 = vrot.lane.b32.xlu0 %v412, 32
    %v812 = vpop.permute.xlu0 %811
    %813 = vrot.lane.b32.xlu0 %v415, 32
    %v814 = vpop.permute.xlu0 %813
    %815 = vrot.lane.b32.xlu0 %v417, 32
    %v816 = vpop.permute.xlu0 %815
    %817 = vrot.lane.b32.xlu0 %v420, 32
    %v818 = vpop.permute.xlu0 %817
    %819 = vrot.lane.b32.xlu0 %v422, 32
    %v820 = vpop.permute.xlu0 %819
    %821 = vrot.lane.b32.xlu0 %v425, 32
    %v822 = vpop.permute.xlu0 %821
    %823 = vrot.lane.b32.xlu0 %v427, 32
    %v824 = vpop.permute.xlu0 %823
    %825 = vrot.lane.b32.xlu0 %v430, 32
    %v826 = vpop.permute.xlu0 %825
    %827 = vrot.lane.b32.xlu0 %v432, 32
    %v828 = vpop.permute.xlu0 %827
    %829 = vrot.lane.b32.xlu0 %v435, 32
    %v830 = vpop.permute.xlu0 %829
    %831 = vrot.lane.b32.xlu0 %v437, 32
    %v832 = vpop.permute.xlu0 %831
    %833 = vrot.lane.b32.xlu0 %v440, 32
    %v834 = vpop.permute.xlu0 %833
    %835 = vrot.lane.b32.xlu0 %v442, 32
    %v836 = vpop.permute.xlu0 %835
    %837 = vrot.lane.b32.xlu0 %v445, 32
    %v838 = vpop.permute.xlu0 %837
    %839 = vrot.lane.b32.xlu0 %v447, 32
    %v840 = vpop.permute.xlu0 %839
    %841 = vrot.lane.b32.xlu0 %v450, 32
    %v842 = vpop.permute.xlu0 %841
    %843 = vrot.lane.b32.xlu0 %v452, 32
    %v844 = vpop.permute.xlu0 %843
    %845 = vrot.lane.b32.xlu0 %v455, 32
    %v846 = vpop.permute.xlu0 %845
    %847 = vrot.lane.b32.xlu0 %v457, 32
    %v848 = vpop.permute.xlu0 %847
    %849 = vrot.lane.b32.xlu0 %v460, 32
    %v850 = vpop.permute.xlu0 %849
    %851 = vrot.lane.b32.xlu0 %v462, 32
    %v852 = vpop.permute.xlu0 %851
    %853 = vrot.lane.b32.xlu0 %v465, 32
    %v854 = vpop.permute.xlu0 %853
    %855 = vrot.lane.b32.xlu0 %v467, 32
    %v856 = vpop.permute.xlu0 %855
    %857 = vrot.lane.b32.xlu0 %v470, 32
    %v858 = vpop.permute.xlu0 %857
    %859 = vrot.lane.b32.xlu0 %v472, 32
    %v860 = vpop.permute.xlu0 %859
    %861 = vrot.lane.b32.xlu0 %v475, 32
    %v862 = vpop.permute.xlu0 %861
    %863 = vrot.lane.b32.xlu0 %v477, 32
    %v864 = vpop.permute.xlu0 %863
    %865 = vrot.lane.b32.xlu0 %v480, 32
    %v866 = vpop.permute.xlu0 %865
    %867 = vrot.lane.b32.xlu0 %v482, 32
    %v868 = vpop.permute.xlu0 %867
    %869 = vrot.lane.b32.xlu0 %v485, 32
    %v870 = vpop.permute.xlu0 %869
    %871 = vrot.lane.b32.xlu0 %v487, 32
    %v872 = vpop.permute.xlu0 %871
    %873 = vrot.lane.b32.xlu0 %v490, 32
    %v874 = vpop.permute.xlu0 %873
    %875 = vrot.lane.b32.xlu0 %v492, 32
    %v876 = vpop.permute.xlu0 %875
    %877 = vrot.lane.b32.xlu0 %v495, 32
    %v878 = vpop.permute.xlu0 %877
    %879 = vrot.lane.b32.xlu0 %v497, 32
    %v880 = vpop.permute.xlu0 %879
    %881 = vrot.lane.b32.xlu0 %v500, 32
    %v882 = vpop.permute.xlu0 %881
    %883 = vrot.lane.b32.xlu0 %v502, 32
    %v884 = vpop.permute.xlu0 %883
    %885 = vrot.lane.b32.xlu0 %v505, 32
    %v886 = vpop.permute.xlu0 %885
    %887 = vrot.lane.b32.xlu0 %v507, 32
    %v888 = vpop.permute.xlu0 %887
    %889 = vrot.lane.b32.xlu0 %v510, 32
    %v890 = vpop.permute.xlu0 %889
    %891 = vrot.lane.b32.xlu0 %v512, 32
    %v892 = vpop.permute.xlu0 %891
    %893 = vrot.lane.b32.xlu0 %v515, 32
    %v894 = vpop.permute.xlu0 %893
    %895 = vrot.lane.b32.xlu0 %v517, 32
    %v896 = vpop.permute.xlu0 %895
    %897 = vrot.lane.b32.xlu0 %v520, 32
    %v898 = vpop.permute.xlu0 %897
    %899 = vrot.lane.b32.xlu0 %v522, 32
    %v900 = vpop.permute.xlu0 %899
    %901 = vrot.lane.b32.xlu0 %v525, 32
    %v902 = vpop.permute.xlu0 %901
    %903 = vrot.lane.b32.xlu0 %v527, 32
    %v904 = vpop.permute.xlu0 %903
    %905 = vrot.lane.b32.xlu0 %v530, 32
    %v906 = vpop.permute.xlu0 %905
    %907 = vrot.lane.b32.xlu0 %v532, 32
    %v908 = vpop.permute.xlu0 %907
    %909 = vrot.lane.b32.xlu0 %v535, 32
    %v910 = vpop.permute.xlu0 %909
    %911 = vrot.lane.b32.xlu0 %v537, 32
    %v912 = vpop.permute.xlu0 %911
    %913 = vrot.lane.b32.xlu0 %v540, 32
    %v914 = vpop.permute.xlu0 %913
    %915 = vrot.lane.b32.xlu0 %v542, 32
    %v916 = vpop.permute.xlu0 %915
    %917 = vrot.lane.b32.xlu0 %v545, 32
    %v918 = vpop.permute.xlu0 %917
    %919 = vrot.lane.b32.xlu0 %v547, 32
    %v920 = vpop.permute.xlu0 %919
    %921 = vrot.lane.b32.xlu0 %v550, 32
    %v922 = vpop.permute.xlu0 %921
    %923 = vrot.lane.b32.xlu0 %v552, 32
    %v924 = vpop.permute.xlu0 %923
    %989 = vrot.lane.b32.xlu0 %v30, 48
    %v990 = vpop.permute.xlu0 %989
    %991 = vrot.lane.b32.xlu0 %v31, 48
    %v992 = vpop.permute.xlu0 %991
    %993 = vrot.lane.b32.xlu0 %v33, 48
    %v994 = vpop.permute.xlu0 %993
    %995 = vrot.lane.b32.xlu0 %v34, 48
    %v996 = vpop.permute.xlu0 %995
    %997 = vrot.lane.b32.xlu0 %v36, 48
    %v998 = vpop.permute.xlu0 %997
    %999 = vrot.lane.b32.xlu0 %v37, 48
    %v1000 = vpop.permute.xlu0 %999
    %1001 = vrot.lane.b32.xlu0 %v39, 48
    %v1002 = vpop.permute.xlu0 %1001
    %1003 = vrot.lane.b32.xlu0 %v40, 48
    %v1004 = vpop.permute.xlu0 %1003
    %1005 = vrot.lane.b32.xlu0 %v42, 48
    %v1006 = vpop.permute.xlu0 %1005
    %1007 = vrot.lane.b32.xlu0 %v43, 48
    %v1008 = vpop.permute.xlu0 %1007
    %1009 = vrot.lane.b32.xlu0 %v45, 48
    %v1010 = vpop.permute.xlu0 %1009
    %1011 = vrot.lane.b32.xlu0 %v46, 48
    %v1012 = vpop.permute.xlu0 %1011
    %1013 = vrot.lane.b32.xlu0 %v48, 48
    %v1014 = vpop.permute.xlu0 %1013
    %1015 = vrot.lane.b32.xlu0 %v49, 48
    %v1016 = vpop.permute.xlu0 %1015
    %1017 = vrot.lane.b32.xlu0 %v51, 48
    %v1018 = vpop.permute.xlu0 %1017
    %1019 = vrot.lane.b32.xlu0 %v52, 48
    %v1020 = vpop.permute.xlu0 %1019
    %1021 = vrot.lane.b32.xlu0 %v54, 48
    %v1022 = vpop.permute.xlu0 %1021
    %1023 = vrot.lane.b32.xlu0 %v55, 48
    %v1024 = vpop.permute.xlu0 %1023
    %1025 = vrot.lane.b32.xlu0 %v57, 48
    %v1026 = vpop.permute.xlu0 %1025
    %1027 = vrot.lane.b32.xlu0 %v58, 48
    %v1028 = vpop.permute.xlu0 %1027
    %1029 = vrot.lane.b32.xlu0 %v60, 48
    %v1030 = vpop.permute.xlu0 %1029
    %1031 = vrot.lane.b32.xlu0 %v61, 48
    %v1032 = vpop.permute.xlu0 %1031
    %1033 = vrot.lane.b32.xlu0 %v63, 48
    %v1034 = vpop.permute.xlu0 %1033
    %1035 = vrot.lane.b32.xlu0 %v64, 48
    %v1036 = vpop.permute.xlu0 %1035
    %1037 = vrot.lane.b32.xlu0 %v66, 48
    %v1038 = vpop.permute.xlu0 %1037
    %1039 = vrot.lane.b32.xlu0 %v67, 48
    %v1040 = vpop.permute.xlu0 %1039
    %1041 = vrot.lane.b32.xlu0 %v69, 48
    %v1042 = vpop.permute.xlu0 %1041
    %1043 = vrot.lane.b32.xlu0 %v70, 48
    %v1044 = vpop.permute.xlu0 %1043
    %1045 = vrot.lane.b32.xlu0 %v72, 48
    %v1046 = vpop.permute.xlu0 %1045
    %1047 = vrot.lane.b32.xlu0 %v73, 48
    %v1048 = vpop.permute.xlu0 %1047
    %1049 = vrot.lane.b32.xlu0 %v75, 48
    %v1050 = vpop.permute.xlu0 %1049
    %1051 = vrot.lane.b32.xlu0 %v76, 48
    %v1052 = vpop.permute.xlu0 %1051
    %1053 = vrot.lane.b32.xlu0 %v84, 48
    %v1054 = vpop.permute.xlu0 %1053
    %1055 = vrot.lane.b32.xlu0 %v85, 48
    %v1056 = vpop.permute.xlu0 %1055
    %1057 = vrot.lane.b32.xlu0 %v87, 48
    %v1058 = vpop.permute.xlu0 %1057
    %1059 = vrot.lane.b32.xlu0 %v88, 48
    %v1060 = vpop.permute.xlu0 %1059
    %1061 = vrot.lane.b32.xlu0 %v90, 48
    %v1062 = vpop.permute.xlu0 %1061
    %1063 = vrot.lane.b32.xlu0 %v91, 48
    %v1064 = vpop.permute.xlu0 %1063
    %1065 = vrot.lane.b32.xlu0 %v93, 48
    %v1066 = vpop.permute.xlu0 %1065
    %1067 = vrot.lane.b32.xlu0 %v94, 48
    %v1068 = vpop.permute.xlu0 %1067
    %1069 = vrot.lane.b32.xlu0 %v96, 48
    %v1070 = vpop.permute.xlu0 %1069
    %1071 = vrot.lane.b32.xlu0 %v97, 48
    %v1072 = vpop.permute.xlu0 %1071
    %1073 = vrot.lane.b32.xlu0 %v99, 48
    %v1074 = vpop.permute.xlu0 %1073
    %1075 = vrot.lane.b32.xlu0 %v100, 48
    %v1076 = vpop.permute.xlu0 %1075
    %1077 = vrot.lane.b32.xlu0 %v102, 48
    %v1078 = vpop.permute.xlu0 %1077
    %1079 = vrot.lane.b32.xlu0 %v103, 48
    %v1080 = vpop.permute.xlu0 %1079
    %1081 = vrot.lane.b32.xlu0 %v105, 48
    %v1082 = vpop.permute.xlu0 %1081
    %1083 = vrot.lane.b32.xlu0 %v106, 48
    %v1084 = vpop.permute.xlu0 %1083
    %1085 = vrot.lane.b32.xlu0 %v108, 48
    %v1086 = vpop.permute.xlu0 %1085
    %1087 = vrot.lane.b32.xlu0 %v109, 48
    %v1088 = vpop.permute.xlu0 %1087
    %1089 = vrot.lane.b32.xlu0 %v111, 48
    %v1090 = vpop.permute.xlu0 %1089
    %1091 = vrot.lane.b32.xlu0 %v112, 48
    %v1092 = vpop.permute.xlu0 %1091
    %1093 = vrot.lane.b32.xlu0 %v114, 48
    %v1094 = vpop.permute.xlu0 %1093
    %1095 = vrot.lane.b32.xlu0 %v115, 48
    %v1096 = vpop.permute.xlu0 %1095
    %1097 = vrot.lane.b32.xlu0 %v117, 48
    %v1098 = vpop.permute.xlu0 %1097
    %1099 = vrot.lane.b32.xlu0 %v118, 48
    %v1100 = vpop.permute.xlu0 %1099
    %1101 = vrot.lane.b32.xlu0 %v120, 48
    %v1102 = vpop.permute.xlu0 %1101
    %1103 = vrot.lane.b32.xlu0 %v121, 48
    %v1104 = vpop.permute.xlu0 %1103
    %1105 = vrot.lane.b32.xlu0 %v123, 48
    %v1106 = vpop.permute.xlu0 %1105
    %1107 = vrot.lane.b32.xlu0 %v124, 48
    %v1108 = vpop.permute.xlu0 %1107
    %1109 = vrot.lane.b32.xlu0 %v126, 48
    %v1110 = vpop.permute.xlu0 %1109
    %1111 = vrot.lane.b32.xlu0 %v127, 48
    %v1112 = vpop.permute.xlu0 %1111
    %1113 = vrot.lane.b32.xlu0 %v129, 48
    %v1114 = vpop.permute.xlu0 %1113
    %1115 = vrot.lane.b32.xlu0 %v130, 48
    %v1116 = vpop.permute.xlu0 %1115
    %1181 = vrot.lane.b32.xlu0 %v239, 64
    %v1182 = vpop.permute.xlu0 %1181
    %1183 = vrot.lane.b32.xlu0 %v241, 64
    %v1184 = vpop.permute.xlu0 %1183
    %1185 = vrot.lane.b32.xlu0 %v244, 64
    %v1186 = vpop.permute.xlu0 %1185
    %1187 = vrot.lane.b32.xlu0 %v246, 64
    %v1188 = vpop.permute.xlu0 %1187
    %1189 = vrot.lane.b32.xlu0 %v249, 64
    %v1190 = vpop.permute.xlu0 %1189
    %1191 = vrot.lane.b32.xlu0 %v251, 64
    %v1192 = vpop.permute.xlu0 %1191
    %1193 = vrot.lane.b32.xlu0 %v254, 64
    %v1194 = vpop.permute.xlu0 %1193
    %1195 = vrot.lane.b32.xlu0 %v256, 64
    %v1196 = vpop.permute.xlu0 %1195
    %1197 = vrot.lane.b32.xlu0 %v259, 64
    %v1198 = vpop.permute.xlu0 %1197
    %1199 = vrot.lane.b32.xlu0 %v261, 64
    %v1200 = vpop.permute.xlu0 %1199
    %1201 = vrot.lane.b32.xlu0 %v264, 64
    %v1202 = vpop.permute.xlu0 %1201
    %1203 = vrot.lane.b32.xlu0 %v266, 64
    %v1204 = vpop.permute.xlu0 %1203
    %1205 = vrot.lane.b32.xlu0 %v269, 64
    %v1206 = vpop.permute.xlu0 %1205
    %1207 = vrot.lane.b32.xlu0 %v271, 64
    %v1208 = vpop.permute.xlu0 %1207
    %1209 = vrot.lane.b32.xlu0 %v274, 64
    %v1210 = vpop.permute.xlu0 %1209
    %1211 = vrot.lane.b32.xlu0 %v276, 64
    %v1212 = vpop.permute.xlu0 %1211
    %1213 = vrot.lane.b32.xlu0 %v279, 64
    %v1214 = vpop.permute.xlu0 %1213
    %1215 = vrot.lane.b32.xlu0 %v281, 64
    %v1216 = vpop.permute.xlu0 %1215
    %1217 = vrot.lane.b32.xlu0 %v284, 64
    %v1218 = vpop.permute.xlu0 %1217
    %1219 = vrot.lane.b32.xlu0 %v286, 64
    %v1220 = vpop.permute.xlu0 %1219
    %1221 = vrot.lane.b32.xlu0 %v289, 64
    %v1222 = vpop.permute.xlu0 %1221
    %1223 = vrot.lane.b32.xlu0 %v291, 64
    %v1224 = vpop.permute.xlu0 %1223
    %1225 = vrot.lane.b32.xlu0 %v294, 64
    %v1226 = vpop.permute.xlu0 %1225
    %1227 = vrot.lane.b32.xlu0 %v296, 64
    %v1228 = vpop.permute.xlu0 %1227
    %1229 = vrot.lane.b32.xlu0 %v299, 64
    %v1230 = vpop.permute.xlu0 %1229
    %1231 = vrot.lane.b32.xlu0 %v301, 64
    %v1232 = vpop.permute.xlu0 %1231
    %1233 = vrot.lane.b32.xlu0 %v304, 64
    %v1234 = vpop.permute.xlu0 %1233
    %1235 = vrot.lane.b32.xlu0 %v306, 64
    %v1236 = vpop.permute.xlu0 %1235
    %1237 = vrot.lane.b32.xlu0 %v309, 64
    %v1238 = vpop.permute.xlu0 %1237
    %1239 = vrot.lane.b32.xlu0 %v311, 64
    %v1240 = vpop.permute.xlu0 %1239
    %1241 = vrot.lane.b32.xlu0 %v561, 64
    %v1242 = vpop.permute.xlu0 %1241
    %1243 = vrot.lane.b32.xlu0 %v563, 64
    %v1244 = vpop.permute.xlu0 %1243
    %1245 = vrot.lane.b32.xlu0 %v319, 64
    %v1246 = vpop.permute.xlu0 %1245
    %1247 = vrot.lane.b32.xlu0 %v321, 64
    %v1248 = vpop.permute.xlu0 %1247
    %1249 = vrot.lane.b32.xlu0 %v324, 64
    %v1250 = vpop.permute.xlu0 %1249
    %1251 = vrot.lane.b32.xlu0 %v326, 64
    %v1252 = vpop.permute.xlu0 %1251
    %1253 = vrot.lane.b32.xlu0 %v329, 64
    %v1254 = vpop.permute.xlu0 %1253
    %1255 = vrot.lane.b32.xlu0 %v331, 64
    %v1256 = vpop.permute.xlu0 %1255
    %1257 = vrot.lane.b32.xlu0 %v334, 64
    %v1258 = vpop.permute.xlu0 %1257
    %1259 = vrot.lane.b32.xlu0 %v336, 64
    %v1260 = vpop.permute.xlu0 %1259
    %1261 = vrot.lane.b32.xlu0 %v339, 64
    %v1262 = vpop.permute.xlu0 %1261
    %1263 = vrot.lane.b32.xlu0 %v341, 64
    %v1264 = vpop.permute.xlu0 %1263
    %1265 = vrot.lane.b32.xlu0 %v344, 64
    %v1266 = vpop.permute.xlu0 %1265
    %1267 = vrot.lane.b32.xlu0 %v346, 64
    %v1268 = vpop.permute.xlu0 %1267
    %1269 = vrot.lane.b32.xlu0 %v349, 64
    %v1270 = vpop.permute.xlu0 %1269
    %1271 = vrot.lane.b32.xlu0 %v351, 64
    %v1272 = vpop.permute.xlu0 %1271
    %1273 = vrot.lane.b32.xlu0 %v354, 64
    %v1274 = vpop.permute.xlu0 %1273
    %1275 = vrot.lane.b32.xlu0 %v356, 64
    %v1276 = vpop.permute.xlu0 %1275
    %1277 = vrot.lane.b32.xlu0 %v359, 64
    %v1278 = vpop.permute.xlu0 %1277
    %1279 = vrot.lane.b32.xlu0 %v361, 64
    %v1280 = vpop.permute.xlu0 %1279
    %1281 = vrot.lane.b32.xlu0 %v364, 64
    %v1282 = vpop.permute.xlu0 %1281
    %1283 = vrot.lane.b32.xlu0 %v366, 64
    %v1284 = vpop.permute.xlu0 %1283
    %1285 = vrot.lane.b32.xlu0 %v369, 64
    %v1286 = vpop.permute.xlu0 %1285
    %1287 = vrot.lane.b32.xlu0 %v371, 64
    %v1288 = vpop.permute.xlu0 %1287
    %1289 = vrot.lane.b32.xlu0 %v374, 64
    %v1290 = vpop.permute.xlu0 %1289
    %1291 = vrot.lane.b32.xlu0 %v376, 64
    %v1292 = vpop.permute.xlu0 %1291
    %1293 = vrot.lane.b32.xlu0 %v379, 64
    %v1294 = vpop.permute.xlu0 %1293
    %1295 = vrot.lane.b32.xlu0 %v381, 64
    %v1296 = vpop.permute.xlu0 %1295
    %1297 = vrot.lane.b32.xlu0 %v384, 64
    %v1298 = vpop.permute.xlu0 %1297
    %1299 = vrot.lane.b32.xlu0 %v386, 64
    %v1300 = vpop.permute.xlu0 %1299
    %1301 = vrot.lane.b32.xlu0 %v389, 64
    %v1302 = vpop.permute.xlu0 %1301
    %1303 = vrot.lane.b32.xlu0 %v391, 64
    %v1304 = vpop.permute.xlu0 %1303
    %1305 = vrot.lane.b32.xlu0 %v566, 64
    %v1306 = vpop.permute.xlu0 %1305
    %1307 = vrot.lane.b32.xlu0 %v568, 64
    %v1308 = vpop.permute.xlu0 %1307
    %1373 = vrot.lane.b32.xlu0 %v400, 80
    %v1374 = vpop.permute.xlu0 %1373
    %1375 = vrot.lane.b32.xlu0 %v402, 80
    %v1376 = vpop.permute.xlu0 %1375
    %1377 = vrot.lane.b32.xlu0 %v405, 80
    %v1378 = vpop.permute.xlu0 %1377
    %1379 = vrot.lane.b32.xlu0 %v407, 80
    %v1380 = vpop.permute.xlu0 %1379
    %1381 = vrot.lane.b32.xlu0 %v410, 80
    %v1382 = vpop.permute.xlu0 %1381
    %1383 = vrot.lane.b32.xlu0 %v412, 80
    %v1384 = vpop.permute.xlu0 %1383
    %1385 = vrot.lane.b32.xlu0 %v415, 80
    %v1386 = vpop.permute.xlu0 %1385
    %1387 = vrot.lane.b32.xlu0 %v417, 80
    %v1388 = vpop.permute.xlu0 %1387
    %1389 = vrot.lane.b32.xlu0 %v420, 80
    %v1390 = vpop.permute.xlu0 %1389
    %1391 = vrot.lane.b32.xlu0 %v422, 80
    %v1392 = vpop.permute.xlu0 %1391
    %1393 = vrot.lane.b32.xlu0 %v425, 80
    %v1394 = vpop.permute.xlu0 %1393
    %1395 = vrot.lane.b32.xlu0 %v427, 80
    %v1396 = vpop.permute.xlu0 %1395
    %1397 = vrot.lane.b32.xlu0 %v430, 80
    %v1398 = vpop.permute.xlu0 %1397
    %1399 = vrot.lane.b32.xlu0 %v432, 80
    %v1400 = vpop.permute.xlu0 %1399
    %1401 = vrot.lane.b32.xlu0 %v435, 80
    %v1402 = vpop.permute.xlu0 %1401
    %1403 = vrot.lane.b32.xlu0 %v437, 80
    %v1404 = vpop.permute.xlu0 %1403
    %1405 = vrot.lane.b32.xlu0 %v440, 80
    %v1406 = vpop.permute.xlu0 %1405
    %1407 = vrot.lane.b32.xlu0 %v442, 80
    %v1408 = vpop.permute.xlu0 %1407
    %1409 = vrot.lane.b32.xlu0 %v445, 80
    %v1410 = vpop.permute.xlu0 %1409
    %1411 = vrot.lane.b32.xlu0 %v447, 80
    %v1412 = vpop.permute.xlu0 %1411
    %1413 = vrot.lane.b32.xlu0 %v450, 80
    %v1414 = vpop.permute.xlu0 %1413
    %1415 = vrot.lane.b32.xlu0 %v452, 80
    %v1416 = vpop.permute.xlu0 %1415
    %1417 = vrot.lane.b32.xlu0 %v455, 80
    %v1418 = vpop.permute.xlu0 %1417
    %1419 = vrot.lane.b32.xlu0 %v457, 80
    %v1420 = vpop.permute.xlu0 %1419
    %1421 = vrot.lane.b32.xlu0 %v460, 80
    %v1422 = vpop.permute.xlu0 %1421
    %1423 = vrot.lane.b32.xlu0 %v462, 80
    %v1424 = vpop.permute.xlu0 %1423
    %1425 = vrot.lane.b32.xlu0 %v465, 80
    %v1426 = vpop.permute.xlu0 %1425
    %1427 = vrot.lane.b32.xlu0 %v467, 80
    %v1428 = vpop.permute.xlu0 %1427
    %1429 = vrot.lane.b32.xlu0 %v470, 80
    %v1430 = vpop.permute.xlu0 %1429
    %1431 = vrot.lane.b32.xlu0 %v472, 80
    %v1432 = vpop.permute.xlu0 %1431
    %1433 = vrot.lane.b32.xlu0 %v571, 80
    %v1434 = vpop.permute.xlu0 %1433
    %1435 = vrot.lane.b32.xlu0 %v573, 80
    %v1436 = vpop.permute.xlu0 %1435
    %1437 = vrot.lane.b32.xlu0 %v480, 80
    %v1438 = vpop.permute.xlu0 %1437
    %1439 = vrot.lane.b32.xlu0 %v482, 80
    %v1440 = vpop.permute.xlu0 %1439
    %1441 = vrot.lane.b32.xlu0 %v485, 80
    %v1442 = vpop.permute.xlu0 %1441
    %1443 = vrot.lane.b32.xlu0 %v487, 80
    %v1444 = vpop.permute.xlu0 %1443
    %1445 = vrot.lane.b32.xlu0 %v490, 80
    %v1446 = vpop.permute.xlu0 %1445
    %1447 = vrot.lane.b32.xlu0 %v492, 80
    %v1448 = vpop.permute.xlu0 %1447
    %1449 = vrot.lane.b32.xlu0 %v495, 80
    %v1450 = vpop.permute.xlu0 %1449
    %1451 = vrot.lane.b32.xlu0 %v497, 80
    %v1452 = vpop.permute.xlu0 %1451
    %1453 = vrot.lane.b32.xlu0 %v500, 80
    %v1454 = vpop.permute.xlu0 %1453
    %1455 = vrot.lane.b32.xlu0 %v502, 80
    %v1456 = vpop.permute.xlu0 %1455
    %1457 = vrot.lane.b32.xlu0 %v505, 80
    %v1458 = vpop.permute.xlu0 %1457
    %1459 = vrot.lane.b32.xlu0 %v507, 80
    %v1460 = vpop.permute.xlu0 %1459
    %1461 = vrot.lane.b32.xlu0 %v510, 80
    %v1462 = vpop.permute.xlu0 %1461
    %1463 = vrot.lane.b32.xlu0 %v512, 80
    %v1464 = vpop.permute.xlu0 %1463
    %1465 = vrot.lane.b32.xlu0 %v515, 80
    %v1466 = vpop.permute.xlu0 %1465
    %1467 = vrot.lane.b32.xlu0 %v517, 80
    %v1468 = vpop.permute.xlu0 %1467
    %1469 = vrot.lane.b32.xlu0 %v520, 80
    %v1470 = vpop.permute.xlu0 %1469
    %1471 = vrot.lane.b32.xlu0 %v522, 80
    %v1472 = vpop.permute.xlu0 %1471
    %1473 = vrot.lane.b32.xlu0 %v525, 80
    %v1474 = vpop.permute.xlu0 %1473
    %1475 = vrot.lane.b32.xlu0 %v527, 80
    %v1476 = vpop.permute.xlu0 %1475
    %1477 = vrot.lane.b32.xlu0 %v530, 80
    %v1478 = vpop.permute.xlu0 %1477
    %1479 = vrot.lane.b32.xlu0 %v532, 80
    %v1480 = vpop.permute.xlu0 %1479
    %1481 = vrot.lane.b32.xlu0 %v535, 80
    %v1482 = vpop.permute.xlu0 %1481
    %1483 = vrot.lane.b32.xlu0 %v537, 80
    %v1484 = vpop.permute.xlu0 %1483
    %1485 = vrot.lane.b32.xlu0 %v540, 80
    %v1486 = vpop.permute.xlu0 %1485
    %1487 = vrot.lane.b32.xlu0 %v542, 80
    %v1488 = vpop.permute.xlu0 %1487
    %1489 = vrot.lane.b32.xlu0 %v545, 80
    %v1490 = vpop.permute.xlu0 %1489
    %1491 = vrot.lane.b32.xlu0 %v547, 80
    %v1492 = vpop.permute.xlu0 %1491
    %1493 = vrot.lane.b32.xlu0 %v550, 80
    %v1494 = vpop.permute.xlu0 %1493
    %1495 = vrot.lane.b32.xlu0 %v552, 80
    %v1496 = vpop.permute.xlu0 %1495
    %1497 = vrot.lane.b32.xlu0 %v576, 80
    %v1498 = vpop.permute.xlu0 %1497
    %1499 = vrot.lane.b32.xlu0 %v578, 80
    %v1500 = vpop.permute.xlu0 %1499
    %1565 = vrot.lane.b32.xlu0 %v33, 96
    %v1566 = vpop.permute.xlu0 %1565
    %1567 = vrot.lane.b32.xlu0 %v34, 96
    %v1568 = vpop.permute.xlu0 %1567
    %1569 = vrot.lane.b32.xlu0 %v36, 96
    %v1570 = vpop.permute.xlu0 %1569
    %1571 = vrot.lane.b32.xlu0 %v37, 96
    %v1572 = vpop.permute.xlu0 %1571
    %1573 = vrot.lane.b32.xlu0 %v39, 96
    %v1574 = vpop.permute.xlu0 %1573
    %1575 = vrot.lane.b32.xlu0 %v40, 96
    %v1576 = vpop.permute.xlu0 %1575
    %1577 = vrot.lane.b32.xlu0 %v42, 96
    %v1578 = vpop.permute.xlu0 %1577
    %1579 = vrot.lane.b32.xlu0 %v43, 96
    %v1580 = vpop.permute.xlu0 %1579
    %1581 = vrot.lane.b32.xlu0 %v45, 96
    %v1582 = vpop.permute.xlu0 %1581
    %1583 = vrot.lane.b32.xlu0 %v46, 96
    %v1584 = vpop.permute.xlu0 %1583
    %1585 = vrot.lane.b32.xlu0 %v48, 96
    %v1586 = vpop.permute.xlu0 %1585
    %1587 = vrot.lane.b32.xlu0 %v49, 96
    %v1588 = vpop.permute.xlu0 %1587
    %1589 = vrot.lane.b32.xlu0 %v51, 96
    %v1590 = vpop.permute.xlu0 %1589
    %1591 = vrot.lane.b32.xlu0 %v52, 96
    %v1592 = vpop.permute.xlu0 %1591
    %1593 = vrot.lane.b32.xlu0 %v54, 96
    %v1594 = vpop.permute.xlu0 %1593
    %1595 = vrot.lane.b32.xlu0 %v55, 96
    %v1596 = vpop.permute.xlu0 %1595
    %1597 = vrot.lane.b32.xlu0 %v57, 96
    %v1598 = vpop.permute.xlu0 %1597
    %1599 = vrot.lane.b32.xlu0 %v58, 96
    %v1600 = vpop.permute.xlu0 %1599
    %1601 = vrot.lane.b32.xlu0 %v60, 96
    %v1602 = vpop.permute.xlu0 %1601
    %1603 = vrot.lane.b32.xlu0 %v61, 96
    %v1604 = vpop.permute.xlu0 %1603
    %1605 = vrot.lane.b32.xlu0 %v63, 96
    %v1606 = vpop.permute.xlu0 %1605
    %1607 = vrot.lane.b32.xlu0 %v64, 96
    %v1608 = vpop.permute.xlu0 %1607
    %1609 = vrot.lane.b32.xlu0 %v66, 96
    %v1610 = vpop.permute.xlu0 %1609
    %1611 = vrot.lane.b32.xlu0 %v67, 96
    %v1612 = vpop.permute.xlu0 %1611
    %1613 = vrot.lane.b32.xlu0 %v69, 96
    %v1614 = vpop.permute.xlu0 %1613
    %1615 = vrot.lane.b32.xlu0 %v70, 96
    %v1616 = vpop.permute.xlu0 %1615
    %1617 = vrot.lane.b32.xlu0 %v72, 96
    %v1618 = vpop.permute.xlu0 %1617
    %1619 = vrot.lane.b32.xlu0 %v73, 96
    %v1620 = vpop.permute.xlu0 %1619
    %1621 = vrot.lane.b32.xlu0 %v75, 96
    %v1622 = vpop.permute.xlu0 %1621
    %1623 = vrot.lane.b32.xlu0 %v76, 96
    %v1624 = vpop.permute.xlu0 %1623
    %1625 = vrot.lane.b32.xlu0 %v78, 96
    %v1626 = vpop.permute.xlu0 %1625
    %1627 = vrot.lane.b32.xlu0 %v79, 96
    %v1628 = vpop.permute.xlu0 %1627
    %1629 = vrot.lane.b32.xlu0 %v87, 96
    %v1630 = vpop.permute.xlu0 %1629
    %1631 = vrot.lane.b32.xlu0 %v88, 96
    %v1632 = vpop.permute.xlu0 %1631
    %1633 = vrot.lane.b32.xlu0 %v90, 96
    %v1634 = vpop.permute.xlu0 %1633
    %1635 = vrot.lane.b32.xlu0 %v91, 96
    %v1636 = vpop.permute.xlu0 %1635
    %1637 = vrot.lane.b32.xlu0 %v93, 96
    %v1638 = vpop.permute.xlu0 %1637
    %1639 = vrot.lane.b32.xlu0 %v94, 96
    %v1640 = vpop.permute.xlu0 %1639
    %1641 = vrot.lane.b32.xlu0 %v96, 96
    %v1642 = vpop.permute.xlu0 %1641
    %1643 = vrot.lane.b32.xlu0 %v97, 96
    %v1644 = vpop.permute.xlu0 %1643
    %1645 = vrot.lane.b32.xlu0 %v99, 96
    %v1646 = vpop.permute.xlu0 %1645
    %1647 = vrot.lane.b32.xlu0 %v100, 96
    %v1648 = vpop.permute.xlu0 %1647
    %1649 = vrot.lane.b32.xlu0 %v102, 96
    %v1650 = vpop.permute.xlu0 %1649
    %1651 = vrot.lane.b32.xlu0 %v103, 96
    %v1652 = vpop.permute.xlu0 %1651
    %1653 = vrot.lane.b32.xlu0 %v105, 96
    %v1654 = vpop.permute.xlu0 %1653
    %1655 = vrot.lane.b32.xlu0 %v106, 96
    %v1656 = vpop.permute.xlu0 %1655
    %1657 = vrot.lane.b32.xlu0 %v108, 96
    %v1658 = vpop.permute.xlu0 %1657
    %1659 = vrot.lane.b32.xlu0 %v109, 96
    %v1660 = vpop.permute.xlu0 %1659
    %1661 = vrot.lane.b32.xlu0 %v111, 96
    %v1662 = vpop.permute.xlu0 %1661
    %1663 = vrot.lane.b32.xlu0 %v112, 96
    %v1664 = vpop.permute.xlu0 %1663
    %1665 = vrot.lane.b32.xlu0 %v114, 96
    %v1666 = vpop.permute.xlu0 %1665
    %1667 = vrot.lane.b32.xlu0 %v115, 96
    %v1668 = vpop.permute.xlu0 %1667
    %1669 = vrot.lane.b32.xlu0 %v117, 96
    %v1670 = vpop.permute.xlu0 %1669
    %1671 = vrot.lane.b32.xlu0 %v118, 96
    %v1672 = vpop.permute.xlu0 %1671
    %1673 = vrot.lane.b32.xlu0 %v120, 96
    %v1674 = vpop.permute.xlu0 %1673
    %1675 = vrot.lane.b32.xlu0 %v121, 96
    %v1676 = vpop.permute.xlu0 %1675
    %1677 = vrot.lane.b32.xlu0 %v123, 96
    %v1678 = vpop.permute.xlu0 %1677
    %1679 = vrot.lane.b32.xlu0 %v124, 96
    %v1680 = vpop.permute.xlu0 %1679
    %1681 = vrot.lane.b32.xlu0 %v126, 96
    %v1682 = vpop.permute.xlu0 %1681
    %1683 = vrot.lane.b32.xlu0 %v127, 96
    %v1684 = vpop.permute.xlu0 %1683
    %1685 = vrot.lane.b32.xlu0 %v129, 96
    %v1686 = vpop.permute.xlu0 %1685
    %1687 = vrot.lane.b32.xlu0 %v130, 96
    %v1688 = vpop.permute.xlu0 %1687
    %1689 = vrot.lane.b32.xlu0 %v132, 96
    %v1690 = vpop.permute.xlu0 %1689
    %1691 = vrot.lane.b32.xlu0 %v133, 96
    %v1692 = vpop.permute.xlu0 %1691
    %1757 = vrot.lane.b32.xlu0 %v244, 112
    %v1758 = vpop.permute.xlu0 %1757
    %1759 = vrot.lane.b32.xlu0 %v246, 112
    %v1760 = vpop.permute.xlu0 %1759
    %1761 = vrot.lane.b32.xlu0 %v249, 112
    %v1762 = vpop.permute.xlu0 %1761
    %1763 = vrot.lane.b32.xlu0 %v251, 112
    %v1764 = vpop.permute.xlu0 %1763
    %1765 = vrot.lane.b32.xlu0 %v254, 112
    %v1766 = vpop.permute.xlu0 %1765
    %1767 = vrot.lane.b32.xlu0 %v256, 112
    %v1768 = vpop.permute.xlu0 %1767
    %1769 = vrot.lane.b32.xlu0 %v259, 112
    %v1770 = vpop.permute.xlu0 %1769
    %1771 = vrot.lane.b32.xlu0 %v261, 112
    %v1772 = vpop.permute.xlu0 %1771
    %1773 = vrot.lane.b32.xlu0 %v264, 112
    %v1774 = vpop.permute.xlu0 %1773
    %1775 = vrot.lane.b32.xlu0 %v266, 112
    %v1776 = vpop.permute.xlu0 %1775
    %1777 = vrot.lane.b32.xlu0 %v269, 112
    %v1778 = vpop.permute.xlu0 %1777
    %1779 = vrot.lane.b32.xlu0 %v271, 112
    %v1780 = vpop.permute.xlu0 %1779
    %1781 = vrot.lane.b32.xlu0 %v274, 112
    %v1782 = vpop.permute.xlu0 %1781
    %1783 = vrot.lane.b32.xlu0 %v276, 112
    %v1784 = vpop.permute.xlu0 %1783
    %1785 = vrot.lane.b32.xlu0 %v279, 112
    %v1786 = vpop.permute.xlu0 %1785
    %1787 = vrot.lane.b32.xlu0 %v281, 112
    %v1788 = vpop.permute.xlu0 %1787
    %1789 = vrot.lane.b32.xlu0 %v284, 112
    %v1790 = vpop.permute.xlu0 %1789
    %1791 = vrot.lane.b32.xlu0 %v286, 112
    %v1792 = vpop.permute.xlu0 %1791
    %1793 = vrot.lane.b32.xlu0 %v289, 112
    %v1794 = vpop.permute.xlu0 %1793
    %1795 = vrot.lane.b32.xlu0 %v291, 112
    %v1796 = vpop.permute.xlu0 %1795
    %1797 = vrot.lane.b32.xlu0 %v294, 112
    %v1798 = vpop.permute.xlu0 %1797
    %1799 = vrot.lane.b32.xlu0 %v296, 112
    %v1800 = vpop.permute.xlu0 %1799
    %1801 = vrot.lane.b32.xlu0 %v299, 112
    %v1802 = vpop.permute.xlu0 %1801
    %1803 = vrot.lane.b32.xlu0 %v301, 112
    %v1804 = vpop.permute.xlu0 %1803
    %1805 = vrot.lane.b32.xlu0 %v304, 112
    %v1806 = vpop.permute.xlu0 %1805
    %1807 = vrot.lane.b32.xlu0 %v306, 112
    %v1808 = vpop.permute.xlu0 %1807
    %1809 = vrot.lane.b32.xlu0 %v309, 112
    %v1810 = vpop.permute.xlu0 %1809
    %1811 = vrot.lane.b32.xlu0 %v311, 112
    %v1812 = vpop.permute.xlu0 %1811
    %1813 = vrot.lane.b32.xlu0 %v561, 112
    %v1814 = vpop.permute.xlu0 %1813
    %1815 = vrot.lane.b32.xlu0 %v563, 112
    %v1816 = vpop.permute.xlu0 %1815
    %1817 = vrot.lane.b32.xlu0 %v587, 112
    %v1818 = vpop.permute.xlu0 %1817
    %1819 = vrot.lane.b32.xlu0 %v589, 112
    %v1820 = vpop.permute.xlu0 %1819
    %1821 = vrot.lane.b32.xlu0 %v324, 112
    %v1822 = vpop.permute.xlu0 %1821
    %1823 = vrot.lane.b32.xlu0 %v326, 112
    %v1824 = vpop.permute.xlu0 %1823
    %1825 = vrot.lane.b32.xlu0 %v329, 112
    %v1826 = vpop.permute.xlu0 %1825
    %1827 = vrot.lane.b32.xlu0 %v331, 112
    %v1828 = vpop.permute.xlu0 %1827
    %1829 = vrot.lane.b32.xlu0 %v334, 112
    %v1830 = vpop.permute.xlu0 %1829
    %1831 = vrot.lane.b32.xlu0 %v336, 112
    %v1832 = vpop.permute.xlu0 %1831
    %1833 = vrot.lane.b32.xlu0 %v339, 112
    %v1834 = vpop.permute.xlu0 %1833
    %1835 = vrot.lane.b32.xlu0 %v341, 112
    %v1836 = vpop.permute.xlu0 %1835
    %1837 = vrot.lane.b32.xlu0 %v344, 112
    %v1838 = vpop.permute.xlu0 %1837
    %1839 = vrot.lane.b32.xlu0 %v346, 112
    %v1840 = vpop.permute.xlu0 %1839
    %1841 = vrot.lane.b32.xlu0 %v349, 112
    %v1842 = vpop.permute.xlu0 %1841
    %1843 = vrot.lane.b32.xlu0 %v351, 112
    %v1844 = vpop.permute.xlu0 %1843
    %1845 = vrot.lane.b32.xlu0 %v354, 112
    %v1846 = vpop.permute.xlu0 %1845
    %1847 = vrot.lane.b32.xlu0 %v356, 112
    %v1848 = vpop.permute.xlu0 %1847
    %1849 = vrot.lane.b32.xlu0 %v359, 112
    %v1850 = vpop.permute.xlu0 %1849
    %1851 = vrot.lane.b32.xlu0 %v361, 112
    %v1852 = vpop.permute.xlu0 %1851
    %1853 = vrot.lane.b32.xlu0 %v364, 112
    %v1854 = vpop.permute.xlu0 %1853
    %1855 = vrot.lane.b32.xlu0 %v366, 112
    %v1856 = vpop.permute.xlu0 %1855
    %1857 = vrot.lane.b32.xlu0 %v369, 112
    %v1858 = vpop.permute.xlu0 %1857
    %1859 = vrot.lane.b32.xlu0 %v371, 112
    %v1860 = vpop.permute.xlu0 %1859
    %1861 = vrot.lane.b32.xlu0 %v374, 112
    %v1862 = vpop.permute.xlu0 %1861
    %1863 = vrot.lane.b32.xlu0 %v376, 112
    %v1864 = vpop.permute.xlu0 %1863
    %1865 = vrot.lane.b32.xlu0 %v379, 112
    %v1866 = vpop.permute.xlu0 %1865
    %1867 = vrot.lane.b32.xlu0 %v381, 112
    %v1868 = vpop.permute.xlu0 %1867
    %1869 = vrot.lane.b32.xlu0 %v384, 112
    %v1870 = vpop.permute.xlu0 %1869
    %1871 = vrot.lane.b32.xlu0 %v386, 112
    %v1872 = vpop.permute.xlu0 %1871
    %1873 = vrot.lane.b32.xlu0 %v389, 112
    %v1874 = vpop.permute.xlu0 %1873
    %1875 = vrot.lane.b32.xlu0 %v391, 112
    %v1876 = vpop.permute.xlu0 %1875
    %1877 = vrot.lane.b32.xlu0 %v566, 112
    %v1878 = vpop.permute.xlu0 %1877
    %1879 = vrot.lane.b32.xlu0 %v568, 112
    %v1880 = vpop.permute.xlu0 %1879
    %1881 = vrot.lane.b32.xlu0 %v592, 112
    %v1882 = vpop.permute.xlu0 %1881
    %1883 = vrot.lane.b32.xlu0 %v594, 112
    %v1884 = vpop.permute.xlu0 %1883
    %vm1949 = vcmask 130048
    %v1950 = vsel %vm1949, %v27, %v606
    %v1951 = vsel %vm1949, %v28, %v608
    %v1952 = vsel %vm1949, %v30, %v610
    %v1953 = vsel %vm1949, %v31, %v612
    %v1954 = vsel %vm1949, %v33, %v614
    %v1955 = vsel %vm1949, %v34, %v616
    %v1956 = vsel %vm1949, %v36, %v618
    %v1957 = vsel %vm1949, %v37, %v620
    %v1958 = vsel %vm1949, %v39, %v622
    %v1959 = vsel %vm1949, %v40, %v624
    %v1960 = vsel %vm1949, %v42, %v626
    %v1961 = vsel %vm1949, %v43, %v628
    %v1962 = vsel %vm1949, %v45, %v630
    %v1963 = vsel %vm1949, %v46, %v632
    %v1964 = vsel %vm1949, %v48, %v634
    %v1965 = vsel %vm1949, %v49, %v636
    %v1966 = vsel %vm1949, %v51, %v638
    %v1967 = vsel %vm1949, %v52, %v640
    %v1968 = vsel %vm1949, %v54, %v642
    %v1969 = vsel %vm1949, %v55, %v644
    %v1970 = vsel %vm1949, %v57, %v646
    %v1971 = vsel %vm1949, %v58, %v648
    %v1972 = vsel %vm1949, %v60, %v650
    %v1973 = vsel %vm1949, %v61, %v652
    %v1974 = vsel %vm1949, %v63, %v654
    %v1975 = vsel %vm1949, %v64, %v656
    %v1976 = vsel %vm1949, %v66, %v658
    %v1977 = vsel %vm1949, %v67, %v660
    %v1978 = vsel %vm1949, %v69, %v662
    %v1979 = vsel %vm1949, %v70, %v664
    %v1980 = vsel %vm1949, %v72, %v666
    %v1981 = vsel %vm1949, %v73, %v668
    %v1982 = vsel %vm1949, %v81, %v670
    %v1983 = vsel %vm1949, %v82, %v672
    %v1984 = vsel %vm1949, %v84, %v674
    %v1985 = vsel %vm1949, %v85, %v676
    %v1986 = vsel %vm1949, %v87, %v678
    %v1987 = vsel %vm1949, %v88, %v680
    %v1988 = vsel %vm1949, %v90, %v682
    %v1989 = vsel %vm1949, %v91, %v684
    %v1990 = vsel %vm1949, %v93, %v686
    %v1991 = vsel %vm1949, %v94, %v688
    %v1992 = vsel %vm1949, %v96, %v690
    %v1993 = vsel %vm1949, %v97, %v692
    %v1994 = vsel %vm1949, %v99, %v694
    %v1995 = vsel %vm1949, %v100, %v696
    %v1996 = vsel %vm1949, %v102, %v698
    %v1997 = vsel %vm1949, %v103, %v700
    %v1998 = vsel %vm1949, %v105, %v702
    %v1999 = vsel %vm1949, %v106, %v704
    %v2000 = vsel %vm1949, %v108, %v706
    %v2001 = vsel %vm1949, %v109, %v708
    %v2002 = vsel %vm1949, %v111, %v710
    %v2003 = vsel %vm1949, %v112, %v712
    %v2004 = vsel %vm1949, %v114, %v714
    %v2005 = vsel %vm1949, %v115, %v716
    %v2006 = vsel %vm1949, %v117, %v718
    %v2007 = vsel %vm1949, %v118, %v720
    %v2008 = vsel %vm1949, %v120, %v722
    %v2009 = vsel %vm1949, %v121, %v724
    %v2010 = vsel %vm1949, %v123, %v726
    %v2011 = vsel %vm1949, %v124, %v728
    %v2012 = vsel %vm1949, %v126, %v730
    %v2013 = vsel %vm1949, %v127, %v732
    %vm2014 = vcmask 261120
    %v2015 = vsel %vm2014, %v1950, %v798
    %v2016 = vsel %vm2014, %v1951, %v800
    %v2017 = vsel %vm2014, %v1952, %v802
    %v2018 = vsel %vm2014, %v1953, %v804
    %v2019 = vsel %vm2014, %v1954, %v806
    %v2020 = vsel %vm2014, %v1955, %v808
    %v2021 = vsel %vm2014, %v1956, %v810
    %v2022 = vsel %vm2014, %v1957, %v812
    %v2023 = vsel %vm2014, %v1958, %v814
    %v2024 = vsel %vm2014, %v1959, %v816
    %v2025 = vsel %vm2014, %v1960, %v818
    %v2026 = vsel %vm2014, %v1961, %v820
    %v2027 = vsel %vm2014, %v1962, %v822
    %v2028 = vsel %vm2014, %v1963, %v824
    %v2029 = vsel %vm2014, %v1964, %v826
    %v2030 = vsel %vm2014, %v1965, %v828
    %v2031 = vsel %vm2014, %v1966, %v830
    %v2032 = vsel %vm2014, %v1967, %v832
    %v2033 = vsel %vm2014, %v1968, %v834
    %v2034 = vsel %vm2014, %v1969, %v836
    %v2035 = vsel %vm2014, %v1970, %v838
    %v2036 = vsel %vm2014, %v1971, %v840
    %v2037 = vsel %vm2014, %v1972, %v842
    %v2038 = vsel %vm2014, %v1973, %v844
    %v2039 = vsel %vm2014, %v1974, %v846
    %v2040 = vsel %vm2014, %v1975, %v848
    %v2041 = vsel %vm2014, %v1976, %v850
    %v2042 = vsel %vm2014, %v1977, %v852
    %v2043 = vsel %vm2014, %v1978, %v854
    %v2044 = vsel %vm2014, %v1979, %v856
    %v2045 = vsel %vm2014, %v1980, %v858
    %v2046 = vsel %vm2014, %v1981, %v860
    %v2047 = vsel %vm2014, %v1982, %v862
    %v2048 = vsel %vm2014, %v1983, %v864
    %v2049 = vsel %vm2014, %v1984, %v866
    %v2050 = vsel %vm2014, %v1985, %v868
    %v2051 = vsel %vm2014, %v1986, %v870
    %v2052 = vsel %vm2014, %v1987, %v872
    %v2053 = vsel %vm2014, %v1988, %v874
    %v2054 = vsel %vm2014, %v1989, %v876
    %v2055 = vsel %vm2014, %v1990, %v878
    %v2056 = vsel %vm2014, %v1991, %v880
    %v2057 = vsel %vm2014, %v1992, %v882
    %v2058 = vsel %vm2014, %v1993, %v884
    %v2059 = vsel %vm2014, %v1994, %v886
    %v2060 = vsel %vm2014, %v1995, %v888
    %v2061 = vsel %vm2014, %v1996, %v890
    %v2062 = vsel %vm2014, %v1997, %v892
    %v2063 = vsel %vm2014, %v1998, %v894
    %v2064 = vsel %vm2014, %v1999, %v896
    %v2065 = vsel %vm2014, %v2000, %v898
    %v2066 = vsel %vm2014, %v2001, %v900
    %v2067 = vsel %vm2014, %v2002, %v902
    %v2068 = vsel %vm2014, %v2003, %v904
    %v2069 = vsel %vm2014, %v2004, %v906
    %v2070 = vsel %vm2014, %v2005, %v908
    %v2071 = vsel %vm2014, %v2006, %v910
    %v2072 = vsel %vm2014, %v2007, %v912
    %v2073 = vsel %vm2014, %v2008, %v914
    %v2074 = vsel %vm2014, %v2009, %v916
    %v2075 = vsel %vm2014, %v2010, %v918
    %v2076 = vsel %vm2014, %v2011, %v920
    %v2077 = vsel %vm2014, %v2012, %v922
    %v2078 = vsel %vm2014, %v2013, %v924
    %vm2079 = vcmask 392192
    %v2080 = vsel %vm2079, %v2015, %v990
    %v2081 = vsel %vm2079, %v2016, %v992
    %v2082 = vsel %vm2079, %v2017, %v994
    %v2083 = vsel %vm2079, %v2018, %v996
    %v2084 = vsel %vm2079, %v2019, %v998
    %v2085 = vsel %vm2079, %v2020, %v1000
    %v2086 = vsel %vm2079, %v2021, %v1002
    %v2087 = vsel %vm2079, %v2022, %v1004
    %v2088 = vsel %vm2079, %v2023, %v1006
    %v2089 = vsel %vm2079, %v2024, %v1008
    %v2090 = vsel %vm2079, %v2025, %v1010
    %v2091 = vsel %vm2079, %v2026, %v1012
    %v2092 = vsel %vm2079, %v2027, %v1014
    %v2093 = vsel %vm2079, %v2028, %v1016
    %v2094 = vsel %vm2079, %v2029, %v1018
    %v2095 = vsel %vm2079, %v2030, %v1020
    %v2096 = vsel %vm2079, %v2031, %v1022
    %v2097 = vsel %vm2079, %v2032, %v1024
    %v2098 = vsel %vm2079, %v2033, %v1026
    %v2099 = vsel %vm2079, %v2034, %v1028
    %v2100 = vsel %vm2079, %v2035, %v1030
    %v2101 = vsel %vm2079, %v2036, %v1032
    %v2102 = vsel %vm2079, %v2037, %v1034
    %v2103 = vsel %vm2079, %v2038, %v1036
    %v2104 = vsel %vm2079, %v2039, %v1038
    %v2105 = vsel %vm2079, %v2040, %v1040
    %v2106 = vsel %vm2079, %v2041, %v1042
    %v2107 = vsel %vm2079, %v2042, %v1044
    %v2108 = vsel %vm2079, %v2043, %v1046
    %v2109 = vsel %vm2079, %v2044, %v1048
    %v2110 = vsel %vm2079, %v2045, %v1050
    %v2111 = vsel %vm2079, %v2046, %v1052
    %v2112 = vsel %vm2079, %v2047, %v1054
    %v2113 = vsel %vm2079, %v2048, %v1056
    %v2114 = vsel %vm2079, %v2049, %v1058
    %v2115 = vsel %vm2079, %v2050, %v1060
    %v2116 = vsel %vm2079, %v2051, %v1062
    %v2117 = vsel %vm2079, %v2052, %v1064
    %v2118 = vsel %vm2079, %v2053, %v1066
    %v2119 = vsel %vm2079, %v2054, %v1068
    %v2120 = vsel %vm2079, %v2055, %v1070
    %v2121 = vsel %vm2079, %v2056, %v1072
    %v2122 = vsel %vm2079, %v2057, %v1074
    %v2123 = vsel %vm2079, %v2058, %v1076
    %v2124 = vsel %vm2079, %v2059, %v1078
    %v2125 = vsel %vm2079, %v2060, %v1080
    %v2126 = vsel %vm2079, %v2061, %v1082
    %v2127 = vsel %vm2079, %v2062, %v1084
    %v2128 = vsel %vm2079, %v2063, %v1086
    %v2129 = vsel %vm2079, %v2064, %v1088
    %v2130 = vsel %vm2079, %v2065, %v1090
    %v2131 = vsel %vm2079, %v2066, %v1092
    %v2132 = vsel %vm2079, %v2067, %v1094
    %v2133 = vsel %vm2079, %v2068, %v1096
    %v2134 = vsel %vm2079, %v2069, %v1098
    %v2135 = vsel %vm2079, %v2070, %v1100
    %v2136 = vsel %vm2079, %v2071, %v1102
    %v2137 = vsel %vm2079, %v2072, %v1104
    %v2138 = vsel %vm2079, %v2073, %v1106
    %v2139 = vsel %vm2079, %v2074, %v1108
    %v2140 = vsel %vm2079, %v2075, %v1110
    %v2141 = vsel %vm2079, %v2076, %v1112
    %v2142 = vsel %vm2079, %v2077, %v1114
    %v2143 = vsel %vm2079, %v2078, %v1116
    %vm2144 = vcmask 523264
    %v2145 = vsel %vm2144, %v2080, %v1182
    %v2146 = vsel %vm2144, %v2081, %v1184
    %v2147 = vsel %vm2144, %v2082, %v1186
    %v2148 = vsel %vm2144, %v2083, %v1188
    %v2149 = vsel %vm2144, %v2084, %v1190
    %v2150 = vsel %vm2144, %v2085, %v1192
    %v2151 = vsel %vm2144, %v2086, %v1194
    %v2152 = vsel %vm2144, %v2087, %v1196
    %v2153 = vsel %vm2144, %v2088, %v1198
    %v2154 = vsel %vm2144, %v2089, %v1200
    %v2155 = vsel %vm2144, %v2090, %v1202
    %v2156 = vsel %vm2144, %v2091, %v1204
    %v2157 = vsel %vm2144, %v2092, %v1206
    %v2158 = vsel %vm2144, %v2093, %v1208
    %v2159 = vsel %vm2144, %v2094, %v1210
    %v2160 = vsel %vm2144, %v2095, %v1212
    %v2161 = vsel %vm2144, %v2096, %v1214
    %v2162 = vsel %vm2144, %v2097, %v1216
    %v2163 = vsel %vm2144, %v2098, %v1218
    %v2164 = vsel %vm2144, %v2099, %v1220
    %v2165 = vsel %vm2144, %v2100, %v1222
    %v2166 = vsel %vm2144, %v2101, %v1224
    %v2167 = vsel %vm2144, %v2102, %v1226
    %v2168 = vsel %vm2144, %v2103, %v1228
    %v2169 = vsel %vm2144, %v2104, %v1230
    %v2170 = vsel %vm2144, %v2105, %v1232
    %v2171 = vsel %vm2144, %v2106, %v1234
    %v2172 = vsel %vm2144, %v2107, %v1236
    %v2173 = vsel %vm2144, %v2108, %v1238
    %v2174 = vsel %vm2144, %v2109, %v1240
    %v2175 = vsel %vm2144, %v2110, %v1242
    %v2176 = vsel %vm2144, %v2111, %v1244
    %v2177 = vsel %vm2144, %v2112, %v1246
    %v2178 = vsel %vm2144, %v2113, %v1248
    %v2179 = vsel %vm2144, %v2114, %v1250
    %v2180 = vsel %vm2144, %v2115, %v1252
    %v2181 = vsel %vm2144, %v2116, %v1254
    %v2182 = vsel %vm2144, %v2117, %v1256
    %v2183 = vsel %vm2144, %v2118, %v1258
    %v2184 = vsel %vm2144, %v2119, %v1260
    %v2185 = vsel %vm2144, %v2120, %v1262
    %v2186 = vsel %vm2144, %v2121, %v1264
    %v2187 = vsel %vm2144, %v2122, %v1266
    %v2188 = vsel %vm2144, %v2123, %v1268
    %v2189 = vsel %vm2144, %v2124, %v1270
    %v2190 = vsel %vm2144, %v2125, %v1272
    %v2191 = vsel %vm2144, %v2126, %v1274
    %v2192 = vsel %vm2144, %v2127, %v1276
    %v2193 = vsel %vm2144, %v2128, %v1278
    %v2194 = vsel %vm2144, %v2129, %v1280
    %v2195 = vsel %vm2144, %v2130, %v1282
    %v2196 = vsel %vm2144, %v2131, %v1284
    %v2197 = vsel %vm2144, %v2132, %v1286
    %v2198 = vsel %vm2144, %v2133, %v1288
    %v2199 = vsel %vm2144, %v2134, %v1290
    %v2200 = vsel %vm2144, %v2135, %v1292
    %v2201 = vsel %vm2144, %v2136, %v1294
    %v2202 = vsel %vm2144, %v2137, %v1296
    %v2203 = vsel %vm2144, %v2138, %v1298
    %v2204 = vsel %vm2144, %v2139, %v1300
    %v2205 = vsel %vm2144, %v2140, %v1302
    %v2206 = vsel %vm2144, %v2141, %v1304
    %v2207 = vsel %vm2144, %v2142, %v1306
    %v2208 = vsel %vm2144, %v2143, %v1308
    %vm2209 = vcmask 654336
    %v2210 = vsel %vm2209, %v2145, %v1374
    %v2211 = vsel %vm2209, %v2146, %v1376
    %v2212 = vsel %vm2209, %v2147, %v1378
    %v2213 = vsel %vm2209, %v2148, %v1380
    %v2214 = vsel %vm2209, %v2149, %v1382
    %v2215 = vsel %vm2209, %v2150, %v1384
    %v2216 = vsel %vm2209, %v2151, %v1386
    %v2217 = vsel %vm2209, %v2152, %v1388
    %v2218 = vsel %vm2209, %v2153, %v1390
    %v2219 = vsel %vm2209, %v2154, %v1392
    %v2220 = vsel %vm2209, %v2155, %v1394
    %v2221 = vsel %vm2209, %v2156, %v1396
    %v2222 = vsel %vm2209, %v2157, %v1398
    %v2223 = vsel %vm2209, %v2158, %v1400
    %v2224 = vsel %vm2209, %v2159, %v1402
    %v2225 = vsel %vm2209, %v2160, %v1404
    %v2226 = vsel %vm2209, %v2161, %v1406
    %v2227 = vsel %vm2209, %v2162, %v1408
    %v2228 = vsel %vm2209, %v2163, %v1410
    %v2229 = vsel %vm2209, %v2164, %v1412
    %v2230 = vsel %vm2209, %v2165, %v1414
    %v2231 = vsel %vm2209, %v2166, %v1416
    %v2232 = vsel %vm2209, %v2167, %v1418
    %v2233 = vsel %vm2209, %v2168, %v1420
    %v2234 = vsel %vm2209, %v2169, %v1422
    %v2235 = vsel %vm2209, %v2170, %v1424
    %v2236 = vsel %vm2209, %v2171, %v1426
    %v2237 = vsel %vm2209, %v2172, %v1428
    %v2238 = vsel %vm2209, %v2173, %v1430
    %v2239 = vsel %vm2209, %v2174, %v1432
    %v2240 = vsel %vm2209, %v2175, %v1434
    %v2241 = vsel %vm2209, %v2176, %v1436
    %v2242 = vsel %vm2209, %v2177, %v1438
    %v2243 = vsel %vm2209, %v2178, %v1440
    %v2244 = vsel %vm2209, %v2179, %v1442
    %v2245 = vsel %vm2209, %v2180, %v1444
    %v2246 = vsel %vm2209, %v2181, %v1446
    %v2247 = vsel %vm2209, %v2182, %v1448
    %v2248 = vsel %vm2209, %v2183, %v1450
    %v2249 = vsel %vm2209, %v2184, %v1452
    %v2250 = vsel %vm2209, %v2185, %v1454
    %v2251 = vsel %vm2209, %v2186, %v1456
    %v2252 = vsel %vm2209, %v2187, %v1458
    %v2253 = vsel %vm2209, %v2188, %v1460
    %v2254 = vsel %vm2209, %v2189, %v1462
    %v2255 = vsel %vm2209, %v2190, %v1464
    %v2256 = vsel %vm2209, %v2191, %v1466
    %v2257 = vsel %vm2209, %v2192, %v1468
    %v2258 = vsel %vm2209, %v2193, %v1470
    %v2259 = vsel %vm2209, %v2194, %v1472
    %v2260 = vsel %vm2209, %v2195, %v1474
    %v2261 = vsel %vm2209, %v2196, %v1476
    %v2262 = vsel %vm2209, %v2197, %v1478
    %v2263 = vsel %vm2209, %v2198, %v1480
    %v2264 = vsel %vm2209, %v2199, %v1482
    %v2265 = vsel %vm2209, %v2200, %v1484
    %v2266 = vsel %vm2209, %v2201, %v1486
    %v2267 = vsel %vm2209, %v2202, %v1488
    %v2268 = vsel %vm2209, %v2203, %v1490
    %v2269 = vsel %vm2209, %v2204, %v1492
    %v2270 = vsel %vm2209, %v2205, %v1494
    %v2271 = vsel %vm2209, %v2206, %v1496
    %v2272 = vsel %vm2209, %v2207, %v1498
    %v2273 = vsel %vm2209, %v2208, %v1500
    %vm2274 = vcmask 785408
    %v2275 = vsel %vm2274, %v2210, %v1566
    %v2276 = vsel %vm2274, %v2211, %v1568
    %v2277 = vsel %vm2274, %v2212, %v1570
    %v2278 = vsel %vm2274, %v2213, %v1572
    %v2279 = vsel %vm2274, %v2214, %v1574
    %v2280 = vsel %vm2274, %v2215, %v1576
    %v2281 = vsel %vm2274, %v2216, %v1578
    %v2282 = vsel %vm2274, %v2217, %v1580
    %v2283 = vsel %vm2274, %v2218, %v1582
    %v2284 = vsel %vm2274, %v2219, %v1584
    %v2285 = vsel %vm2274, %v2220, %v1586
    %v2286 = vsel %vm2274, %v2221, %v1588
    %v2287 = vsel %vm2274, %v2222, %v1590
    %v2288 = vsel %vm2274, %v2223, %v1592
    %v2289 = vsel %vm2274, %v2224, %v1594
    %v2290 = vsel %vm2274, %v2225, %v1596
    %v2291 = vsel %vm2274, %v2226, %v1598
    %v2292 = vsel %vm2274, %v2227, %v1600
    %v2293 = vsel %vm2274, %v2228, %v1602
    %v2294 = vsel %vm2274, %v2229, %v1604
    %v2295 = vsel %vm2274, %v2230, %v1606
    %v2296 = vsel %vm2274, %v2231, %v1608
    %v2297 = vsel %vm2274, %v2232, %v1610
    %v2298 = vsel %vm2274, %v2233, %v1612
    %v2299 = vsel %vm2274, %v2234, %v1614
    %v2300 = vsel %vm2274, %v2235, %v1616
    %v2301 = vsel %vm2274, %v2236, %v1618
    %v2302 = vsel %vm2274, %v2237, %v1620
    %v2303 = vsel %vm2274, %v2238, %v1622
    %v2304 = vsel %vm2274, %v2239, %v1624
    %v2305 = vsel %vm2274, %v2240, %v1626
    %v2306 = vsel %vm2274, %v2241, %v1628
    %v2307 = vsel %vm2274, %v2242, %v1630
    %v2308 = vsel %vm2274, %v2243, %v1632
    %v2309 = vsel %vm2274, %v2244, %v1634
    %v2310 = vsel %vm2274, %v2245, %v1636
    %v2311 = vsel %vm2274, %v2246, %v1638
    %v2312 = vsel %vm2274, %v2247, %v1640
    %v2313 = vsel %vm2274, %v2248, %v1642
    %v2314 = vsel %vm2274, %v2249, %v1644
    %v2315 = vsel %vm2274, %v2250, %v1646
    %v2316 = vsel %vm2274, %v2251, %v1648
    %v2317 = vsel %vm2274, %v2252, %v1650
    %v2318 = vsel %vm2274, %v2253, %v1652
    %v2319 = vsel %vm2274, %v2254, %v1654
    %v2320 = vsel %vm2274, %v2255, %v1656
    %v2321 = vsel %vm2274, %v2256, %v1658
    %v2322 = vsel %vm2274, %v2257, %v1660
    %v2323 = vsel %vm2274, %v2258, %v1662
    %v2324 = vsel %vm2274, %v2259, %v1664
    %v2325 = vsel %vm2274, %v2260, %v1666
    %v2326 = vsel %vm2274, %v2261, %v1668
    %v2327 = vsel %vm2274, %v2262, %v1670
    %v2328 = vsel %vm2274, %v2263, %v1672
    %v2329 = vsel %vm2274, %v2264, %v1674
    %v2330 = vsel %vm2274, %v2265, %v1676
    %v2331 = vsel %vm2274, %v2266, %v1678
    %v2332 = vsel %vm2274, %v2267, %v1680
    %v2333 = vsel %vm2274, %v2268, %v1682
    %v2334 = vsel %vm2274, %v2269, %v1684
    %v2335 = vsel %vm2274, %v2270, %v1686
    %v2336 = vsel %vm2274, %v2271, %v1688
    %v2337 = vsel %vm2274, %v2272, %v1690
    %v2338 = vsel %vm2274, %v2273, %v1692
    %vm2339 = vcmask 916480
    %v2340 = vsel %vm2339, %v2275, %v1758
    %v2341 = vsel %vm2339, %v2276, %v1760
    %v2342 = vsel %vm2339, %v2277, %v1762
    %v2343 = vsel %vm2339, %v2278, %v1764
    %v2344 = vsel %vm2339, %v2279, %v1766
    %v2345 = vsel %vm2339, %v2280, %v1768
    %v2346 = vsel %vm2339, %v2281, %v1770
    %v2347 = vsel %vm2339, %v2282, %v1772
    %v2348 = vsel %vm2339, %v2283, %v1774
    %v2349 = vsel %vm2339, %v2284, %v1776
    %v2350 = vsel %vm2339, %v2285, %v1778
    %v2351 = vsel %vm2339, %v2286, %v1780
    %v2352 = vsel %vm2339, %v2287, %v1782
    %v2353 = vsel %vm2339, %v2288, %v1784
    %v2354 = vsel %vm2339, %v2289, %v1786
    %v2355 = vsel %vm2339, %v2290, %v1788
    %v2356 = vsel %vm2339, %v2291, %v1790
    %v2357 = vsel %vm2339, %v2292, %v1792
    %v2358 = vsel %vm2339, %v2293, %v1794
    %v2359 = vsel %vm2339, %v2294, %v1796
    %v2360 = vsel %vm2339, %v2295, %v1798
    %v2361 = vsel %vm2339, %v2296, %v1800
    %v2362 = vsel %vm2339, %v2297, %v1802
    %v2363 = vsel %vm2339, %v2298, %v1804
    %v2364 = vsel %vm2339, %v2299, %v1806
    %v2365 = vsel %vm2339, %v2300, %v1808
    %v2366 = vsel %vm2339, %v2301, %v1810
    %v2367 = vsel %vm2339, %v2302, %v1812
    %v2368 = vsel %vm2339, %v2303, %v1814
    %v2369 = vsel %vm2339, %v2304, %v1816
    %v2370 = vsel %vm2339, %v2305, %v1818
    %v2371 = vsel %vm2339, %v2306, %v1820
    %v2372 = vsel %vm2339, %v2307, %v1822
    %v2373 = vsel %vm2339, %v2308, %v1824
    %v2374 = vsel %vm2339, %v2309, %v1826
    %v2375 = vsel %vm2339, %v2310, %v1828
    %v2376 = vsel %vm2339, %v2311, %v1830
    %v2377 = vsel %vm2339, %v2312, %v1832
    %v2378 = vsel %vm2339, %v2313, %v1834
    %v2379 = vsel %vm2339, %v2314, %v1836
    %v2380 = vsel %vm2339, %v2315, %v1838
    %v2381 = vsel %vm2339, %v2316, %v1840
    %v2382 = vsel %vm2339, %v2317, %v1842
    %v2383 = vsel %vm2339, %v2318, %v1844
    %v2384 = vsel %vm2339, %v2319, %v1846
    %v2385 = vsel %vm2339, %v2320, %v1848
    %v2386 = vsel %vm2339, %v2321, %v1850
    %v2387 = vsel %vm2339, %v2322, %v1852
    %v2388 = vsel %vm2339, %v2323, %v1854
    %v2389 = vsel %vm2339, %v2324, %v1856
    %v2390 = vsel %vm2339, %v2325, %v1858
    %v2391 = vsel %vm2339, %v2326, %v1860
    %v2392 = vsel %vm2339, %v2327, %v1862
    %v2393 = vsel %vm2339, %v2328, %v1864
    %v2394 = vsel %vm2339, %v2329, %v1866
    %v2395 = vsel %vm2339, %v2330, %v1868
    %v2396 = vsel %vm2339, %v2331, %v1870
    %v2397 = vsel %vm2339, %v2332, %v1872
    %v2398 = vsel %vm2339, %v2333, %v1874
    %v2399 = vsel %vm2339, %v2334, %v1876
    %v2400 = vsel %vm2339, %v2335, %v1878
    %v2401 = vsel %vm2339, %v2336, %v1880
    %v2402 = vsel %vm2339, %v2337, %v1882
    %v2403 = vsel %vm2339, %v2338, %v1884
    %v2404 = vld [vmem:[%s3] sm:$0xff]
    %v2405 = vld [vmem:[%s3 + $0x8] sm:$0xff]
    %v2406 = vld [vmem:[%s3 + $0x10] sm:$0xff]
    %v2407 = vld [vmem:[%s3 + $0x18] sm:$0xff]
    %v2408 = vld [vmem:[%s3 + $0x20] sm:$0xff]
    %v2409 = vld [vmem:[%s3 + $0x28] sm:$0xff]
    %v2410 = vld [vmem:[%s3 + $0x30] sm:$0xff]
    %v2411 = vld [vmem:[%s3 + $0x38] sm:$0xff]
    %v2412 = vld [vmem:[%s3 + $0x40] sm:$0xff]
    %v2413 = vld [vmem:[%s3 + $0x48] sm:$0xff]
    %v2414 = vld [vmem:[%s3 + $0x50] sm:$0xff]
    %v2415 = vld [vmem:[%s3 + $0x58] sm:$0xff]
    %v2416 = vld [vmem:[%s3 + $0x60] sm:$0xff]
    %v2417 = vld [vmem:[%s3 + $0x68] sm:$0xff]
    %v2418 = vld [vmem:[%s3 + $0x70] sm:$0xff]
    %v2419 = vld [vmem:[%s3 + $0x78] sm:$0xff]
    %v2420 = vld [vmem:[%s3 + $0x80] sm:$0xff]
    %v2421 = vld [vmem:[%s3 + $0x88] sm:$0xff]
    %v2422 = vld [vmem:[%s4] sm:$0x1]
    %v2424 = vlaneseq
    %v2425 = vshrl.u32 %v2424, 7
    %v2426 = vsub.s32 0, %v2425
    %v2427 = vrot.slane %v2422, %v2426
    %v2429 = vsel %vm1949, %v405, 0
    %v2431 = vsel %vm1949, %v407, 0
    %v2433 = vsel %vm1949, %v410, 0
    %v2435 = vsel %vm1949, %v412, 0
    %v2437 = vsel %vm1949, %v415, 0
    %v2439 = vsel %vm1949, %v417, 0
    %v2441 = vsel %vm1949, %v420, 0
    %v2443 = vsel %vm1949, %v422, 0
    %v2445 = vsel %vm1949, %v425, 0
    %v2447 = vsel %vm1949, %v427, 0
    %v2449 = vsel %vm1949, %v430, 0
    %v2451 = vsel %vm1949, %v432, 0
    %v2453 = vsel %vm1949, %v435, 0
    %v2455 = vsel %vm1949, %v437, 0
    %v2457 = vsel %vm1949, %v440, 0
    %v2459 = vsel %vm1949, %v442, 0
    %v2461 = vsel %vm1949, %v445, 0
    %v2463 = vsel %vm1949, %v447, 0
    %v2465 = vsel %vm1949, %v450, 0
    %v2467 = vsel %vm1949, %v452, 0
    %v2469 = vsel %vm1949, %v455, 0
    %v2471 = vsel %vm1949, %v457, 0
    %v2473 = vsel %vm1949, %v460, 0
    %v2475 = vsel %vm1949, %v462, 0
    %v2477 = vsel %vm1949, %v465, 0
    %v2479 = vsel %vm1949, %v467, 0
    %v2481 = vsel %vm1949, %v470, 0
    %v2483 = vsel %vm1949, %v472, 0
    %v2485 = vsel %vm1949, %v571, 0
    %v2487 = vsel %vm1949, %v573, 0
    %v2489 = vsel %vm1949, %v597, 0
    %v2491 = vsel %vm1949, %v599, 0
    %v2493 = vsel %vm1949, %v485, 0
    %v2495 = vsel %vm1949, %v487, 0
    %v2497 = vsel %vm1949, %v490, 0
    %v2499 = vsel %vm1949, %v492, 0
    %v2501 = vsel %vm1949, %v495, 0
    %v2503 = vsel %vm1949, %v497, 0
    %v2505 = vsel %vm1949, %v500, 0
    %v2507 = vsel %vm1949, %v502, 0
    %v2509 = vsel %vm1949, %v505, 0
    %v2511 = vsel %vm1949, %v507, 0
    %v2513 = vsel %vm1949, %v510, 0
    %v2515 = vsel %vm1949, %v512, 0
    %v2517 = vsel %vm1949, %v515, 0
    %v2519 = vsel %vm1949, %v517, 0
    %v2521 = vsel %vm1949, %v520, 0
    %v2523 = vsel %vm1949, %v522, 0
    %v2525 = vsel %vm1949, %v525, 0
    %v2527 = vsel %vm1949, %v527, 0
    %v2529 = vsel %vm1949, %v530, 0
    %v2531 = vsel %vm1949, %v532, 0
    %v2533 = vsel %vm1949, %v535, 0
    %v2535 = vsel %vm1949, %v537, 0
    %v2537 = vsel %vm1949, %v540, 0
    %v2539 = vsel %vm1949, %v542, 0
    %v2541 = vsel %vm1949, %v545, 0
    %v2543 = vsel %vm1949, %v547, 0
    %v2545 = vsel %vm1949, %v550, 0
    %v2547 = vsel %vm1949, %v552, 0
    %v2549 = vsel %vm1949, %v576, 0
    %v2551 = vsel %vm1949, %v578, 0
    %v2553 = vsel %vm1949, %v602, 0
    %v2555 = vsel %vm1949, %v604, 0
    %2557 = vmatprep.subr.mxu0 0.0
    %2558 = vmatpush1.msra.mxu0 %v2404
    %2559 = vmatprep.subr.mxu0 0.0
    %2560 = vmatpush1.msra.mxu0 %v2405
    %2561 = vmatprep.subr.mxu0 0.0
    %2562 = vmatpush1.msra.mxu0 %v2406
    %2563 = vmatprep.subr.mxu0 0.0
    %2564 = vmatpush1.msra.mxu0 %v2407
    %2565 = vmatprep.subr.mxu0 0.0
    %2566 = vmatpush1.msra.mxu0 %v2408
    %2567 = vmatprep.subr.mxu0 0.0
    %2568 = vmatpush1.msra.mxu0 %v2409
    %2569 = vmatprep.subr.mxu0 0.0
    %2570 = vmatpush1.msra.mxu0 %v2410
    %2571 = vmatprep.subr.mxu0 0.0
    %2572 = vmatpush1.msra.mxu0 %v2411
    %2573 = vmatprep.subr.mxu0 0.0
    %2574 = vmatpush1.msra.mxu0 %v2412
    %2575 = vmatprep.subr.mxu0 0.0
    %2576 = vmatpush1.msra.mxu0 %v2413
    %2577 = vmatprep.subr.mxu0 0.0
    %2578 = vmatpush1.msra.mxu0 %v2414
    %2579 = vmatprep.subr.mxu0 0.0
    %2580 = vmatpush1.msra.mxu0 %v2415
    %2581 = vmatprep.subr.mxu0 0.0
    %2582 = vmatpush1.msra.mxu0 %v2416
    %2583 = vmatprep.subr.mxu0 0.0
    %2584 = vmatpush1.msra.mxu0 %v2417
    %2585 = vmatprep.subr.mxu0 0.0
    %2586 = vmatpush1.msra.mxu0 %v2418
    %2587 = vmatprep.subr.mxu0 0.0
    %2588 = vmatpush1.msra.mxu0 %v2419
    %2589 = vmatprep.subr.mxu0 0.0
    %2590 = vmatpush1.msra.mxu0 %v2420
    %2591 = vmatprep.subr.mxu0 0.0
    %2592 = vmatpush1.msra.mxu0 %v2421
    %2593 = vmatprep.subr.mxu0 0.0
    %2594 = vmatpush1.msra.mxu0 0.0
    %2595 = vmatprep.subr.mxu0 0.0
    %2596 = vmatpush1.msra.mxu0 0.0
    %2597 = vmatprep.subr.mxu0 0.0
    %2598 = vmatpush1.msra.mxu0 0.0
    %2599 = vmatprep.subr.mxu0 0.0
    %2600 = vmatpush1.msra.mxu0 0.0
    %2601 = vmatprep.subr.mxu0 0.0
    %2602 = vmatpush1.msra.mxu0 0.0
    %2603 = vmatprep.subr.mxu0 0.0
    %2604 = vmatpush1.msra.mxu0 0.0
    %2605 = vmatprep.subr.mxu0 0.0
    %2606 = vmatpush1.msra.mxu0 0.0
    %2607 = vmatprep.subr.mxu0 0.0
    %2608 = vmatpush1.msra.mxu0 0.0
    %2609 = vmatprep.subr.mxu0 0.0
    %2610 = vmatpush1.msra.mxu0 0.0
    %2611 = vmatprep.subr.mxu0 0.0
    %2612 = vmatpush1.msra.mxu0 0.0
    %2613 = vmatprep.subr.mxu0 0.0
    %2614 = vmatpush1.msra.mxu0 0.0
    %2615 = vmatprep.subr.mxu0 0.0
    %2616 = vmatpush1.msra.mxu0 0.0
    %2617 = vmatprep.subr.mxu0 0.0
    %2618 = vmatpush1.msra.mxu0 0.0
    %2619 = vmatprep.subr.mxu0 0.0
    %2620 = vmatpush1.msra.mxu0 0.0
    %2621 = vmatprep.mubr.f32.mxu0 %v2429
    %2622 = vmatmul.mubr.f32.gmra.mrb[0].mxu0 %v2340
    %v2623 = vpop.f32.mrb[0].mxu0
    %v2624 = vadd.f32 %v2427, %v2623
    %v2625 = vpop.f32.mrb[0].mxu0
    %2626 = vmatprep.mubr.f32.mxu0 %v2431
    %2627 = vmatmul.mubr.f32.gmra.mrb[0].mxu0 %v2341
    %v2628 = vpop.f32.mrb[0].mxu0
    %v2629 = vadd.f32 %v2427, %v2628
    %v2630 = vpop.f32.mrb[0].mxu0
    %2631 = vmatprep.mubr.f32.mxu0 %v2433
    %2632 = vmatmul.mubr.f32.gmra.mrb[0].mxu0 %v2342
    %v2633 = vpop.f32.mrb[0].mxu0
    %v2634 = vadd.f32 %v2427, %v2633
    %v2635 = vpop.f32.mrb[0].mxu0
    %2636 = vmatprep.mubr.f32.mxu0 %v2435
    %2637 = vmatmul.mubr.f32.gmra.mrb[0].mxu0 %v2343
    %v2638 = vpop.f32.mrb[0].mxu0
    %v2639 = vadd.f32 %v2427, %v2638
    %v2640 = vpop.f32.mrb[0].mxu0
    %2641 = vmatprep.mubr.f32.mxu0 %v2437
    %2642 = vmatmul.mubr.f32.gmra.mrb[0].mxu0 %v2344
    %v2643 = vpop.f32.mrb[0].mxu0
    %v2644 = vadd.f32 %v2427, %v2643
    %v2645 = vpop.f32.mrb[0].mxu0
    %2646 = vmatprep.mubr.f32.mxu0 %v2439
    %2647 = vmatmul.mubr.f32.gmra.mrb[0].mxu0 %v2345
    %v2648 = vpop.f32.mrb[0].mxu0
    %v2649 = vadd.f32 %v2427, %v2648
    %v2650 = vpop.f32.mrb[0].mxu0
    %2651 = vmatprep.mubr.f32.mxu0 %v2441
    %2652 = vmatmul.mubr.f32.gmra.mrb[0].mxu0 %v2346
    %v2653 = vpop.f32.mrb[0].mxu0
    %v2654 = vadd.f32 %v2427, %v2653
    %v2655 = vpop.f32.mrb[0].mxu0
    %2656 = vmatprep.mubr.f32.mxu0 %v2443
    %2657 = vmatmul.mubr.f32.gmra.mrb[0].mxu0 %v2347
    %v2658 = vpop.f32.mrb[0].mxu0
    %v2659 = vadd.f32 %v2427, %v2658
    %v2660 = vpop.f32.mrb[0].mxu0
    %2661 = vmatprep.mubr.f32.mxu0 %v2445
    %2662 = vmatmul.mubr.f32.gmra.mrb[0].mxu0 %v2348
    %v2663 = vpop.f32.mrb[0].mxu0
    %v2664 = vadd.f32 %v2427, %v2663
    %v2665 = vpop.f32.mrb[0].mxu0
    %2666 = vmatprep.mubr.f32.mxu0 %v2447
    %2667 = vmatmul.mubr.f32.gmra.mrb[0].mxu0 %v2349
    %v2668 = vpop.f32.mrb[0].mxu0
    %v2669 = vadd.f32 %v2427, %v2668
    %v2670 = vpop.f32.mrb[0].mxu0
    %2671 = vmatprep.mubr.f32.mxu0 %v2449
    %2672 = vmatmul.mubr.f32.gmra.mrb[0].mxu0 %v2350
    %v2673 = vpop.f32.mrb[0].mxu0
    %v2674 = vadd.f32 %v2427, %v2673
    %v2675 = vpop.f32.mrb[0].mxu0
    %2676 = vmatprep.mubr.f32.mxu0 %v2451
    %2677 = vmatmul.mubr.f32.gmra.mrb[0].mxu0 %v2351
    %v2678 = vpop.f32.mrb[0].mxu0
    %v2679 = vadd.f32 %v2427, %v2678
    %v2680 = vpop.f32.mrb[0].mxu0
    %2681 = vmatprep.mubr.f32.mxu0 %v2453
    %2682 = vmatmul.mubr.f32.gmra.mrb[0].mxu0 %v2352
    %v2683 = vpop.f32.mrb[0].mxu0
    %v2684 = vadd.f32 %v2427, %v2683
    %v2685 = vpop.f32.mrb[0].mxu0
    %2686 = vmatprep.mubr.f32.mxu0 %v2455
    %2687 = vmatmul.mubr.f32.gmra.mrb[0].mxu0 %v2353
    %v2688 = vpop.f32.mrb[0].mxu0
    %v2689 = vadd.f32 %v2427, %v2688
    %v2690 = vpop.f32.mrb[0].mxu0
    %2691 = vmatprep.mubr.f32.mxu0 %v2457
    %2692 = vmatmul.mubr.f32.gmra.mrb[0].mxu0 %v2354
    %v2693 = vpop.f32.mrb[0].mxu0
    %v2694 = vadd.f32 %v2427, %v2693
    %v2695 = vpop.f32.mrb[0].mxu0
    %2696 = vmatprep.mubr.f32.mxu0 %v2459
    %2697 = vmatmul.mubr.f32.gmra.mrb[0].mxu0 %v2355
    %v2698 = vpop.f32.mrb[0].mxu0
    %v2699 = vadd.f32 %v2427, %v2698
    %v2700 = vpop.f32.mrb[0].mxu0
    %2701 = vmatprep.mubr.f32.mxu0 %v2461
    %2702 = vmatmul.mubr.f32.gmra.mrb[0].mxu0 %v2356
    %v2703 = vpop.f32.mrb[0].mxu0
    %v2704 = vadd.f32 %v2427, %v2703
    %v2705 = vpop.f32.mrb[0].mxu0
    %2706 = vmatprep.mubr.f32.mxu0 %v2463
    %2707 = vmatmul.mubr.f32.gmra.mrb[0].mxu0 %v2357
    %v2708 = vpop.f32.mrb[0].mxu0
    %v2709 = vadd.f32 %v2427, %v2708
    %v2710 = vpop.f32.mrb[0].mxu0
    %2711 = vmatprep.mubr.f32.mxu0 %v2465
    %2712 = vmatmul.mubr.f32.gmra.mrb[0].mxu0 %v2358
    %v2713 = vpop.f32.mrb[0].mxu0
    %v2714 = vadd.f32 %v2427, %v2713
    %v2715 = vpop.f32.mrb[0].mxu0
    %2716 = vmatprep.mubr.f32.mxu0 %v2467
    %2717 = vmatmul.mubr.f32.gmra.mrb[0].mxu0 %v2359
    %v2718 = vpop.f32.mrb[0].mxu0
    %v2719 = vadd.f32 %v2427, %v2718
    %v2720 = vpop.f32.mrb[0].mxu0
    %2721 = vmatprep.mubr.f32.mxu0 %v2469
    %2722 = vmatmul.mubr.f32.gmra.mrb[0].mxu0 %v2360
    %v2723 = vpop.f32.mrb[0].mxu0
    %v2724 = vadd.f32 %v2427, %v2723
    %v2725 = vpop.f32.mrb[0].mxu0
    %2726 = vmatprep.mubr.f32.mxu0 %v2471
    %2727 = vmatmul.mubr.f32.gmra.mrb[0].mxu0 %v2361
    %v2728 = vpop.f32.mrb[0].mxu0
    %v2729 = vadd.f32 %v2427, %v2728
    %v2730 = vpop.f32.mrb[0].mxu0
    %2731 = vmatprep.mubr.f32.mxu0 %v2473
    %2732 = vmatmul.mubr.f32.gmra.mrb[0].mxu0 %v2362
    %v2733 = vpop.f32.mrb[0].mxu0
    %v2734 = vadd.f32 %v2427, %v2733
    %v2735 = vpop.f32.mrb[0].mxu0
    %2736 = vmatprep.mubr.f32.mxu0 %v2475
    %2737 = vmatmul.mubr.f32.gmra.mrb[0].mxu0 %v2363
    %v2738 = vpop.f32.mrb[0].mxu0
    %v2739 = vadd.f32 %v2427, %v2738
    %v2740 = vpop.f32.mrb[0].mxu0
    %2741 = vmatprep.mubr.f32.mxu0 %v2477
    %2742 = vmatmul.mubr.f32.gmra.mrb[0].mxu0 %v2364
    %v2743 = vpop.f32.mrb[0].mxu0
    %v2744 = vadd.f32 %v2427, %v2743
    %v2745 = vpop.f32.mrb[0].mxu0
    %2746 = vmatprep.mubr.f32.mxu0 %v2479
    %2747 = vmatmul.mubr.f32.gmra.mrb[0].mxu0 %v2365
    %v2748 = vpop.f32.mrb[0].mxu0
    %v2749 = vadd.f32 %v2427, %v2748
    %v2750 = vpop.f32.mrb[0].mxu0
    %2751 = vmatprep.mubr.f32.mxu0 %v2481
    %2752 = vmatmul.mubr.f32.gmra.mrb[0].mxu0 %v2366
    %v2753 = vpop.f32.mrb[0].mxu0
    %v2754 = vadd.f32 %v2427, %v2753
    %v2755 = vpop.f32.mrb[0].mxu0
    %2756 = vmatprep.mubr.f32.mxu0 %v2483
    %2757 = vmatmul.mubr.f32.gmra.mrb[0].mxu0 %v2367
    %v2758 = vpop.f32.mrb[0].mxu0
    %v2759 = vadd.f32 %v2427, %v2758
    %v2760 = vpop.f32.mrb[0].mxu0
    %2761 = vmatprep.mubr.f32.mxu0 %v2485
    %2762 = vmatmul.mubr.f32.gmra.mrb[0].mxu0 %v2368
    %v2763 = vpop.f32.mrb[0].mxu0
    %v2764 = vadd.f32 %v2427, %v2763
    %v2765 = vpop.f32.mrb[0].mxu0
    %2766 = vmatprep.mubr.f32.mxu0 %v2487
    %2767 = vmatmul.mubr.f32.gmra.mrb[0].mxu0 %v2369
    %v2768 = vpop.f32.mrb[0].mxu0
    %v2769 = vadd.f32 %v2427, %v2768
    %v2770 = vpop.f32.mrb[0].mxu0
    %2771 = vmatprep.mubr.f32.mxu0 %v2489
    %2772 = vmatmul.mubr.f32.gmra.mrb[0].mxu0 %v2370
    %v2773 = vpop.f32.mrb[0].mxu0
    %v2774 = vadd.f32 %v2427, %v2773
    %v2775 = vpop.f32.mrb[0].mxu0
    %2776 = vmatprep.mubr.f32.mxu0 %v2491
    %2777 = vmatmul.mubr.f32.gmra.mrb[0].mxu0 %v2371
    %v2778 = vpop.f32.mrb[0].mxu0
    %v2779 = vadd.f32 %v2427, %v2778
    %v2780 = vpop.f32.mrb[0].mxu0
    %2781 = vmatprep.mubr.f32.mxu0 %v2493
    %2782 = vmatmul.mubr.f32.gmra.mrb[0].mxu0 %v2372
    %v2783 = vpop.f32.mrb[0].mxu0
    %v2784 = vadd.f32 %v2427, %v2783
    %v2785 = vpop.f32.mrb[0].mxu0
    %2786 = vmatprep.mubr.f32.mxu0 %v2495
    %2787 = vmatmul.mubr.f32.gmra.mrb[0].mxu0 %v2373
    %v2788 = vpop.f32.mrb[0].mxu0
    %v2789 = vadd.f32 %v2427, %v2788
    %v2790 = vpop.f32.mrb[0].mxu0
    %2791 = vmatprep.mubr.f32.mxu0 %v2497
    %2792 = vmatmul.mubr.f32.gmra.mrb[0].mxu0 %v2374
    %v2793 = vpop.f32.mrb[0].mxu0
    %v2794 = vadd.f32 %v2427, %v2793
    %v2795 = vpop.f32.mrb[0].mxu0
    %2796 = vmatprep.mubr.f32.mxu0 %v2499
    %2797 = vmatmul.mubr.f32.gmra.mrb[0].mxu0 %v2375
    %v2798 = vpop.f32.mrb[0].mxu0
    %v2799 = vadd.f32 %v2427, %v2798
    %v2800 = vpop.f32.mrb[0].mxu0
    %2801 = vmatprep.mubr.f32.mxu0 %v2501
    %2802 = vmatmul.mubr.f32.gmra.mrb[0].mxu0 %v2376
    %v2803 = vpop.f32.mrb[0].mxu0
    %v2804 = vadd.f32 %v2427, %v2803
    %v2805 = vpop.f32.mrb[0].mxu0
    %2806 = vmatprep.mubr.f32.mxu0 %v2503
    %2807 = vmatmul.mubr.f32.gmra.mrb[0].mxu0 %v2377
    %v2808 = vpop.f32.mrb[0].mxu0
    %v2809 = vadd.f32 %v2427, %v2808
    %v2810 = vpop.f32.mrb[0].mxu0
    %2811 = vmatprep.mubr.f32.mxu0 %v2505
    %2812 = vmatmul.mubr.f32.gmra.mrb[0].mxu0 %v2378
    %v2813 = vpop.f32.mrb[0].mxu0
    %v2814 = vadd.f32 %v2427, %v2813
    %v2815 = vpop.f32.mrb[0].mxu0
    %2816 = vmatprep.mubr.f32.mxu0 %v2507
    %2817 = vmatmul.mubr.f32.gmra.mrb[0].mxu0 %v2379
    %v2818 = vpop.f32.mrb[0].mxu0
    %v2819 = vadd.f32 %v2427, %v2818
    %v2820 = vpop.f32.mrb[0].mxu0
    %2821 = vmatprep.mubr.f32.mxu0 %v2509
    %2822 = vmatmul.mubr.f32.gmra.mrb[0].mxu0 %v2380
    %v2823 = vpop.f32.mrb[0].mxu0
    %v2824 = vadd.f32 %v2427, %v2823
    %v2825 = vpop.f32.mrb[0].mxu0
    %2826 = vmatprep.mubr.f32.mxu0 %v2511
    %2827 = vmatmul.mubr.f32.gmra.mrb[0].mxu0 %v2381
    %v2828 = vpop.f32.mrb[0].mxu0
    %v2829 = vadd.f32 %v2427, %v2828
    %v2830 = vpop.f32.mrb[0].mxu0
    %2831 = vmatprep.mubr.f32.mxu0 %v2513
    %2832 = vmatmul.mubr.f32.gmra.mrb[0].mxu0 %v2382
    %v2833 = vpop.f32.mrb[0].mxu0
    %v2834 = vadd.f32 %v2427, %v2833
    %v2835 = vpop.f32.mrb[0].mxu0
    %2836 = vmatprep.mubr.f32.mxu0 %v2515
    %2837 = vmatmul.mubr.f32.gmra.mrb[0].mxu0 %v2383
    %v2838 = vpop.f32.mrb[0].mxu0
    %v2839 = vadd.f32 %v2427, %v2838
    %v2840 = vpop.f32.mrb[0].mxu0
    %2841 = vmatprep.mubr.f32.mxu0 %v2517
    %2842 = vmatmul.mubr.f32.gmra.mrb[0].mxu0 %v2384
    %v2843 = vpop.f32.mrb[0].mxu0
    %v2844 = vadd.f32 %v2427, %v2843
    %v2845 = vpop.f32.mrb[0].mxu0
    %2846 = vmatprep.mubr.f32.mxu0 %v2519
    %2847 = vmatmul.mubr.f32.gmra.mrb[0].mxu0 %v2385
    %v2848 = vpop.f32.mrb[0].mxu0
    %v2849 = vadd.f32 %v2427, %v2848
    %v2850 = vpop.f32.mrb[0].mxu0
    %2851 = vmatprep.mubr.f32.mxu0 %v2521
    %2852 = vmatmul.mubr.f32.gmra.mrb[0].mxu0 %v2386
    %v2853 = vpop.f32.mrb[0].mxu0
    %v2854 = vadd.f32 %v2427, %v2853
    %v2855 = vpop.f32.mrb[0].mxu0
    %2856 = vmatprep.mubr.f32.mxu0 %v2523
    %2857 = vmatmul.mubr.f32.gmra.mrb[0].mxu0 %v2387
    %v2858 = vpop.f32.mrb[0].mxu0
    %v2859 = vadd.f32 %v2427, %v2858
    %v2860 = vpop.f32.mrb[0].mxu0
    %2861 = vmatprep.mubr.f32.mxu0 %v2525
    %2862 = vmatmul.mubr.f32.gmra.mrb[0].mxu0 %v2388
    %v2863 = vpop.f32.mrb[0].mxu0
    %v2864 = vadd.f32 %v2427, %v2863
    %v2865 = vpop.f32.mrb[0].mxu0
    %2866 = vmatprep.mubr.f32.mxu0 %v2527
    %2867 = vmatmul.mubr.f32.gmra.mrb[0].mxu0 %v2389
    %v2868 = vpop.f32.mrb[0].mxu0
    %v2869 = vadd.f32 %v2427, %v2868
    %v2870 = vpop.f32.mrb[0].mxu0
    %2871 = vmatprep.mubr.f32.mxu0 %v2529
    %2872 = vmatmul.mubr.f32.gmra.mrb[0].mxu0 %v2390
    %v2873 = vpop.f32.mrb[0].mxu0
    %v2874 = vadd.f32 %v2427, %v2873
    %v2875 = vpop.f32.mrb[0].mxu0
    %2876 = vmatprep.mubr.f32.mxu0 %v2531
    %2877 = vmatmul.mubr.f32.gmra.mrb[0].mxu0 %v2391
    %v2878 = vpop.f32.mrb[0].mxu0
    %v2879 = vadd.f32 %v2427, %v2878
    %v2880 = vpop.f32.mrb[0].mxu0
    %2881 = vmatprep.mubr.f32.mxu0 %v2533
    %2882 = vmatmul.mubr.f32.gmra.mrb[0].mxu0 %v2392
    %v2883 = vpop.f32.mrb[0].mxu0
    %v2884 = vadd.f32 %v2427, %v2883
    %v2885 = vpop.f32.mrb[0].mxu0
    %2886 = vmatprep.mubr.f32.mxu0 %v2535
    %2887 = vmatmul.mubr.f32.gmra.mrb[0].mxu0 %v2393
    %v2888 = vpop.f32.mrb[0].mxu0
    %v2889 = vadd.f32 %v2427, %v2888
    %v2890 = vpop.f32.mrb[0].mxu0
    %2891 = vmatprep.mubr.f32.mxu0 %v2537
    %2892 = vmatmul.mubr.f32.gmra.mrb[0].mxu0 %v2394
    %v2893 = vpop.f32.mrb[0].mxu0
    %v2894 = vadd.f32 %v2427, %v2893
    %v2895 = vpop.f32.mrb[0].mxu0
    %2896 = vmatprep.mubr.f32.mxu0 %v2539
    %2897 = vmatmul.mubr.f32.gmra.mrb[0].mxu0 %v2395
    %v2898 = vpop.f32.mrb[0].mxu0
    %v2899 = vadd.f32 %v2427, %v2898
    %v2900 = vpop.f32.mrb[0].mxu0
    %2901 = vmatprep.mubr.f32.mxu0 %v2541
    %2902 = vmatmul.mubr.f32.gmra.mrb[0].mxu0 %v2396
    %v2903 = vpop.f32.mrb[0].mxu0
    %v2904 = vadd.f32 %v2427, %v2903
    %v2905 = vpop.f32.mrb[0].mxu0
    %2906 = vmatprep.mubr.f32.mxu0 %v2543
    %2907 = vmatmul.mubr.f32.gmra.mrb[0].mxu0 %v2397
    %v2908 = vpop.f32.mrb[0].mxu0
    %v2909 = vadd.f32 %v2427, %v2908
    %v2910 = vpop.f32.mrb[0].mxu0
    %2911 = vmatprep.mubr.f32.mxu0 %v2545
    %2912 = vmatmul.mubr.f32.gmra.mrb[0].mxu0 %v2398
    %v2913 = vpop.f32.mrb[0].mxu0
    %v2914 = vadd.f32 %v2427, %v2913
    %v2915 = vpop.f32.mrb[0].mxu0
    %2916 = vmatprep.mubr.f32.mxu0 %v2547
    %2917 = vmatmul.mubr.f32.gmra.mrb[0].mxu0 %v2399
    %v2918 = vpop.f32.mrb[0].mxu0
    %v2919 = vadd.f32 %v2427, %v2918
    %v2920 = vpop.f32.mrb[0].mxu0
    %2921 = vmatprep.mubr.f32.mxu0 %v2549
    %2922 = vmatmul.mubr.f32.gmra.mrb[0].mxu0 %v2400
    %v2923 = vpop.f32.mrb[0].mxu0
    %v2924 = vadd.f32 %v2427, %v2923
    %v2925 = vpop.f32.mrb[0].mxu0
    %2926 = vmatprep.mubr.f32.mxu0 %v2551
    %2927 = vmatmul.mubr.f32.gmra.mrb[0].mxu0 %v2401
    %v2928 = vpop.f32.mrb[0].mxu0
    %v2929 = vadd.f32 %v2427, %v2928
    %v2930 = vpop.f32.mrb[0].mxu0
    %2931 = vmatprep.mubr.f32.mxu0 %v2553
    %2932 = vmatmul.mubr.f32.gmra.mrb[0].mxu0 %v2402
    %v2933 = vpop.f32.mrb[0].mxu0
    %v2934 = vadd.f32 %v2427, %v2933
    %v2935 = vpop.f32.mrb[0].mxu0
    %2936 = vmatprep.mubr.f32.mxu0 %v2555
    %2937 = vmatmul.mubr.f32.gmra.mrb[0].mxu0 %v2403
    %v2938 = vpop.f32.mrb[0].mxu0
    %v2939 = vadd.f32 %v2427, %v2938
    %v2940 = vpop.f32.mrb[0].mxu0
    %2941 = vdwg.mxu0
    %v2942 = vmax.f32 %v2624, 0.0
    %v2943 = vmax.f32 %v2629, 0.0
    %v2944 = vmax.f32 %v2634, 0.0
    %v2945 = vmax.f32 %v2639, 0.0
    %v2946 = vmax.f32 %v2644, 0.0
    %v2947 = vmax.f32 %v2649, 0.0
    %v2948 = vmax.f32 %v2654, 0.0
    %v2949 = vmax.f32 %v2659, 0.0
    %v2950 = vmax.f32 %v2664, 0.0
    %v2951 = vmax.f32 %v2669, 0.0
    %v2952 = vmax.f32 %v2674, 0.0
    %v2953 = vmax.f32 %v2679, 0.0
    %v2954 = vmax.f32 %v2684, 0.0
    %v2955 = vmax.f32 %v2689, 0.0
    %v2956 = vmax.f32 %v2694, 0.0
    %v2957 = vmax.f32 %v2699, 0.0
    %v2958 = vmax.f32 %v2704, 0.0
    %v2959 = vmax.f32 %v2709, 0.0
    %v2960 = vmax.f32 %v2714, 0.0
    %v2961 = vmax.f32 %v2719, 0.0
    %v2962 = vmax.f32 %v2724, 0.0
    %v2963 = vmax.f32 %v2729, 0.0
    %v2964 = vmax.f32 %v2734, 0.0
    %v2965 = vmax.f32 %v2739, 0.0
    %v2966 = vmax.f32 %v2744, 0.0
    %v2967 = vmax.f32 %v2749, 0.0
    %v2968 = vmax.f32 %v2754, 0.0
    %v2969 = vmax.f32 %v2759, 0.0
    %v2970 = vmax.f32 %v2764, 0.0
    %v2971 = vmax.f32 %v2769, 0.0
    %v2972 = vmax.f32 %v2774, 0.0
    %v2973 = vmax.f32 %v2779, 0.0
    %v2974 = vmax.f32 %v2784, 0.0
    %v2975 = vmax.f32 %v2789, 0.0
    %v2976 = vmax.f32 %v2794, 0.0
    %v2977 = vmax.f32 %v2799, 0.0
    %v2978 = vmax.f32 %v2804, 0.0
    %v2979 = vmax.f32 %v2809, 0.0
    %v2980 = vmax.f32 %v2814, 0.0
    %v2981 = vmax.f32 %v2819, 0.0
    %v2982 = vmax.f32 %v2824, 0.0
    %v2983 = vmax.f32 %v2829, 0.0
    %v2984 = vmax.f32 %v2834, 0.0
    %v2985 = vmax.f32 %v2839, 0.0
    %v2986 = vmax.f32 %v2844, 0.0
    %v2987 = vmax.f32 %v2849, 0.0
    %v2988 = vmax.f32 %v2854, 0.0
    %v2989 = vmax.f32 %v2859, 0.0
    %v2990 = vmax.f32 %v2864, 0.0
    %v2991 = vmax.f32 %v2869, 0.0
    %v2992 = vmax.f32 %v2874, 0.0
    %v2993 = vmax.f32 %v2879, 0.0
    %v2994 = vmax.f32 %v2884, 0.0
    %v2995 = vmax.f32 %v2889, 0.0
    %v2996 = vmax.f32 %v2894, 0.0
    %v2997 = vmax.f32 %v2899, 0.0
    %v2998 = vmax.f32 %v2904, 0.0
    %v2999 = vmax.f32 %v2909, 0.0
    %v3000 = vmax.f32 %v2914, 0.0
    %v3001 = vmax.f32 %v2919, 0.0
    %v3002 = vmax.f32 %v2924, 0.0
    %v3003 = vmax.f32 %v2929, 0.0
    %v3004 = vmax.f32 %v2934, 0.0
    %v3005 = vmax.f32 %v2939, 0.0
    %v3006 = vld [vmem:[%s2] sm:$0xff]
    %v3007 = vadd.f32 %v3006, 0.5
    %v3008 = vfloor.f32 %v3007
    %3010 = vrot.lane.b32.xlu0 %v3008, 2
    %v3011 = vpop.permute.xlu0 %3010
    %v3013 = vsub.f32 %v3008, %v3011
    %v3014 = vadd.f32 %v3013, 1.0
    %v3015 = vmax.f32 %v3014, 1.0
    %v3016 = vlaneseq
    %v3017 = vand.u32 %v3016, 127
    %v3018 = vadd.s32 %v3017, 128
    %v3019 = vadd.s32 %v3017, 256
    %v3020 = vadd.s32 %v3017, 384
    %v3021 = vcvt.s32.f32 %v3017
    %v3022 = vcvt.s32.f32 %v3018
    %v3023 = vcvt.s32.f32 %v3019
    %v3024 = vcvt.s32.f32 %v3020
    %v3025 = vrcp.pop 256.0
    %v3026 = vmul.f32 %v3021, %v3025
    %v3027 = vmul.f32 %v3022, %v3025
    %v3028 = vmul.f32 %v3023, %v3025
    %v3029 = vmul.f32 %v3024, %v3025
    %v3030 = vfloor.f32 %v3026
    %v3031 = vfloor.f32 %v3027
    %v3032 = vfloor.f32 %v3028
    %v3033 = vfloor.f32 %v3029
    %v3034 = vmul.f32 %v3030, 256.0
    %v3035 = vmul.f32 %v3031, 256.0
    %v3036 = vmul.f32 %v3032, 256.0
    %v3037 = vmul.f32 %v3033, 256.0
    %v3038 = vsub.f32 %v3021, %v3034
    %v3039 = vsub.f32 %v3022, %v3035
    %v3040 = vsub.f32 %v3023, %v3036
    %v3041 = vsub.f32 %v3024, %v3037
    %v3042 = vrcp.pop 16.0
    %v3043 = vmul.f32 %v3038, %v3042
    %v3044 = vmul.f32 %v3039, %v3042
    %v3045 = vmul.f32 %v3040, %v3042
    %v3046 = vmul.f32 %v3041, %v3042
    %v3047 = vfloor.f32 %v3043
    %v3048 = vfloor.f32 %v3044
    %v3049 = vfloor.f32 %v3045
    %v3050 = vfloor.f32 %v3046
    %v3051 = vmul.f32 %v3047, 16.0
    %v3052 = vmul.f32 %v3048, 16.0
    %v3053 = vmul.f32 %v3049, 16.0
    %v3054 = vmul.f32 %v3050, 16.0
    %v3055 = vsub.f32 %v3038, %v3051
    %v3056 = vsub.f32 %v3039, %v3052
    %v3057 = vsub.f32 %v3040, %v3053
    %v3058 = vsub.f32 %v3041, %v3054
    %v3059 = vld [vmem:[%s1] sm:$0xff]
    %v3060 = vld [vmem:[%s1 + $0x8] sm:$0xff]
    %v3061 = vld [vmem:[%s1 + $0x10] sm:$0xff]
    %v3062 = vld [vmem:[%s1 + $0x18] sm:$0xff]
    %v3063 = vld [vmem:[%s1 + $0x20] sm:$0xff]
    %v3064 = vld [vmem:[%s1 + $0x28] sm:$0xff]
    %v3065 = vld [vmem:[%s1 + $0x30] sm:$0xff]
    %v3066 = vld [vmem:[%s1 + $0x38] sm:$0xff]
    %v3067 = vmul.f32 %v3015, 0.0
    %v3068 = vrcp.pop 2.0
    %v3069 = vmul.f32 %v3067, %v3068
    %v3070 = vfloor.f32 %v3069
    %3072 = vrot.lane.b32.xlu0 %v3070, 126
    %v3073 = vpop.permute.xlu0 %3072
    %v3075 = vadd.f32 %v3008, %v3073
    %v3076 = vmax.f32 %v3075, 0.0
    %v3077 = vmin.f32 %v3076, 15.0
    %v3078 = vmul.f32 %v3015, %v3068
    %v3079 = vceil.f32 %v3078
    %3081 = vrot.lane.b32.xlu0 %v3079, 126
    %v3082 = vpop.permute.xlu0 %3081
    %v3084 = vadd.f32 %v3008, %v3082
    %v3085 = vadd.f32 %v3077, 1.0
    %v3086 = vmax.f32 %v3085, %v3084
    %v3087 = vmin.f32 %v3086, 16.0
    %3088 = vset.pattern.permute.xlu0 0
    %3089 = vperm.xlu0 %3088, %v3008
    %v3090 = vpop.permute.xlu0 %3089
    %vm3092 = vcmp.eq.f32.partialorder %v3030, %v3090
    %vm3093 = vcmp.eq.f32.partialorder %v3031, %v3090
    %vm3094 = vcmp.eq.f32.partialorder %v3032, %v3090
    %vm3095 = vcmp.eq.f32.partialorder %v3033, %v3090
    %3097 = vset.pattern.permute.xlu0 2
    %3098 = vperm.xlu0 %3097, %v3077
    %v3099 = vpop.permute.xlu0 %3098
    %vm3101 = vcmp.ge.f32.partialorder %v3047, %v3099
    %vm3102 = vcmp.ge.f32.partialorder %v3048, %v3099
    %vm3103 = vcmp.ge.f32.partialorder %v3049, %v3099
    %vm3104 = vcmp.ge.f32.partialorder %v3050, %v3099
    %vm3105 = vmand %vm3092, %vm3101
    %vm3106 = vmand %vm3093, %vm3102
    %vm3107 = vmand %vm3094, %vm3103
    %vm3108 = vmand %vm3095, %vm3104
    %3110 = vset.pattern.permute.xlu0 2
    %3111 = vperm.xlu0 %3110, %v3087
    %v3112 = vpop.permute.xlu0 %3111
    %vm3114 = vcmp.lt.f32.partialorder %v3047, %v3112
    %vm3115 = vcmp.lt.f32.partialorder %v3048, %v3112
    %vm3116 = vcmp.lt.f32.partialorder %v3049, %v3112
    %vm3117 = vcmp.lt.f32.partialorder %v3050, %v3112
    %vm3118 = vmand %vm3105, %vm3114
    %vm3119 = vmand %vm3106, %vm3115
    %vm3120 = vmand %vm3107, %vm3116
    %vm3121 = vmand %vm3108, %vm3117
    %3122 = vset.pattern.permute.xlu0 1
    %3123 = vperm.xlu0 %3122, %v3077
    %v3124 = vpop.permute.xlu0 %3123
    %vm3126 = vcmp.ge.f32.partialorder %v3055, %v3124
    %vm3127 = vcmp.ge.f32.partialorder %v3056, %v3124
    %vm3128 = vcmp.ge.f32.partialorder %v3057, %v3124
    %vm3129 = vcmp.ge.f32.partialorder %v3058, %v3124
    %vm3130 = vmand %vm3118, %vm3126
    %vm3131 = vmand %vm3119, %vm3127
    %vm3132 = vmand %vm3120, %vm3128
    %vm3133 = vmand %vm3121, %vm3129
    %3134 = vset.pattern.permute.xlu0 1
    %3135 = vperm.xlu0 %3134, %v3087
    %v3136 = vpop.permute.xlu0 %3135
    %vm3138 = vcmp.lt.f32.partialorder %v3055, %v3136
    %vm3139 = vcmp.lt.f32.partialorder %v3056, %v3136
    %vm3140 = vcmp.lt.f32.partialorder %v3057, %v3136
    %vm3141 = vcmp.lt.f32.partialorder %v3058, %v3136
    %vm3142 = vmand %vm3130, %vm3138
    %vm3143 = vmand %vm3131, %vm3139
    %vm3144 = vmand %vm3132, %vm3140
    %vm3145 = vmand %vm3133, %vm3141
    %v3146 = vsel %vm3142, 1, 0
    %v3147 = vsel %vm3143, 1, 0
    %v3148 = vsel %vm3144, 1, 0
    %v3149 = vsel %vm3145, 1, 0
    %v3150 = vcvt.s32.f32 %v3146
    %v3151 = vcvt.s32.f32 %v3147
    %v3152 = vcvt.s32.f32 %v3148
    %v3153 = vcvt.s32.f32 %v3149
    %v3154 = vadd.f32 %v3150, %v3151
    %v3155 = vadd.f32 %v3154, %v3152
    %v3156 = vadd.f32 %v3155, %v3153
    %3157 = vadd.xlane.f32.xlu0 %v3156
    %v3158 = vpop.xlane.xlu0 %3157
    %v3159 = vmax.f32 %v3158, 1.0
    %v3160 = vrcp.pop %v3159
    %v3161 = vmul.f32 %v3150, %v3160
    %v3162 = vmul.f32 %v3151, %v3160
    %v3163 = vmul.f32 %v3152, %v3160
    %v3164 = vmul.f32 %v3153, %v3160
    %3165 = vmatprep.subr.mxu0 0.0
    %3166 = vmatpush1.msra.mxu0 %v2942
    %3167 = vmatprep.subr.mxu0 0.0
    %3168 = vmatpush1.msra.mxu0 %v2943
    %3169 = vmatprep.subr.mxu0 0.0
    %3170 = vmatpush1.msra.mxu0 %v2944
    %3171 = vmatprep.subr.mxu0 0.0
    %3172 = vmatpush1.msra.mxu0 %v2945
    %3173 = vmatprep.subr.mxu0 0.0
    %3174 = vmatpush1.msra.mxu0 %v2946
    %3175 = vmatprep.subr.mxu0 0.0
    %3176 = vmatpush1.msra.mxu0 %v2947
    %3177 = vmatprep.subr.mxu0 0.0
    %3178 = vmatpush1.msra.mxu0 %v2948
    %3179 = vmatprep.subr.mxu0 0.0
    %3180 = vmatpush1.msra.mxu0 %v2949
    %3181 = vmatprep.subr.mxu0 0.0
    %3182 = vmatpush1.msra.mxu0 %v2950
    %3183 = vmatprep.subr.mxu0 0.0
    %3184 = vmatpush1.msra.mxu0 %v2951
    %3185 = vmatprep.subr.mxu0 0.0
    %3186 = vmatpush1.msra.mxu0 %v2952
    %3187 = vmatprep.subr.mxu0 0.0
    %3188 = vmatpush1.msra.mxu0 %v2953
    %3189 = vmatprep.subr.mxu0 0.0
    %3190 = vmatpush1.msra.mxu0 %v2954
    %3191 = vmatprep.subr.mxu0 0.0
    %3192 = vmatpush1.msra.mxu0 %v2955
    %3193 = vmatprep.subr.mxu0 0.0
    %3194 = vmatpush1.msra.mxu0 %v2956
    %3195 = vmatprep.subr.mxu0 0.0
    %3196 = vmatpush1.msra.mxu0 %v2957
    %3197 = vmatprep.subr.mxu0 0.0
    %3198 = vmatpush1.msra.mxu0 %v2958
    %3199 = vmatprep.subr.mxu0 0.0
    %3200 = vmatpush1.msra.mxu0 %v2959
    %3201 = vmatprep.subr.mxu0 0.0
    %3202 = vmatpush1.msra.mxu0 %v2960
    %3203 = vmatprep.subr.mxu0 0.0
    %3204 = vmatpush1.msra.mxu0 %v2961
    %3205 = vmatprep.subr.mxu0 0.0
    %3206 = vmatpush1.msra.mxu0 %v2962
    %3207 = vmatprep.subr.mxu0 0.0
    %3208 = vmatpush1.msra.mxu0 %v2963
    %3209 = vmatprep.subr.mxu0 0.0
    %3210 = vmatpush1.msra.mxu0 %v2964
    %3211 = vmatprep.subr.mxu0 0.0
    %3212 = vmatpush1.msra.mxu0 %v2965
    %3213 = vmatprep.subr.mxu0 0.0
    %3214 = vmatpush1.msra.mxu0 %v2966
    %3215 = vmatprep.subr.mxu0 0.0
    %3216 = vmatpush1.msra.mxu0 %v2967
    %3217 = vmatprep.subr.mxu0 0.0
    %3218 = vmatpush1.msra.mxu0 %v2968
    %3219 = vmatprep.subr.mxu0 0.0
    %3220 = vmatpush1.msra.mxu0 %v2969
    %3221 = vmatprep.subr.mxu0 0.0
    %3222 = vmatpush1.msra.mxu0 %v2970
    %3223 = vmatprep.subr.mxu0 0.0
    %3224 = vmatpush1.msra.mxu0 %v2971
    %3225 = vmatprep.subr.mxu0 0.0
    %3226 = vmatpush1.msra.mxu0 %v2972
    %3227 = vmatprep.subr.mxu0 0.0
    %3228 = vmatpush1.msra.mxu0 %v2973
    %3229 = vmatprep.mubr.f32.mxu0 %v3162
    %3230 = vmatmul.mubr.f32.gmra.mrb[0].mxu0 %v3161
    %v3231 = vpop.f32.mrb[0].mxu0
    %v3232 = vadd.f32 0.0, %v3231
    %v3233 = vpop.f32.mrb[0].mxu0
    %3234 = vdwg.mxu0
    %3235 = vmatprep.subr.mxu0 0.0
    %3236 = vmatpush1.msra.mxu0 %v2974
    %3237 = vmatprep.subr.mxu0 0.0
    %3238 = vmatpush1.msra.mxu0 %v2975
    %3239 = vmatprep.subr.mxu0 0.0
    %3240 = vmatpush1.msra.mxu0 %v2976
    %3241 = vmatprep.subr.mxu0 0.0
    %3242 = vmatpush1.msra.mxu0 %v2977
    %3243 = vmatprep.subr.mxu0 0.0
    %3244 = vmatpush1.msra.mxu0 %v2978
    %3245 = vmatprep.subr.mxu0 0.0
    %3246 = vmatpush1.msra.mxu0 %v2979
    %3247 = vmatprep.subr.mxu0 0.0
    %3248 = vmatpush1.msra.mxu0 %v2980
    %3249 = vmatprep.subr.mxu0 0.0
    %3250 = vmatpush1.msra.mxu0 %v2981
    %3251 = vmatprep.subr.mxu0 0.0
    %3252 = vmatpush1.msra.mxu0 %v2982
    %3253 = vmatprep.subr.mxu0 0.0
    %3254 = vmatpush1.msra.mxu0 %v2983
    %3255 = vmatprep.subr.mxu0 0.0
    %3256 = vmatpush1.msra.mxu0 %v2984
    %3257 = vmatprep.subr.mxu0 0.0
    %3258 = vmatpush1.msra.mxu0 %v2985
    %3259 = vmatprep.subr.mxu0 0.0
    %3260 = vmatpush1.msra.mxu0 %v2986
    %3261 = vmatprep.subr.mxu0 0.0
    %3262 = vmatpush1.msra.mxu0 %v2987
    %3263 = vmatprep.subr.mxu0 0.0
    %3264 = vmatpush1.msra.mxu0 %v2988
    %3265 = vmatprep.subr.mxu0 0.0
    %3266 = vmatpush1.msra.mxu0 %v2989
    %3267 = vmatprep.subr.mxu0 0.0
    %3268 = vmatpush1.msra.mxu0 %v2990
    %3269 = vmatprep.subr.mxu0 0.0
    %3270 = vmatpush1.msra.mxu0 %v2991
    %3271 = vmatprep.subr.mxu0 0.0
    %3272 = vmatpush1.msra.mxu0 %v2992
    %3273 = vmatprep.subr.mxu0 0.0
    %3274 = vmatpush1.msra.mxu0 %v2993
    %3275 = vmatprep.subr.mxu0 0.0
    %3276 = vmatpush1.msra.mxu0 %v2994
    %3277 = vmatprep.subr.mxu0 0.0
    %3278 = vmatpush1.msra.mxu0 %v2995
    %3279 = vmatprep.subr.mxu0 0.0
    %3280 = vmatpush1.msra.mxu0 %v2996
    %3281 = vmatprep.subr.mxu0 0.0
    %3282 = vmatpush1.msra.mxu0 %v2997
    %3283 = vmatprep.subr.mxu0 0.0
    %3284 = vmatpush1.msra.mxu0 %v2998
    %3285 = vmatprep.subr.mxu0 0.0
    %3286 = vmatpush1.msra.mxu0 %v2999
    %3287 = vmatprep.subr.mxu0 0.0
    %3288 = vmatpush1.msra.mxu0 %v3000
    %3289 = vmatprep.subr.mxu0 0.0
    %3290 = vmatpush1.msra.mxu0 %v3001
    %3291 = vmatprep.subr.mxu0 0.0
    %3292 = vmatpush1.msra.mxu0 %v3002
    %3293 = vmatprep.subr.mxu0 0.0
    %3294 = vmatpush1.msra.mxu0 %v3003
    %3295 = vmatprep.subr.mxu0 0.0
    %3296 = vmatpush1.msra.mxu0 %v3004
    %3297 = vmatprep.subr.mxu0 0.0
    %3298 = vmatpush1.msra.mxu0 %v3005
    %3299 = vmatprep.mubr.f32.mxu0 %v3164
    %3300 = vmatmul.mubr.f32.gmra.mrb[0].mxu0 %v3163
    %v3301 = vpop.f32.mrb[0].mxu0
    %v3302 = vadd.f32 %v3232, %v3301
    %v3303 = vpop.f32.mrb[0].mxu0
    %3304 = vdwg.mxu0
    %v3305 = vcombine.low %v3146, %v3147
    %v3306 = vcombine.high %v3146, %v3147
    %v3307 = vcombine.low %v3148, %v3149
    %v3308 = vcombine.high %v3148, %v3149
    %v3310 = vunpack.c.l.s4 1966171168
    %v3311 = vunpack.c.0.s8 %v3310
    %v3312 = vlaneseq
    %v3313 = vshrl.u32 %v3312, 7
    %v3314 = vsub.s32 %v3311, %v3313
    %v3315 = vrot.slane %v3305, %v3314
    %v3317 = vunpack.c.l.s4 1966171168
    %v3318 = vunpack.c.0.s8 %v3317
    %v3319 = vlaneseq
    %v3320 = vshrl.u32 %v3319, 7
    %v3321 = vsub.s32 %v3318, %v3320
    %v3322 = vrot.slane %v3306, %v3321
    %v3324 = vunpack.c.l.s4 1966171168
    %v3325 = vunpack.c.0.s8 %v3324
    %v3326 = vlaneseq
    %v3327 = vshrl.u32 %v3326, 7
    %v3328 = vsub.s32 %v3325, %v3327
    %v3329 = vrot.slane %v3307, %v3328
    %v3331 = vunpack.c.l.s4 1966171168
    %v3332 = vunpack.c.0.s8 %v3331
    %v3333 = vlaneseq
    %v3334 = vshrl.u32 %v3333, 7
    %v3335 = vsub.s32 %v3332, %v3334
    %v3336 = vrot.slane %v3308, %v3335
    %v3337 = vcombine.low %v3315, %v3329
    %v3338 = vcombine.high %v3315, %v3329
    %v3339 = vcombine.low %v3322, %v3336
    %v3340 = vcombine.high %v3322, %v3336
    %v3342 = vunpack.c.l.s4 1966171168
    %v3343 = vunpack.c.0.s8 %v3342
    %v3344 = vlaneseq
    %v3345 = vshrl.u32 %v3344, 7
    %v3346 = vsub.s32 %v3343, %v3345
    %v3347 = vrot.slane %v3337, %v3346
    %v3349 = vunpack.c.l.s4 1966171168
    %v3350 = vunpack.c.0.s8 %v3349
    %v3351 = vlaneseq
    %v3352 = vshrl.u32 %v3351, 7
    %v3353 = vsub.s32 %v3350, %v3352
    %v3354 = vrot.slane %v3339, %v3353
    %v3356 = vunpack.c.l.s4 1966171168
    %v3357 = vunpack.c.0.s8 %v3356
    %v3358 = vlaneseq
    %v3359 = vshrl.u32 %v3358, 7
    %v3360 = vsub.s32 %v3357, %v3359
    %v3361 = vrot.slane %v3338, %v3360
    %v3363 = vunpack.c.l.s4 1966171168
    %v3364 = vunpack.c.0.s8 %v3363
    %v3365 = vlaneseq
    %v3366 = vshrl.u32 %v3365, 7
    %v3367 = vsub.s32 %v3364, %v3366
    %v3368 = vrot.slane %v3340, %v3367
    %v3369 = vcombine.high %v3347, %v3347
    %v3370 = vcombine.high %v3354, %v3354
    %v3371 = vcombine.high %v3361, %v3361
    %v3372 = vcombine.high %v3368, %v3368
    %vm3373 = vcmp.ne.s32.totalorder %v3347, 0
    %vm3374 = vcmp.ne.s32.totalorder %v3361, 0
    %vm3375 = vcmp.ne.s32.totalorder %v3369, 0
    %vm3376 = vcmp.ne.s32.totalorder %v3371, 0
    %vm3377 = vcmp.ne.s32.totalorder %v3354, 0
    %vm3378 = vcmp.ne.s32.totalorder %v3368, 0
    %vm3379 = vcmp.ne.s32.totalorder %v3370, 0
    %vm3380 = vcmp.ne.s32.totalorder %v3372, 0
    %v3381 = vsel %vm3373, 1, 0
    %v3382 = vsel %vm3374, 1, 0
    %v3383 = vsel %vm3375, 1, 0
    %v3384 = vsel %vm3376, 1, 0
    %v3385 = vsel %vm3377, 1, 0
    %v3386 = vsel %vm3378, 1, 0
    %v3387 = vsel %vm3379, 1, 0
    %v3388 = vsel %vm3380, 1, 0
    %v3389 = vlaneseq
    %v3390 = vshrl.u32 %v3389, 7
    %v3391 = vsub.s32 0, %v3390
    %v3392 = vrot.slane %v3381, %v3391
    %v3393 = vlaneseq
    %v3394 = vshrl.u32 %v3393, 7
    %v3395 = vsub.s32 1, %v3394
    %v3396 = vrot.slane %v3381, %v3395
    %v3397 = vlaneseq
    %v3398 = vshrl.u32 %v3397, 7
    %v3399 = vsub.s32 2, %v3398
    %v3400 = vrot.slane %v3381, %v3399
    %v3401 = vlaneseq
    %v3402 = vshrl.u32 %v3401, 7
    %v3403 = vsub.s32 3, %v3402
    %v3404 = vrot.slane %v3381, %v3403
    %v3405 = vlaneseq
    %v3406 = vshrl.u32 %v3405, 7
    %v3407 = vsub.s32 0, %v3406
    %v3408 = vrot.slane %v3382, %v3407
    %v3409 = vlaneseq
    %v3410 = vshrl.u32 %v3409, 7
    %v3411 = vsub.s32 1, %v3410
    %v3412 = vrot.slane %v3382, %v3411
    %v3413 = vlaneseq
    %v3414 = vshrl.u32 %v3413, 7
    %v3415 = vsub.s32 2, %v3414
    %v3416 = vrot.slane %v3382, %v3415
    %v3417 = vlaneseq
    %v3418 = vshrl.u32 %v3417, 7
    %v3419 = vsub.s32 3, %v3418
    %v3420 = vrot.slane %v3382, %v3419
    %v3421 = vlaneseq
    %v3422 = vshrl.u32 %v3421, 7
    %v3423 = vsub.s32 0, %v3422
    %v3424 = vrot.slane %v3383, %v3423
    %v3425 = vlaneseq
    %v3426 = vshrl.u32 %v3425, 7
    %v3427 = vsub.s32 1, %v3426
    %v3428 = vrot.slane %v3383, %v3427
    %v3429 = vlaneseq
    %v3430 = vshrl.u32 %v3429, 7
    %v3431 = vsub.s32 2, %v3430
    %v3432 = vrot.slane %v3383, %v3431
    %v3433 = vlaneseq
    %v3434 = vshrl.u32 %v3433, 7
    %v3435 = vsub.s32 3, %v3434
    %v3436 = vrot.slane %v3383, %v3435
    %v3437 = vlaneseq
    %v3438 = vshrl.u32 %v3437, 7
    %v3439 = vsub.s32 0, %v3438
    %v3440 = vrot.slane %v3384, %v3439
    %v3441 = vlaneseq
    %v3442 = vshrl.u32 %v3441, 7
    %v3443 = vsub.s32 1, %v3442
    %v3444 = vrot.slane %v3384, %v3443
    %v3445 = vlaneseq
    %v3446 = vshrl.u32 %v3445, 7
    %v3447 = vsub.s32 2, %v3446
    %v3448 = vrot.slane %v3384, %v3447
    %v3449 = vlaneseq
    %v3450 = vshrl.u32 %v3449, 7
    %v3451 = vsub.s32 3, %v3450
    %v3452 = vrot.slane %v3384, %v3451
    %v3453 = vlaneseq
    %v3454 = vshrl.u32 %v3453, 7
    %v3455 = vsub.s32 0, %v3454
    %v3456 = vrot.slane %v3385, %v3455
    %v3457 = vlaneseq
    %v3458 = vshrl.u32 %v3457, 7
    %v3459 = vsub.s32 1, %v3458
    %v3460 = vrot.slane %v3385, %v3459
    %v3461 = vlaneseq
    %v3462 = vshrl.u32 %v3461, 7
    %v3463 = vsub.s32 2, %v3462
    %v3464 = vrot.slane %v3385, %v3463
    %v3465 = vlaneseq
    %v3466 = vshrl.u32 %v3465, 7
    %v3467 = vsub.s32 3, %v3466
    %v3468 = vrot.slane %v3385, %v3467
    %v3469 = vlaneseq
    %v3470 = vshrl.u32 %v3469, 7
    %v3471 = vsub.s32 0, %v3470
    %v3472 = vrot.slane %v3386, %v3471
    %v3473 = vlaneseq
    %v3474 = vshrl.u32 %v3473, 7
    %v3475 = vsub.s32 1, %v3474
    %v3476 = vrot.slane %v3386, %v3475
    %v3477 = vlaneseq
    %v3478 = vshrl.u32 %v3477, 7
    %v3479 = vsub.s32 2, %v3478
    %v3480 = vrot.slane %v3386, %v3479
    %v3481 = vlaneseq
    %v3482 = vshrl.u32 %v3481, 7
    %v3483 = vsub.s32 3, %v3482
    %v3484 = vrot.slane %v3386, %v3483
    %v3485 = vlaneseq
    %v3486 = vshrl.u32 %v3485, 7
    %v3487 = vsub.s32 0, %v3486
    %v3488 = vrot.slane %v3387, %v3487
    %v3489 = vlaneseq
    %v3490 = vshrl.u32 %v3489, 7
    %v3491 = vsub.s32 1, %v3490
    %v3492 = vrot.slane %v3387, %v3491
    %v3493 = vlaneseq
    %v3494 = vshrl.u32 %v3493, 7
    %v3495 = vsub.s32 2, %v3494
    %v3496 = vrot.slane %v3387, %v3495
    %v3497 = vlaneseq
    %v3498 = vshrl.u32 %v3497, 7
    %v3499 = vsub.s32 3, %v3498
    %v3500 = vrot.slane %v3387, %v3499
    %v3501 = vlaneseq
    %v3502 = vshrl.u32 %v3501, 7
    %v3503 = vsub.s32 0, %v3502
    %v3504 = vrot.slane %v3388, %v3503
    %v3505 = vlaneseq
    %v3506 = vshrl.u32 %v3505, 7
    %v3507 = vsub.s32 1, %v3506
    %v3508 = vrot.slane %v3388, %v3507
    %v3509 = vlaneseq
    %v3510 = vshrl.u32 %v3509, 7
    %v3511 = vsub.s32 2, %v3510
    %v3512 = vrot.slane %v3388, %v3511
    %v3513 = vlaneseq
    %v3514 = vshrl.u32 %v3513, 7
    %v3515 = vsub.s32 3, %v3514
    %v3516 = vrot.slane %v3388, %v3515
    %vm3517 = vcmp.eq.s32.totalorder %v3392, 1
    %vm3518 = vcmp.eq.s32.totalorder %v3396, 1
    %vm3519 = vcmp.eq.s32.totalorder %v3400, 1
    %vm3520 = vcmp.eq.s32.totalorder %v3404, 1
    %vm3521 = vcmp.eq.s32.totalorder %v3408, 1
    %vm3522 = vcmp.eq.s32.totalorder %v3412, 1
    %vm3523 = vcmp.eq.s32.totalorder %v3416, 1
    %vm3524 = vcmp.eq.s32.totalorder %v3420, 1
    %vm3525 = vcmp.eq.s32.totalorder %v3424, 1
    %vm3526 = vcmp.eq.s32.totalorder %v3428, 1
    %vm3527 = vcmp.eq.s32.totalorder %v3432, 1
    %vm3528 = vcmp.eq.s32.totalorder %v3436, 1
    %vm3529 = vcmp.eq.s32.totalorder %v3440, 1
    %vm3530 = vcmp.eq.s32.totalorder %v3444, 1
    %vm3531 = vcmp.eq.s32.totalorder %v3448, 1
    %vm3532 = vcmp.eq.s32.totalorder %v3452, 1
    %vm3533 = vcmp.eq.s32.totalorder %v3456, 1
    %vm3534 = vcmp.eq.s32.totalorder %v3460, 1
    %vm3535 = vcmp.eq.s32.totalorder %v3464, 1
    %vm3536 = vcmp.eq.s32.totalorder %v3468, 1
    %vm3537 = vcmp.eq.s32.totalorder %v3472, 1
    %vm3538 = vcmp.eq.s32.totalorder %v3476, 1
    %vm3539 = vcmp.eq.s32.totalorder %v3480, 1
    %vm3540 = vcmp.eq.s32.totalorder %v3484, 1
    %vm3541 = vcmp.eq.s32.totalorder %v3488, 1
    %vm3542 = vcmp.eq.s32.totalorder %v3492, 1
    %vm3543 = vcmp.eq.s32.totalorder %v3496, 1
    %vm3544 = vcmp.eq.s32.totalorder %v3500, 1
    %vm3545 = vcmp.eq.s32.totalorder %v3504, 1
    %vm3546 = vcmp.eq.s32.totalorder %v3508, 1
    %vm3547 = vcmp.eq.s32.totalorder %v3512, 1
    %vm3548 = vcmp.eq.s32.totalorder %v3516, 1
    %v3549 = vsel %vm3517, %v3059, -inf
    %v3550 = vsel %vm3518, %v3060, -inf
    %v3551 = vsel %vm3519, %v3061, -inf
    %v3552 = vsel %vm3520, %v3062, -inf
    %v3553 = vsel %vm3517, %v3063, -inf
    %v3554 = vsel %vm3518, %v3064, -inf
    %v3555 = vsel %vm3519, %v3065, -inf
    %v3556 = vsel %vm3520, %v3066, -inf
    %v3557 = vsel %vm3521, %v3059, -inf
    %v3558 = vsel %vm3522, %v3060, -inf
    %v3559 = vsel %vm3523, %v3061, -inf
    %v3560 = vsel %vm3524, %v3062, -inf
    %v3561 = vsel %vm3521, %v3063, -inf
    %v3562 = vsel %vm3522, %v3064, -inf
    %v3563 = vsel %vm3523, %v3065, -inf
    %v3564 = vsel %vm3524, %v3066, -inf
    %v3565 = vsel %vm3525, %v3059, -inf
    %v3566 = vsel %vm3526, %v3060, -inf
    %v3567 = vsel %vm3527, %v3061, -inf
    %v3568 = vsel %vm3528, %v3062, -inf
    %v3569 = vsel %vm3525, %v3063, -inf
    %v3570 = vsel %vm3526, %v3064, -inf
    %v3571 = vsel %vm3527, %v3065, -inf
    %v3572 = vsel %vm3528, %v3066, -inf
    %v3573 = vsel %vm3529, %v3059, -inf
    %v3574 = vsel %vm3530, %v3060, -inf
    %v3575 = vsel %vm3531, %v3061, -inf
    %v3576 = vsel %vm3532, %v3062, -inf
    %v3577 = vsel %vm3529, %v3063, -inf
    %v3578 = vsel %vm3530, %v3064, -inf
    %v3579 = vsel %vm3531, %v3065, -inf
    %v3580 = vsel %vm3532, %v3066, -inf
    %v3581 = vsel %vm3533, %v3059, -inf
    %v3582 = vsel %vm3534, %v3060, -inf
    %v3583 = vsel %vm3535, %v3061, -inf
    %v3584 = vsel %vm3536, %v3062, -inf
    %v3585 = vsel %vm3533, %v3063, -inf
    %v3586 = vsel %vm3534, %v3064, -inf
    %v3587 = vsel %vm3535, %v3065, -inf
    %v3588 = vsel %vm3536, %v3066, -inf
    %v3589 = vsel %vm3537, %v3059, -inf
    %v3590 = vsel %vm3538, %v3060, -inf
    %v3591 = vsel %vm3539, %v3061, -inf
    %v3592 = vsel %vm3540, %v3062, -inf
    %v3593 = vsel %vm3537, %v3063, -inf
    %v3594 = vsel %vm3538, %v3064, -inf
    %v3595 = vsel %vm3539, %v3065, -inf
    %v3596 = vsel %vm3540, %v3066, -inf
    %v3597 = vsel %vm3541, %v3059, -inf
    %v3598 = vsel %vm3542, %v3060, -inf
    %v3599 = vsel %vm3543, %v3061, -inf
    %v3600 = vsel %vm3544, %v3062, -inf
    %v3601 = vsel %vm3541, %v3063, -inf
    %v3602 = vsel %vm3542, %v3064, -inf
    %v3603 = vsel %vm3543, %v3065, -inf
    %v3604 = vsel %vm3544, %v3066, -inf
    %v3605 = vsel %vm3545, %v3059, -inf
    %v3606 = vsel %vm3546, %v3060, -inf
    %v3607 = vsel %vm3547, %v3061, -inf
    %v3608 = vsel %vm3548, %v3062, -inf
    %v3609 = vsel %vm3545, %v3063, -inf
    %v3610 = vsel %vm3546, %v3064, -inf
    %v3611 = vsel %vm3547, %v3065, -inf
    %v3612 = vsel %vm3548, %v3066, -inf
    %v3613 = vmax.f32 %v3549, %v3550
    %v3614 = vmax.f32 %v3613, %v3551
    %v3615 = vmax.f32 %v3614, %v3552
    %3616 = vmax.xlane.f32.xlu0 %v3615
    %v3617 = vpop.xlane.xlu0 %3616
    %v3618 = vmax.f32 %v3553, %v3554
    %v3619 = vmax.f32 %v3618, %v3555
    %v3620 = vmax.f32 %v3619, %v3556
    %3621 = vmax.xlane.f32.xlu0 %v3620
    %v3622 = vpop.xlane.xlu0 %3621
    %v3623 = vmax.f32 %v3557, %v3558
    %v3624 = vmax.f32 %v3623, %v3559
    %v3625 = vmax.f32 %v3624, %v3560
    %3626 = vmax.xlane.f32.xlu0 %v3625
    %v3627 = vpop.xlane.xlu0 %3626
    %v3628 = vmax.f32 %v3561, %v3562
    %v3629 = vmax.f32 %v3628, %v3563
    %v3630 = vmax.f32 %v3629, %v3564
    %3631 = vmax.xlane.f32.xlu0 %v3630
    %v3632 = vpop.xlane.xlu0 %3631
    %v3633 = vmax.f32 %v3565, %v3566
    %v3634 = vmax.f32 %v3633, %v3567
    %v3635 = vmax.f32 %v3634, %v3568
    %3636 = vmax.xlane.f32.xlu0 %v3635
    %v3637 = vpop.xlane.xlu0 %3636
    %v3638 = vmax.f32 %v3569, %v3570
    %v3639 = vmax.f32 %v3638, %v3571
    %v3640 = vmax.f32 %v3639, %v3572
    %3641 = vmax.xlane.f32.xlu0 %v3640
    %v3642 = vpop.xlane.xlu0 %3641
    %v3643 = vmax.f32 %v3573, %v3574
    %v3644 = vmax.f32 %v3643, %v3575
    %v3645 = vmax.f32 %v3644, %v3576
    %3646 = vmax.xlane.f32.xlu0 %v3645
    %v3647 = vpop.xlane.xlu0 %3646
    %v3648 = vmax.f32 %v3577, %v3578
    %v3649 = vmax.f32 %v3648, %v3579
    %v3650 = vmax.f32 %v3649, %v3580
    %3651 = vmax.xlane.f32.xlu0 %v3650
    %v3652 = vpop.xlane.xlu0 %3651
    %v3653 = vmax.f32 %v3581, %v3582
    %v3654 = vmax.f32 %v3653, %v3583
    %v3655 = vmax.f32 %v3654, %v3584
    %3656 = vmax.xlane.f32.xlu0 %v3655
    %v3657 = vpop.xlane.xlu0 %3656
    %v3658 = vmax.f32 %v3585, %v3586
    %v3659 = vmax.f32 %v3658, %v3587
    %v3660 = vmax.f32 %v3659, %v3588
    %3661 = vmax.xlane.f32.xlu0 %v3660
    %v3662 = vpop.xlane.xlu0 %3661
    %v3663 = vmax.f32 %v3589, %v3590
    %v3664 = vmax.f32 %v3663, %v3591
    %v3665 = vmax.f32 %v3664, %v3592
    %3666 = vmax.xlane.f32.xlu0 %v3665
    %v3667 = vpop.xlane.xlu0 %3666
    %v3668 = vmax.f32 %v3593, %v3594
    %v3669 = vmax.f32 %v3668, %v3595
    %v3670 = vmax.f32 %v3669, %v3596
    %3671 = vmax.xlane.f32.xlu0 %v3670
    %v3672 = vpop.xlane.xlu0 %3671
    %v3673 = vmax.f32 %v3597, %v3598
    %v3674 = vmax.f32 %v3673, %v3599
    %v3675 = vmax.f32 %v3674, %v3600
    %3676 = vmax.xlane.f32.xlu0 %v3675
    %v3677 = vpop.xlane.xlu0 %3676
    %v3678 = vmax.f32 %v3601, %v3602
    %v3679 = vmax.f32 %v3678, %v3603
    %v3680 = vmax.f32 %v3679, %v3604
    %3681 = vmax.xlane.f32.xlu0 %v3680
    %v3682 = vpop.xlane.xlu0 %3681
    %v3683 = vmax.f32 %v3605, %v3606
    %v3684 = vmax.f32 %v3683, %v3607
    %v3685 = vmax.f32 %v3684, %v3608
    %3686 = vmax.xlane.f32.xlu0 %v3685
    %v3687 = vpop.xlane.xlu0 %3686
    %v3688 = vmax.f32 %v3609, %v3610
    %v3689 = vmax.f32 %v3688, %v3611
    %v3690 = vmax.f32 %v3689, %v3612
    %3691 = vmax.xlane.f32.xlu0 %v3690
    %v3692 = vpop.xlane.xlu0 %3691
    %v3693 = vfloor.f32 %v3078
    %3695 = vrot.lane.b32.xlu0 %v3693, 126
    %v3696 = vpop.permute.xlu0 %3695
    %v3698 = vadd.f32 %v3008, %v3696
    %v3699 = vmax.f32 %v3698, 0.0
    %v3700 = vmin.f32 %v3699, 15.0
    %v3701 = vmul.f32 %v3015, 2.0
    %v3702 = vmul.f32 %v3701, %v3068
    %v3703 = vceil.f32 %v3702
    %3705 = vrot.lane.b32.xlu0 %v3703, 126
    %v3706 = vpop.permute.xlu0 %3705
    %v3708 = vadd.f32 %v3008, %v3706
    %v3709 = vadd.f32 %v3700, 1.0
    %v3710 = vmax.f32 %v3709, %v3708
    %v3711 = vmin.f32 %v3710, 16.0
    %3713 = vset.pattern.permute.xlu0 1
    %3714 = vperm.xlu0 %3713, %v3700
    %v3715 = vpop.permute.xlu0 %3714
    %vm3717 = vcmp.ge.f32.partialorder %v3055, %v3715
    %vm3718 = vcmp.ge.f32.partialorder %v3056, %v3715
    %vm3719 = vcmp.ge.f32.partialorder %v3057, %v3715
    %vm3720 = vcmp.ge.f32.partialorder %v3058, %v3715
    %vm3721 = vmand %vm3118, %vm3717
    %vm3722 = vmand %vm3119, %vm3718
    %vm3723 = vmand %vm3120, %vm3719
    %vm3724 = vmand %vm3121, %vm3720
    %3726 = vset.pattern.permute.xlu0 1
    %3727 = vperm.xlu0 %3726, %v3711
    %v3728 = vpop.permute.xlu0 %3727
    %vm3730 = vcmp.lt.f32.partialorder %v3055, %v3728
    %vm3731 = vcmp.lt.f32.partialorder %v3056, %v3728
    %vm3732 = vcmp.lt.f32.partialorder %v3057, %v3728
    %vm3733 = vcmp.lt.f32.partialorder %v3058, %v3728
    %vm3734 = vmand %vm3721, %vm3730
    %vm3735 = vmand %vm3722, %vm3731
    %vm3736 = vmand %vm3723, %vm3732
    %vm3737 = vmand %vm3724, %vm3733
    %v3738 = vsel %vm3734, 1, 0
    %v3739 = vsel %vm3735, 1, 0
    %v3740 = vsel %vm3736, 1, 0
    %v3741 = vsel %vm3737, 1, 0
    %v3742 = vcvt.s32.f32 %v3738
    %v3743 = vcvt.s32.f32 %v3739
    %v3744 = vcvt.s32.f32 %v3740
    %v3745 = vcvt.s32.f32 %v3741
    %v3746 = vadd.f32 %v3742, %v3743
    %v3747 = vadd.f32 %v3746, %v3744
    %v3748 = vadd.f32 %v3747, %v3745
    %3749 = vadd.xlane.f32.xlu0 %v3748
    %v3750 = vpop.xlane.xlu0 %3749
    %v3751 = vmax.f32 %v3750, 1.0
    %v3752 = vrcp.pop %v3751
    %v3753 = vmul.f32 %v3742, %v3752
    %v3754 = vmul.f32 %v3743, %v3752
    %v3755 = vmul.f32 %v3744, %v3752
    %v3756 = vmul.f32 %v3745, %v3752
    %3757 = vmatprep.subr.mxu0 0.0
    %3758 = vmatpush1.msra.mxu0 %v2942
    %3759 = vmatprep.subr.mxu0 0.0
    %3760 = vmatpush1.msra.mxu0 %v2943
    %3761 = vmatprep.subr.mxu0 0.0
    %3762 = vmatpush1.msra.mxu0 %v2944
    %3763 = vmatprep.subr.mxu0 0.0
    %3764 = vmatpush1.msra.mxu0 %v2945
    %3765 = vmatprep.subr.mxu0 0.0
    %3766 = vmatpush1.msra.mxu0 %v2946
    %3767 = vmatprep.subr.mxu0 0.0
    %3768 = vmatpush1.msra.mxu0 %v2947
    %3769 = vmatprep.subr.mxu0 0.0
    %3770 = vmatpush1.msra.mxu0 %v2948
    %3771 = vmatprep.subr.mxu0 0.0
    %3772 = vmatpush1.msra.mxu0 %v2949
    %3773 = vmatprep.subr.mxu0 0.0
    %3774 = vmatpush1.msra.mxu0 %v2950
    %3775 = vmatprep.subr.mxu0 0.0
    %3776 = vmatpush1.msra.mxu0 %v2951
    %3777 = vmatprep.subr.mxu0 0.0
    %3778 = vmatpush1.msra.mxu0 %v2952
    %3779 = vmatprep.subr.mxu0 0.0
    %3780 = vmatpush1.msra.mxu0 %v2953
    %3781 = vmatprep.subr.mxu0 0.0
    %3782 = vmatpush1.msra.mxu0 %v2954
    %3783 = vmatprep.subr.mxu0 0.0
    %3784 = vmatpush1.msra.mxu0 %v2955
    %3785 = vmatprep.subr.mxu0 0.0
    %3786 = vmatpush1.msra.mxu0 %v2956
    %3787 = vmatprep.subr.mxu0 0.0
    %3788 = vmatpush1.msra.mxu0 %v2957
    %3789 = vmatprep.subr.mxu0 0.0
    %3790 = vmatpush1.msra.mxu0 %v2958
    %3791 = vmatprep.subr.mxu0 0.0
    %3792 = vmatpush1.msra.mxu0 %v2959
    %3793 = vmatprep.subr.mxu0 0.0
    %3794 = vmatpush1.msra.mxu0 %v2960
    %3795 = vmatprep.subr.mxu0 0.0
    %3796 = vmatpush1.msra.mxu0 %v2961
    %3797 = vmatprep.subr.mxu0 0.0
    %3798 = vmatpush1.msra.mxu0 %v2962
    %3799 = vmatprep.subr.mxu0 0.0
    %3800 = vmatpush1.msra.mxu0 %v2963
    %3801 = vmatprep.subr.mxu0 0.0
    %3802 = vmatpush1.msra.mxu0 %v2964
    %3803 = vmatprep.subr.mxu0 0.0
    %3804 = vmatpush1.msra.mxu0 %v2965
    %3805 = vmatprep.subr.mxu0 0.0
    %3806 = vmatpush1.msra.mxu0 %v2966
    %3807 = vmatprep.subr.mxu0 0.0
    %3808 = vmatpush1.msra.mxu0 %v2967
    %3809 = vmatprep.subr.mxu0 0.0
    %3810 = vmatpush1.msra.mxu0 %v2968
    %3811 = vmatprep.subr.mxu0 0.0
    %3812 = vmatpush1.msra.mxu0 %v2969
    %3813 = vmatprep.subr.mxu0 0.0
    %3814 = vmatpush1.msra.mxu0 %v2970
    %3815 = vmatprep.subr.mxu0 0.0
    %3816 = vmatpush1.msra.mxu0 %v2971
    %3817 = vmatprep.subr.mxu0 0.0
    %3818 = vmatpush1.msra.mxu0 %v2972
    %3819 = vmatprep.subr.mxu0 0.0
    %3820 = vmatpush1.msra.mxu0 %v2973
    %3821 = vmatprep.mubr.f32.mxu0 %v3754
    %3822 = vmatmul.mubr.f32.gmra.mrb[0].mxu0 %v3753
    %v3823 = vpop.f32.mrb[0].mxu0
    %v3824 = vadd.f32 0.0, %v3823
    %v3825 = vpop.f32.mrb[0].mxu0
    %3826 = vdwg.mxu0
    %3827 = vmatprep.subr.mxu0 0.0
    %3828 = vmatpush1.msra.mxu0 %v2974
    %3829 = vmatprep.subr.mxu0 0.0
    %3830 = vmatpush1.msra.mxu0 %v2975
    %3831 = vmatprep.subr.mxu0 0.0
    %3832 = vmatpush1.msra.mxu0 %v2976
    %3833 = vmatprep.subr.mxu0 0.0
    %3834 = vmatpush1.msra.mxu0 %v2977
    %3835 = vmatprep.subr.mxu0 0.0
    %3836 = vmatpush1.msra.mxu0 %v2978
    %3837 = vmatprep.subr.mxu0 0.0
    %3838 = vmatpush1.msra.mxu0 %v2979
    %3839 = vmatprep.subr.mxu0 0.0
    %3840 = vmatpush1.msra.mxu0 %v2980
    %3841 = vmatprep.subr.mxu0 0.0
    %3842 = vmatpush1.msra.mxu0 %v2981
    %3843 = vmatprep.subr.mxu0 0.0
    %3844 = vmatpush1.msra.mxu0 %v2982
    %3845 = vmatprep.subr.mxu0 0.0
    %3846 = vmatpush1.msra.mxu0 %v2983
    %3847 = vmatprep.subr.mxu0 0.0
    %3848 = vmatpush1.msra.mxu0 %v2984
    %3849 = vmatprep.subr.mxu0 0.0
    %3850 = vmatpush1.msra.mxu0 %v2985
    %3851 = vmatprep.subr.mxu0 0.0
    %3852 = vmatpush1.msra.mxu0 %v2986
    %3853 = vmatprep.subr.mxu0 0.0
    %3854 = vmatpush1.msra.mxu0 %v2987
    %3855 = vmatprep.subr.mxu0 0.0
    %3856 = vmatpush1.msra.mxu0 %v2988
    %3857 = vmatprep.subr.mxu0 0.0
    %3858 = vmatpush1.msra.mxu0 %v2989
    %3859 = vmatprep.subr.mxu0 0.0
    %3860 = vmatpush1.msra.mxu0 %v2990
    %3861 = vmatprep.subr.mxu0 0.0
    %3862 = vmatpush1.msra.mxu0 %v2991
    %3863 = vmatprep.subr.mxu0 0.0
    %3864 = vmatpush1.msra.mxu0 %v2992
    %3865 = vmatprep.subr.mxu0 0.0
    %3866 = vmatpush1.msra.mxu0 %v2993
    %3867 = vmatprep.subr.mxu0 0.0
    %3868 = vmatpush1.msra.mxu0 %v2994
    %3869 = vmatprep.subr.mxu0 0.0
    %3870 = vmatpush1.msra.mxu0 %v2995
    %3871 = vmatprep.subr.mxu0 0.0
    %3872 = vmatpush1.msra.mxu0 %v2996
    %3873 = vmatprep.subr.mxu0 0.0
    %3874 = vmatpush1.msra.mxu0 %v2997
    %3875 = vmatprep.subr.mxu0 0.0
    %3876 = vmatpush1.msra.mxu0 %v2998
    %3877 = vmatprep.subr.mxu0 0.0
    %3878 = vmatpush1.msra.mxu0 %v2999
    %3879 = vmatprep.subr.mxu0 0.0
    %3880 = vmatpush1.msra.mxu0 %v3000
    %3881 = vmatprep.subr.mxu0 0.0
    %3882 = vmatpush1.msra.mxu0 %v3001
    %3883 = vmatprep.subr.mxu0 0.0
    %3884 = vmatpush1.msra.mxu0 %v3002
    %3885 = vmatprep.subr.mxu0 0.0
    %3886 = vmatpush1.msra.mxu0 %v3003
    %3887 = vmatprep.subr.mxu0 0.0
    %3888 = vmatpush1.msra.mxu0 %v3004
    %3889 = vmatprep.subr.mxu0 0.0
    %3890 = vmatpush1.msra.mxu0 %v3005
    %3891 = vmatprep.mubr.f32.mxu0 %v3756
    %3892 = vmatmul.mubr.f32.gmra.mrb[0].mxu0 %v3755
    %v3893 = vpop.f32.mrb[0].mxu0
    %v3894 = vadd.f32 %v3824, %v3893
    %v3895 = vpop.f32.mrb[0].mxu0
    %3896 = vdwg.mxu0
    %v3897 = vcombine.low %v3738, %v3739
    %v3898 = vcombine.high %v3738, %v3739
    %v3899 = vcombine.low %v3740, %v3741
    %v3900 = vcombine.high %v3740, %v3741
    %v3902 = vunpack.c.l.s4 1966171168
    %v3903 = vunpack.c.0.s8 %v3902
    %v3904 = vlaneseq
    %v3905 = vshrl.u32 %v3904, 7
    %v3906 = vsub.s32 %v3903, %v3905
    %v3907 = vrot.slane %v3897, %v3906
    %v3909 = vunpack.c.l.s4 1966171168
    %v3910 = vunpack.c.0.s8 %v3909
    %v3911 = vlaneseq
    %v3912 = vshrl.u32 %v3911, 7
    %v3913 = vsub.s32 %v3910, %v3912
    %v3914 = vrot.slane %v3898, %v3913
    %v3916 = vunpack.c.l.s4 1966171168
    %v3917 = vunpack.c.0.s8 %v3916
    %v3918 = vlaneseq
    %v3919 = vshrl.u32 %v3918, 7
    %v3920 = vsub.s32 %v3917, %v3919
    %v3921 = vrot.slane %v3899, %v3920
    %v3923 = vunpack.c.l.s4 1966171168
    %v3924 = vunpack.c.0.s8 %v3923
    %v3925 = vlaneseq
    %v3926 = vshrl.u32 %v3925, 7
    %v3927 = vsub.s32 %v3924, %v3926
    %v3928 = vrot.slane %v3900, %v3927
    %v3929 = vcombine.low %v3907, %v3921
    %v3930 = vcombine.high %v3907, %v3921
    %v3931 = vcombine.low %v3914, %v3928
    %v3932 = vcombine.high %v3914, %v3928
    %v3934 = vunpack.c.l.s4 1966171168
    %v3935 = vunpack.c.0.s8 %v3934
    %v3936 = vlaneseq
    %v3937 = vshrl.u32 %v3936, 7
    %v3938 = vsub.s32 %v3935, %v3937
    %v3939 = vrot.slane %v3929, %v3938
    %v3941 = vunpack.c.l.s4 1966171168
    %v3942 = vunpack.c.0.s8 %v3941
    %v3943 = vlaneseq
    %v3944 = vshrl.u32 %v3943, 7
    %v3945 = vsub.s32 %v3942, %v3944
    %v3946 = vrot.slane %v3931, %v3945
    %v3948 = vunpack.c.l.s4 1966171168
    %v3949 = vunpack.c.0.s8 %v3948
    %v3950 = vlaneseq
    %v3951 = vshrl.u32 %v3950, 7
    %v3952 = vsub.s32 %v3949, %v3951
    %v3953 = vrot.slane %v3930, %v3952
    %v3955 = vunpack.c.l.s4 1966171168
    %v3956 = vunpack.c.0.s8 %v3955
    %v3957 = vlaneseq
    %v3958 = vshrl.u32 %v3957, 7
    %v3959 = vsub.s32 %v3956, %v3958
    %v3960 = vrot.slane %v3932, %v3959
    %v3961 = vcombine.high %v3939, %v3939
    %v3962 = vcombine.high %v3946, %v3946
    %v3963 = vcombine.high %v3953, %v3953
    %v3964 = vcombine.high %v3960, %v3960
    %vm3965 = vcmp.ne.s32.totalorder %v3939, 0
    %vm3966 = vcmp.ne.s32.totalorder %v3953, 0
    %vm3967 = vcmp.ne.s32.totalorder %v3961, 0
    %vm3968 = vcmp.ne.s32.totalorder %v3963, 0
    %vm3969 = vcmp.ne.s32.totalorder %v3946, 0
    %vm3970 = vcmp.ne.s32.totalorder %v3960, 0
    %vm3971 = vcmp.ne.s32.totalorder %v3962, 0
    %vm3972 = vcmp.ne.s32.totalorder %v3964, 0
    %v3973 = vsel %vm3965, 1, 0
    %v3974 = vsel %vm3966, 1, 0
    %v3975 = vsel %vm3967, 1, 0
    %v3976 = vsel %vm3968, 1, 0
    %v3977 = vsel %vm3969, 1, 0
    %v3978 = vsel %vm3970, 1, 0
    %v3979 = vsel %vm3971, 1, 0
    %v3980 = vsel %vm3972, 1, 0
    %v3981 = vlaneseq
    %v3982 = vshrl.u32 %v3981, 7
    %v3983 = vsub.s32 0, %v3982
    %v3984 = vrot.slane %v3973, %v3983
    %v3985 = vlaneseq
    %v3986 = vshrl.u32 %v3985, 7
    %v3987 = vsub.s32 1, %v3986
    %v3988 = vrot.slane %v3973, %v3987
    %v3989 = vlaneseq
    %v3990 = vshrl.u32 %v3989, 7
    %v3991 = vsub.s32 2, %v3990
    %v3992 = vrot.slane %v3973, %v3991
    %v3993 = vlaneseq
    %v3994 = vshrl.u32 %v3993, 7
    %v3995 = vsub.s32 3, %v3994
    %v3996 = vrot.slane %v3973, %v3995
    %v3997 = vlaneseq
    %v3998 = vshrl.u32 %v3997, 7
    %v3999 = vsub.s32 0, %v3998
    %v4000 = vrot.slane %v3974, %v3999
    %v4001 = vlaneseq
    %v4002 = vshrl.u32 %v4001, 7
    %v4003 = vsub.s32 1, %v4002
    %v4004 = vrot.slane %v3974, %v4003
    %v4005 = vlaneseq
    %v4006 = vshrl.u32 %v4005, 7
    %v4007 = vsub.s32 2, %v4006
    %v4008 = vrot.slane %v3974, %v4007
    %v4009 = vlaneseq
    %v4010 = vshrl.u32 %v4009, 7
    %v4011 = vsub.s32 3, %v4010
    %v4012 = vrot.slane %v3974, %v4011
    %v4013 = vlaneseq
    %v4014 = vshrl.u32 %v4013, 7
    %v4015 = vsub.s32 0, %v4014
    %v4016 = vrot.slane %v3975, %v4015
    %v4017 = vlaneseq
    %v4018 = vshrl.u32 %v4017, 7
    %v4019 = vsub.s32 1, %v4018
    %v4020 = vrot.slane %v3975, %v4019
    %v4021 = vlaneseq
    %v4022 = vshrl.u32 %v4021, 7
    %v4023 = vsub.s32 2, %v4022
    %v4024 = vrot.slane %v3975, %v4023
    %v4025 = vlaneseq
    %v4026 = vshrl.u32 %v4025, 7
    %v4027 = vsub.s32 3, %v4026
    %v4028 = vrot.slane %v3975, %v4027
    %v4029 = vlaneseq
    %v4030 = vshrl.u32 %v4029, 7
    %v4031 = vsub.s32 0, %v4030
    %v4032 = vrot.slane %v3976, %v4031
    %v4033 = vlaneseq
    %v4034 = vshrl.u32 %v4033, 7
    %v4035 = vsub.s32 1, %v4034
    %v4036 = vrot.slane %v3976, %v4035
    %v4037 = vlaneseq
    %v4038 = vshrl.u32 %v4037, 7
    %v4039 = vsub.s32 2, %v4038
    %v4040 = vrot.slane %v3976, %v4039
    %v4041 = vlaneseq
    %v4042 = vshrl.u32 %v4041, 7
    %v4043 = vsub.s32 3, %v4042
    %v4044 = vrot.slane %v3976, %v4043
    %v4045 = vlaneseq
    %v4046 = vshrl.u32 %v4045, 7
    %v4047 = vsub.s32 0, %v4046
    %v4048 = vrot.slane %v3977, %v4047
    %v4049 = vlaneseq
    %v4050 = vshrl.u32 %v4049, 7
    %v4051 = vsub.s32 1, %v4050
    %v4052 = vrot.slane %v3977, %v4051
    %v4053 = vlaneseq
    %v4054 = vshrl.u32 %v4053, 7
    %v4055 = vsub.s32 2, %v4054
    %v4056 = vrot.slane %v3977, %v4055
    %v4057 = vlaneseq
    %v4058 = vshrl.u32 %v4057, 7
    %v4059 = vsub.s32 3, %v4058
    %v4060 = vrot.slane %v3977, %v4059
    %v4061 = vlaneseq
    %v4062 = vshrl.u32 %v4061, 7
    %v4063 = vsub.s32 0, %v4062
    %v4064 = vrot.slane %v3978, %v4063
    %v4065 = vlaneseq
    %v4066 = vshrl.u32 %v4065, 7
    %v4067 = vsub.s32 1, %v4066
    %v4068 = vrot.slane %v3978, %v4067
    %v4069 = vlaneseq
    %v4070 = vshrl.u32 %v4069, 7
    %v4071 = vsub.s32 2, %v4070
    %v4072 = vrot.slane %v3978, %v4071
    %v4073 = vlaneseq
    %v4074 = vshrl.u32 %v4073, 7
    %v4075 = vsub.s32 3, %v4074
    %v4076 = vrot.slane %v3978, %v4075
    %v4077 = vlaneseq
    %v4078 = vshrl.u32 %v4077, 7
    %v4079 = vsub.s32 0, %v4078
    %v4080 = vrot.slane %v3979, %v4079
    %v4081 = vlaneseq
    %v4082 = vshrl.u32 %v4081, 7
    %v4083 = vsub.s32 1, %v4082
    %v4084 = vrot.slane %v3979, %v4083
    %v4085 = vlaneseq
    %v4086 = vshrl.u32 %v4085, 7
    %v4087 = vsub.s32 2, %v4086
    %v4088 = vrot.slane %v3979, %v4087
    %v4089 = vlaneseq
    %v4090 = vshrl.u32 %v4089, 7
    %v4091 = vsub.s32 3, %v4090
    %v4092 = vrot.slane %v3979, %v4091
    %v4093 = vlaneseq
    %v4094 = vshrl.u32 %v4093, 7
    %v4095 = vsub.s32 0, %v4094
    %v4096 = vrot.slane %v3980, %v4095
    %v4097 = vlaneseq
    %v4098 = vshrl.u32 %v4097, 7
    %v4099 = vsub.s32 1, %v4098
    %v4100 = vrot.slane %v3980, %v4099
    %v4101 = vlaneseq
    %v4102 = vshrl.u32 %v4101, 7
    %v4103 = vsub.s32 2, %v4102
    %v4104 = vrot.slane %v3980, %v4103
    %v4105 = vlaneseq
    %v4106 = vshrl.u32 %v4105, 7
    %v4107 = vsub.s32 3, %v4106
    %v4108 = vrot.slane %v3980, %v4107
    %vm4109 = vcmp.eq.s32.totalorder %v3984, 1
    %vm4110 = vcmp.eq.s32.totalorder %v3988, 1
    %vm4111 = vcmp.eq.s32.totalorder %v3992, 1
    %vm4112 = vcmp.eq.s32.totalorder %v3996, 1
    %vm4113 = vcmp.eq.s32.totalorder %v4000, 1
    %vm4114 = vcmp.eq.s32.totalorder %v4004, 1
    %vm4115 = vcmp.eq.s32.totalorder %v4008, 1
    %vm4116 = vcmp.eq.s32.totalorder %v4012, 1
    %vm4117 = vcmp.eq.s32.totalorder %v4016, 1
    %vm4118 = vcmp.eq.s32.totalorder %v4020, 1
    %vm4119 = vcmp.eq.s32.totalorder %v4024, 1
    %vm4120 = vcmp.eq.s32.totalorder %v4028, 1
    %vm4121 = vcmp.eq.s32.totalorder %v4032, 1
    %vm4122 = vcmp.eq.s32.totalorder %v4036, 1
    %vm4123 = vcmp.eq.s32.totalorder %v4040, 1
    %vm4124 = vcmp.eq.s32.totalorder %v4044, 1
    %vm4125 = vcmp.eq.s32.totalorder %v4048, 1
    %vm4126 = vcmp.eq.s32.totalorder %v4052, 1
    %vm4127 = vcmp.eq.s32.totalorder %v4056, 1
    %vm4128 = vcmp.eq.s32.totalorder %v4060, 1
    %vm4129 = vcmp.eq.s32.totalorder %v4064, 1
    %vm4130 = vcmp.eq.s32.totalorder %v4068, 1
    %vm4131 = vcmp.eq.s32.totalorder %v4072, 1
    %vm4132 = vcmp.eq.s32.totalorder %v4076, 1
    %vm4133 = vcmp.eq.s32.totalorder %v4080, 1
    %vm4134 = vcmp.eq.s32.totalorder %v4084, 1
    %vm4135 = vcmp.eq.s32.totalorder %v4088, 1
    %vm4136 = vcmp.eq.s32.totalorder %v4092, 1
    %vm4137 = vcmp.eq.s32.totalorder %v4096, 1
    %vm4138 = vcmp.eq.s32.totalorder %v4100, 1
    %vm4139 = vcmp.eq.s32.totalorder %v4104, 1
    %vm4140 = vcmp.eq.s32.totalorder %v4108, 1
    %v4141 = vsel %vm4109, %v3059, -inf
    %v4142 = vsel %vm4110, %v3060, -inf
    %v4143 = vsel %vm4111, %v3061, -inf
    %v4144 = vsel %vm4112, %v3062, -inf
    %v4145 = vsel %vm4109, %v3063, -inf
    %v4146 = vsel %vm4110, %v3064, -inf
    %v4147 = vsel %vm4111, %v3065, -inf
    %v4148 = vsel %vm4112, %v3066, -inf
    %v4149 = vsel %vm4113, %v3059, -inf
    %v4150 = vsel %vm4114, %v3060, -inf
    %v4151 = vsel %vm4115, %v3061, -inf
    %v4152 = vsel %vm4116, %v3062, -inf
    %v4153 = vsel %vm4113, %v3063, -inf
    %v4154 = vsel %vm4114, %v3064, -inf
    %v4155 = vsel %vm4115, %v3065, -inf
    %v4156 = vsel %vm4116, %v3066, -inf
    %v4157 = vsel %vm4117, %v3059, -inf
    %v4158 = vsel %vm4118, %v3060, -inf
    %v4159 = vsel %vm4119, %v3061, -inf
    %v4160 = vsel %vm4120, %v3062, -inf
    %v4161 = vsel %vm4117, %v3063, -inf
    %v4162 = vsel %vm4118, %v3064, -inf
    %v4163 = vsel %vm4119, %v3065, -inf
    %v4164 = vsel %vm4120, %v3066, -inf
    %v4165 = vsel %vm4121, %v3059, -inf
    %v4166 = vsel %vm4122, %v3060, -inf
    %v4167 = vsel %vm4123, %v3061, -inf
    %v4168 = vsel %vm4124, %v3062, -inf
    %v4169 = vsel %vm4121, %v3063, -inf
    %v4170 = vsel %vm4122, %v3064, -inf
    %v4171 = vsel %vm4123, %v3065, -inf
    %v4172 = vsel %vm4124, %v3066, -inf
    %v4173 = vsel %vm4125, %v3059, -inf
    %v4174 = vsel %vm4126, %v3060, -inf
    %v4175 = vsel %vm4127, %v3061, -inf
    %v4176 = vsel %vm4128, %v3062, -inf
    %v4177 = vsel %vm4125, %v3063, -inf
    %v4178 = vsel %vm4126, %v3064, -inf
    %v4179 = vsel %vm4127, %v3065, -inf
    %v4180 = vsel %vm4128, %v3066, -inf
    %v4181 = vsel %vm4129, %v3059, -inf
    %v4182 = vsel %vm4130, %v3060, -inf
    %v4183 = vsel %vm4131, %v3061, -inf
    %v4184 = vsel %vm4132, %v3062, -inf
    %v4185 = vsel %vm4129, %v3063, -inf
    %v4186 = vsel %vm4130, %v3064, -inf
    %v4187 = vsel %vm4131, %v3065, -inf
    %v4188 = vsel %vm4132, %v3066, -inf
    %v4189 = vsel %vm4133, %v3059, -inf
    %v4190 = vsel %vm4134, %v3060, -inf
    %v4191 = vsel %vm4135, %v3061, -inf
    %v4192 = vsel %vm4136, %v3062, -inf
    %v4193 = vsel %vm4133, %v3063, -inf
    %v4194 = vsel %vm4134, %v3064, -inf
    %v4195 = vsel %vm4135, %v3065, -inf
    %v4196 = vsel %vm4136, %v3066, -inf
    %v4197 = vsel %vm4137, %v3059, -inf
    %v4198 = vsel %vm4138, %v3060, -inf
    %v4199 = vsel %vm4139, %v3061, -inf
    %v4200 = vsel %vm4140, %v3062, -inf
    %v4201 = vsel %vm4137, %v3063, -inf
    %v4202 = vsel %vm4138, %v3064, -inf
    %v4203 = vsel %vm4139, %v3065, -inf
    %v4204 = vsel %vm4140, %v3066, -inf
    %v4205 = vmax.f32 %v4141, %v4142
    %v4206 = vmax.f32 %v4205, %v4143
    %v4207 = vmax.f32 %v4206, %v4144
    %4208 = vmax.xlane.f32.xlu0 %v4207
    %v4209 = vpop.xlane.xlu0 %4208
    %v4210 = vmax.f32 %v4145, %v4146
    %v4211 = vmax.f32 %v4210, %v4147
    %v4212 = vmax.f32 %v4211, %v4148
    %4213 = vmax.xlane.f32.xlu0 %v4212
    %v4214 = vpop.xlane.xlu0 %4213
    %v4215 = vmax.f32 %v4149, %v4150
    %v4216 = vmax.f32 %v4215, %v4151
    %v4217 = vmax.f32 %v4216, %v4152
    %4218 = vmax.xlane.f32.xlu0 %v4217
    %v4219 = vpop.xlane.xlu0 %4218
    %v4220 = vmax.f32 %v4153, %v4154
    %v4221 = vmax.f32 %v4220, %v4155
    %v4222 = vmax.f32 %v4221, %v4156
    %4223 = vmax.xlane.f32.xlu0 %v4222
    %v4224 = vpop.xlane.xlu0 %4223
    %v4225 = vmax.f32 %v4157, %v4158
    %v4226 = vmax.f32 %v4225, %v4159
    %v4227 = vmax.f32 %v4226, %v4160
    %4228 = vmax.xlane.f32.xlu0 %v4227
    %v4229 = vpop.xlane.xlu0 %4228
    %v4230 = vmax.f32 %v4161, %v4162
    %v4231 = vmax.f32 %v4230, %v4163
    %v4232 = vmax.f32 %v4231, %v4164
    %4233 = vmax.xlane.f32.xlu0 %v4232
    %v4234 = vpop.xlane.xlu0 %4233
    %v4235 = vmax.f32 %v4165, %v4166
    %v4236 = vmax.f32 %v4235, %v4167
    %v4237 = vmax.f32 %v4236, %v4168
    %4238 = vmax.xlane.f32.xlu0 %v4237
    %v4239 = vpop.xlane.xlu0 %4238
    %v4240 = vmax.f32 %v4169, %v4170
    %v4241 = vmax.f32 %v4240, %v4171
    %v4242 = vmax.f32 %v4241, %v4172
    %4243 = vmax.xlane.f32.xlu0 %v4242
    %v4244 = vpop.xlane.xlu0 %4243
    %v4245 = vmax.f32 %v4173, %v4174
    %v4246 = vmax.f32 %v4245, %v4175
    %v4247 = vmax.f32 %v4246, %v4176
    %4248 = vmax.xlane.f32.xlu0 %v4247
    %v4249 = vpop.xlane.xlu0 %4248
    %v4250 = vmax.f32 %v4177, %v4178
    %v4251 = vmax.f32 %v4250, %v4179
    %v4252 = vmax.f32 %v4251, %v4180
    %4253 = vmax.xlane.f32.xlu0 %v4252
    %v4254 = vpop.xlane.xlu0 %4253
    %v4255 = vmax.f32 %v4181, %v4182
    %v4256 = vmax.f32 %v4255, %v4183
    %v4257 = vmax.f32 %v4256, %v4184
    %4258 = vmax.xlane.f32.xlu0 %v4257
    %v4259 = vpop.xlane.xlu0 %4258
    %v4260 = vmax.f32 %v4185, %v4186
    %v4261 = vmax.f32 %v4260, %v4187
    %v4262 = vmax.f32 %v4261, %v4188
    %4263 = vmax.xlane.f32.xlu0 %v4262
    %v4264 = vpop.xlane.xlu0 %4263
    %v4265 = vmax.f32 %v4189, %v4190
    %v4266 = vmax.f32 %v4265, %v4191
    %v4267 = vmax.f32 %v4266, %v4192
    %4268 = vmax.xlane.f32.xlu0 %v4267
    %v4269 = vpop.xlane.xlu0 %4268
    %v4270 = vmax.f32 %v4193, %v4194
    %v4271 = vmax.f32 %v4270, %v4195
    %v4272 = vmax.f32 %v4271, %v4196
    %4273 = vmax.xlane.f32.xlu0 %v4272
    %v4274 = vpop.xlane.xlu0 %4273
    %v4275 = vmax.f32 %v4197, %v4198
    %v4276 = vmax.f32 %v4275, %v4199
    %v4277 = vmax.f32 %v4276, %v4200
    %4278 = vmax.xlane.f32.xlu0 %v4277
    %v4279 = vpop.xlane.xlu0 %4278
    %v4280 = vmax.f32 %v4201, %v4202
    %v4281 = vmax.f32 %v4280, %v4203
    %v4282 = vmax.f32 %v4281, %v4204
    %4283 = vmax.xlane.f32.xlu0 %v4282
    %v4284 = vpop.xlane.xlu0 %4283
    %4285 = vset.pattern.permute.xlu0 2
    %4286 = vperm.xlu0 %4285, %v3700
    %v4287 = vpop.permute.xlu0 %4286
    %vm4289 = vcmp.ge.f32.partialorder %v3047, %v4287
    %vm4290 = vcmp.ge.f32.partialorder %v3048, %v4287
    %vm4291 = vcmp.ge.f32.partialorder %v3049, %v4287
    %vm4292 = vcmp.ge.f32.partialorder %v3050, %v4287
    %vm4293 = vmand %vm3092, %vm4289
    %vm4294 = vmand %vm3093, %vm4290
    %vm4295 = vmand %vm3094, %vm4291
    %vm4296 = vmand %vm3095, %vm4292
    %4297 = vset.pattern.permute.xlu0 2
    %4298 = vperm.xlu0 %4297, %v3711
    %v4299 = vpop.permute.xlu0 %4298
    %vm4301 = vcmp.lt.f32.partialorder %v3047, %v4299
    %vm4302 = vcmp.lt.f32.partialorder %v3048, %v4299
    %vm4303 = vcmp.lt.f32.partialorder %v3049, %v4299
    %vm4304 = vcmp.lt.f32.partialorder %v3050, %v4299
    %vm4305 = vmand %vm4293, %vm4301
    %vm4306 = vmand %vm4294, %vm4302
    %vm4307 = vmand %vm4295, %vm4303
    %vm4308 = vmand %vm4296, %vm4304
    %vm4309 = vmand %vm4305, %vm3126
    %vm4310 = vmand %vm4306, %vm3127
    %vm4311 = vmand %vm4307, %vm3128
    %vm4312 = vmand %vm4308, %vm3129
    %vm4313 = vmand %vm4309, %vm3138
    %vm4314 = vmand %vm4310, %vm3139
    %vm4315 = vmand %vm4311, %vm3140
    %vm4316 = vmand %vm4312, %vm3141
    %v4317 = vsel %vm4313, 1, 0
    %v4318 = vsel %vm4314, 1, 0
    %v4319 = vsel %vm4315, 1, 0
    %v4320 = vsel %vm4316, 1, 0
    %v4321 = vcvt.s32.f32 %v4317
    %v4322 = vcvt.s32.f32 %v4318
    %v4323 = vcvt.s32.f32 %v4319
    %v4324 = vcvt.s32.f32 %v4320
    %v4325 = vadd.f32 %v4321, %v4322
    %v4326 = vadd.f32 %v4325, %v4323
    %v4327 = vadd.f32 %v4326, %v4324
    %4328 = vadd.xlane.f32.xlu0 %v4327
    %v4329 = vpop.xlane.xlu0 %4328
    %v4330 = vmax.f32 %v4329, 1.0
    %v4331 = vrcp.pop %v4330
    %v4332 = vmul.f32 %v4321, %v4331
    %v4333 = vmul.f32 %v4322, %v4331
    %v4334 = vmul.f32 %v4323, %v4331
    %v4335 = vmul.f32 %v4324, %v4331
    %4336 = vmatprep.subr.mxu0 0.0
    %4337 = vmatpush1.msra.mxu0 %v2942
    %4338 = vmatprep.subr.mxu0 0.0
    %4339 = vmatpush1.msra.mxu0 %v2943
    %4340 = vmatprep.subr.mxu0 0.0
    %4341 = vmatpush1.msra.mxu0 %v2944
    %4342 = vmatprep.subr.mxu0 0.0
    %4343 = vmatpush1.msra.mxu0 %v2945
    %4344 = vmatprep.subr.mxu0 0.0
    %4345 = vmatpush1.msra.mxu0 %v2946
    %4346 = vmatprep.subr.mxu0 0.0
    %4347 = vmatpush1.msra.mxu0 %v2947
    %4348 = vmatprep.subr.mxu0 0.0
    %4349 = vmatpush1.msra.mxu0 %v2948
    %4350 = vmatprep.subr.mxu0 0.0
    %4351 = vmatpush1.msra.mxu0 %v2949
    %4352 = vmatprep.subr.mxu0 0.0
    %4353 = vmatpush1.msra.mxu0 %v2950
    %4354 = vmatprep.subr.mxu0 0.0
    %4355 = vmatpush1.msra.mxu0 %v2951
    %4356 = vmatprep.subr.mxu0 0.0
    %4357 = vmatpush1.msra.mxu0 %v2952
    %4358 = vmatprep.subr.mxu0 0.0
    %4359 = vmatpush1.msra.mxu0 %v2953
    %4360 = vmatprep.subr.mxu0 0.0
    %4361 = vmatpush1.msra.mxu0 %v2954
    %4362 = vmatprep.subr.mxu0 0.0
    %4363 = vmatpush1.msra.mxu0 %v2955
    %4364 = vmatprep.subr.mxu0 0.0
    %4365 = vmatpush1.msra.mxu0 %v2956
    %4366 = vmatprep.subr.mxu0 0.0
    %4367 = vmatpush1.msra.mxu0 %v2957
    %4368 = vmatprep.subr.mxu0 0.0
    %4369 = vmatpush1.msra.mxu0 %v2958
    %4370 = vmatprep.subr.mxu0 0.0
    %4371 = vmatpush1.msra.mxu0 %v2959
    %4372 = vmatprep.subr.mxu0 0.0
    %4373 = vmatpush1.msra.mxu0 %v2960
    %4374 = vmatprep.subr.mxu0 0.0
    %4375 = vmatpush1.msra.mxu0 %v2961
    %4376 = vmatprep.subr.mxu0 0.0
    %4377 = vmatpush1.msra.mxu0 %v2962
    %4378 = vmatprep.subr.mxu0 0.0
    %4379 = vmatpush1.msra.mxu0 %v2963
    %4380 = vmatprep.subr.mxu0 0.0
    %4381 = vmatpush1.msra.mxu0 %v2964
    %4382 = vmatprep.subr.mxu0 0.0
    %4383 = vmatpush1.msra.mxu0 %v2965
    %4384 = vmatprep.subr.mxu0 0.0
    %4385 = vmatpush1.msra.mxu0 %v2966
    %4386 = vmatprep.subr.mxu0 0.0
    %4387 = vmatpush1.msra.mxu0 %v2967
    %4388 = vmatprep.subr.mxu0 0.0
    %4389 = vmatpush1.msra.mxu0 %v2968
    %4390 = vmatprep.subr.mxu0 0.0
    %4391 = vmatpush1.msra.mxu0 %v2969
    %4392 = vmatprep.subr.mxu0 0.0
    %4393 = vmatpush1.msra.mxu0 %v2970
    %4394 = vmatprep.subr.mxu0 0.0
    %4395 = vmatpush1.msra.mxu0 %v2971
    %4396 = vmatprep.subr.mxu0 0.0
    %4397 = vmatpush1.msra.mxu0 %v2972
    %4398 = vmatprep.subr.mxu0 0.0
    %4399 = vmatpush1.msra.mxu0 %v2973
    %4400 = vmatprep.mubr.f32.mxu0 %v4333
    %4401 = vmatmul.mubr.f32.gmra.mrb[0].mxu0 %v4332
    %v4402 = vpop.f32.mrb[0].mxu0
    %v4403 = vadd.f32 0.0, %v4402
    %v4404 = vpop.f32.mrb[0].mxu0
    %4405 = vdwg.mxu0
    %4406 = vmatprep.subr.mxu0 0.0
    %4407 = vmatpush1.msra.mxu0 %v2974
    %4408 = vmatprep.subr.mxu0 0.0
    %4409 = vmatpush1.msra.mxu0 %v2975
    %4410 = vmatprep.subr.mxu0 0.0
    %4411 = vmatpush1.msra.mxu0 %v2976
    %4412 = vmatprep.subr.mxu0 0.0
    %4413 = vmatpush1.msra.mxu0 %v2977
    %4414 = vmatprep.subr.mxu0 0.0
    %4415 = vmatpush1.msra.mxu0 %v2978
    %4416 = vmatprep.subr.mxu0 0.0
    %4417 = vmatpush1.msra.mxu0 %v2979
    %4418 = vmatprep.subr.mxu0 0.0
    %4419 = vmatpush1.msra.mxu0 %v2980
    %4420 = vmatprep.subr.mxu0 0.0
    %4421 = vmatpush1.msra.mxu0 %v2981
    %4422 = vmatprep.subr.mxu0 0.0
    %4423 = vmatpush1.msra.mxu0 %v2982
    %4424 = vmatprep.subr.mxu0 0.0
    %4425 = vmatpush1.msra.mxu0 %v2983
    %4426 = vmatprep.subr.mxu0 0.0
    %4427 = vmatpush1.msra.mxu0 %v2984
    %4428 = vmatprep.subr.mxu0 0.0
    %4429 = vmatpush1.msra.mxu0 %v2985
    %4430 = vmatprep.subr.mxu0 0.0
    %4431 = vmatpush1.msra.mxu0 %v2986
    %4432 = vmatprep.subr.mxu0 0.0
    %4433 = vmatpush1.msra.mxu0 %v2987
    %4434 = vmatprep.subr.mxu0 0.0
    %4435 = vmatpush1.msra.mxu0 %v2988
    %4436 = vmatprep.subr.mxu0 0.0
    %4437 = vmatpush1.msra.mxu0 %v2989
    %4438 = vmatprep.subr.mxu0 0.0
    %4439 = vmatpush1.msra.mxu0 %v2990
    %4440 = vmatprep.subr.mxu0 0.0
    %4441 = vmatpush1.msra.mxu0 %v2991
    %4442 = vmatprep.subr.mxu0 0.0
    %4443 = vmatpush1.msra.mxu0 %v2992
    %4444 = vmatprep.subr.mxu0 0.0
    %4445 = vmatpush1.msra.mxu0 %v2993
    %4446 = vmatprep.subr.mxu0 0.0
    %4447 = vmatpush1.msra.mxu0 %v2994
    %4448 = vmatprep.subr.mxu0 0.0
    %4449 = vmatpush1.msra.mxu0 %v2995
    %4450 = vmatprep.subr.mxu0 0.0
    %4451 = vmatpush1.msra.mxu0 %v2996
    %4452 = vmatprep.subr.mxu0 0.0
    %4453 = vmatpush1.msra.mxu0 %v2997
    %4454 = vmatprep.subr.mxu0 0.0
    %4455 = vmatpush1.msra.mxu0 %v2998
    %4456 = vmatprep.subr.mxu0 0.0
    %4457 = vmatpush1.msra.mxu0 %v2999
    %4458 = vmatprep.subr.mxu0 0.0
    %4459 = vmatpush1.msra.mxu0 %v3000
    %4460 = vmatprep.subr.mxu0 0.0
    %4461 = vmatpush1.msra.mxu0 %v3001
    %4462 = vmatprep.subr.mxu0 0.0
    %4463 = vmatpush1.msra.mxu0 %v3002
    %4464 = vmatprep.subr.mxu0 0.0
    %4465 = vmatpush1.msra.mxu0 %v3003
    %4466 = vmatprep.subr.mxu0 0.0
    %4467 = vmatpush1.msra.mxu0 %v3004
    %4468 = vmatprep.subr.mxu0 0.0
    %4469 = vmatpush1.msra.mxu0 %v3005
    %4470 = vmatprep.mubr.f32.mxu0 %v4335
    %4471 = vmatmul.mubr.f32.gmra.mrb[0].mxu0 %v4334
    %v4472 = vpop.f32.mrb[0].mxu0
    %v4473 = vadd.f32 %v4403, %v4472
    %v4474 = vpop.f32.mrb[0].mxu0
    %4475 = vdwg.mxu0
    %v4476 = vcombine.low %v4317, %v4318
    %v4477 = vcombine.high %v4317, %v4318
    %v4478 = vcombine.low %v4319, %v4320
    %v4479 = vcombine.high %v4319, %v4320
    %v4481 = vunpack.c.l.s4 1966171168
    %v4482 = vunpack.c.0.s8 %v4481
    %v4483 = vlaneseq
    %v4484 = vshrl.u32 %v4483, 7
    %v4485 = vsub.s32 %v4482, %v4484
    %v4486 = vrot.slane %v4476, %v4485
    %v4488 = vunpack.c.l.s4 1966171168
    %v4489 = vunpack.c.0.s8 %v4488
    %v4490 = vlaneseq
    %v4491 = vshrl.u32 %v4490, 7
    %v4492 = vsub.s32 %v4489, %v4491
    %v4493 = vrot.slane %v4477, %v4492
    %v4495 = vunpack.c.l.s4 1966171168
    %v4496 = vunpack.c.0.s8 %v4495
    %v4497 = vlaneseq
    %v4498 = vshrl.u32 %v4497, 7
    %v4499 = vsub.s32 %v4496, %v4498
    %v4500 = vrot.slane %v4478, %v4499
    %v4502 = vunpack.c.l.s4 1966171168
    %v4503 = vunpack.c.0.s8 %v4502
    %v4504 = vlaneseq
    %v4505 = vshrl.u32 %v4504, 7
    %v4506 = vsub.s32 %v4503, %v4505
    %v4507 = vrot.slane %v4479, %v4506
    %v4508 = vcombine.low %v4486, %v4500
    %v4509 = vcombine.high %v4486, %v4500
    %v4510 = vcombine.low %v4493, %v4507
    %v4511 = vcombine.high %v4493, %v4507
    %v4513 = vunpack.c.l.s4 1966171168
    %v4514 = vunpack.c.0.s8 %v4513
    %v4515 = vlaneseq
    %v4516 = vshrl.u32 %v4515, 7
    %v4517 = vsub.s32 %v4514, %v4516
    %v4518 = vrot.slane %v4508, %v4517
    %v4520 = vunpack.c.l.s4 1966171168
    %v4521 = vunpack.c.0.s8 %v4520
    %v4522 = vlaneseq
    %v4523 = vshrl.u32 %v4522, 7
    %v4524 = vsub.s32 %v4521, %v4523
    %v4525 = vrot.slane %v4510, %v4524
    %v4527 = vunpack.c.l.s4 1966171168
    %v4528 = vunpack.c.0.s8 %v4527
    %v4529 = vlaneseq
    %v4530 = vshrl.u32 %v4529, 7
    %v4531 = vsub.s32 %v4528, %v4530
    %v4532 = vrot.slane %v4509, %v4531
    %v4534 = vunpack.c.l.s4 1966171168
    %v4535 = vunpack.c.0.s8 %v4534
    %v4536 = vlaneseq
    %v4537 = vshrl.u32 %v4536, 7
    %v4538 = vsub.s32 %v4535, %v4537
    %v4539 = vrot.slane %v4511, %v4538
    %v4540 = vcombine.high %v4518, %v4518
    %v4541 = vcombine.high %v4525, %v4525
    %v4542 = vcombine.high %v4532, %v4532
    %v4543 = vcombine.high %v4539, %v4539
    %vm4544 = vcmp.ne.s32.totalorder %v4518, 0
    %vm4545 = vcmp.ne.s32.totalorder %v4532, 0
    %vm4546 = vcmp.ne.s32.totalorder %v4540, 0
    %vm4547 = vcmp.ne.s32.totalorder %v4542, 0
    %vm4548 = vcmp.ne.s32.totalorder %v4525, 0
    %vm4549 = vcmp.ne.s32.totalorder %v4539, 0
    %vm4550 = vcmp.ne.s32.totalorder %v4541, 0
    %vm4551 = vcmp.ne.s32.totalorder %v4543, 0
    %v4552 = vsel %vm4544, 1, 0
    %v4553 = vsel %vm4545, 1, 0
    %v4554 = vsel %vm4546, 1, 0
    %v4555 = vsel %vm4547, 1, 0
    %v4556 = vsel %vm4548, 1, 0
    %v4557 = vsel %vm4549, 1, 0
    %v4558 = vsel %vm4550, 1, 0
    %v4559 = vsel %vm4551, 1, 0
    %v4560 = vlaneseq
    %v4561 = vshrl.u32 %v4560, 7
    %v4562 = vsub.s32 0, %v4561
    %v4563 = vrot.slane %v4552, %v4562
    %v4564 = vlaneseq
    %v4565 = vshrl.u32 %v4564, 7
    %v4566 = vsub.s32 1, %v4565
    %v4567 = vrot.slane %v4552, %v4566
    %v4568 = vlaneseq
    %v4569 = vshrl.u32 %v4568, 7
    %v4570 = vsub.s32 2, %v4569
    %v4571 = vrot.slane %v4552, %v4570
    %v4572 = vlaneseq
    %v4573 = vshrl.u32 %v4572, 7
    %v4574 = vsub.s32 3, %v4573
    %v4575 = vrot.slane %v4552, %v4574
    %v4576 = vlaneseq
    %v4577 = vshrl.u32 %v4576, 7
    %v4578 = vsub.s32 0, %v4577
    %v4579 = vrot.slane %v4553, %v4578
    %v4580 = vlaneseq
    %v4581 = vshrl.u32 %v4580, 7
    %v4582 = vsub.s32 1, %v4581
    %v4583 = vrot.slane %v4553, %v4582
    %v4584 = vlaneseq
    %v4585 = vshrl.u32 %v4584, 7
    %v4586 = vsub.s32 2, %v4585
    %v4587 = vrot.slane %v4553, %v4586
    %v4588 = vlaneseq
    %v4589 = vshrl.u32 %v4588, 7
    %v4590 = vsub.s32 3, %v4589
    %v4591 = vrot.slane %v4553, %v4590
    %v4592 = vlaneseq
    %v4593 = vshrl.u32 %v4592, 7
    %v4594 = vsub.s32 0, %v4593
    %v4595 = vrot.slane %v4554, %v4594
    %v4596 = vlaneseq
    %v4597 = vshrl.u32 %v4596, 7
    %v4598 = vsub.s32 1, %v4597
    %v4599 = vrot.slane %v4554, %v4598
    %v4600 = vlaneseq
    %v4601 = vshrl.u32 %v4600, 7
    %v4602 = vsub.s32 2, %v4601
    %v4603 = vrot.slane %v4554, %v4602
    %v4604 = vlaneseq
    %v4605 = vshrl.u32 %v4604, 7
    %v4606 = vsub.s32 3, %v4605
    %v4607 = vrot.slane %v4554, %v4606
    %v4608 = vlaneseq
    %v4609 = vshrl.u32 %v4608, 7
    %v4610 = vsub.s32 0, %v4609
    %v4611 = vrot.slane %v4555, %v4610
    %v4612 = vlaneseq
    %v4613 = vshrl.u32 %v4612, 7
    %v4614 = vsub.s32 1, %v4613
    %v4615 = vrot.slane %v4555, %v4614
    %v4616 = vlaneseq
    %v4617 = vshrl.u32 %v4616, 7
    %v4618 = vsub.s32 2, %v4617
    %v4619 = vrot.slane %v4555, %v4618
    %v4620 = vlaneseq
    %v4621 = vshrl.u32 %v4620, 7
    %v4622 = vsub.s32 3, %v4621
    %v4623 = vrot.slane %v4555, %v4622
    %v4624 = vlaneseq
    %v4625 = vshrl.u32 %v4624, 7
    %v4626 = vsub.s32 0, %v4625
    %v4627 = vrot.slane %v4556, %v4626
    %v4628 = vlaneseq
    %v4629 = vshrl.u32 %v4628, 7
    %v4630 = vsub.s32 1, %v4629
    %v4631 = vrot.slane %v4556, %v4630
    %v4632 = vlaneseq
    %v4633 = vshrl.u32 %v4632, 7
    %v4634 = vsub.s32 2, %v4633
    %v4635 = vrot.slane %v4556, %v4634
    %v4636 = vlaneseq
    %v4637 = vshrl.u32 %v4636, 7
    %v4638 = vsub.s32 3, %v4637
    %v4639 = vrot.slane %v4556, %v4638
    %v4640 = vlaneseq
    %v4641 = vshrl.u32 %v4640, 7
    %v4642 = vsub.s32 0, %v4641
    %v4643 = vrot.slane %v4557, %v4642
    %v4644 = vlaneseq
    %v4645 = vshrl.u32 %v4644, 7
    %v4646 = vsub.s32 1, %v4645
    %v4647 = vrot.slane %v4557, %v4646
    %v4648 = vlaneseq
    %v4649 = vshrl.u32 %v4648, 7
    %v4650 = vsub.s32 2, %v4649
    %v4651 = vrot.slane %v4557, %v4650
    %v4652 = vlaneseq
    %v4653 = vshrl.u32 %v4652, 7
    %v4654 = vsub.s32 3, %v4653
    %v4655 = vrot.slane %v4557, %v4654
    %v4656 = vlaneseq
    %v4657 = vshrl.u32 %v4656, 7
    %v4658 = vsub.s32 0, %v4657
    %v4659 = vrot.slane %v4558, %v4658
    %v4660 = vlaneseq
    %v4661 = vshrl.u32 %v4660, 7
    %v4662 = vsub.s32 1, %v4661
    %v4663 = vrot.slane %v4558, %v4662
    %v4664 = vlaneseq
    %v4665 = vshrl.u32 %v4664, 7
    %v4666 = vsub.s32 2, %v4665
    %v4667 = vrot.slane %v4558, %v4666
    %v4668 = vlaneseq
    %v4669 = vshrl.u32 %v4668, 7
    %v4670 = vsub.s32 3, %v4669
    %v4671 = vrot.slane %v4558, %v4670
    %v4672 = vlaneseq
    %v4673 = vshrl.u32 %v4672, 7
    %v4674 = vsub.s32 0, %v4673
    %v4675 = vrot.slane %v4559, %v4674
    %v4676 = vlaneseq
    %v4677 = vshrl.u32 %v4676, 7
    %v4678 = vsub.s32 1, %v4677
    %v4679 = vrot.slane %v4559, %v4678
    %v4680 = vlaneseq
    %v4681 = vshrl.u32 %v4680, 7
    %v4682 = vsub.s32 2, %v4681
    %v4683 = vrot.slane %v4559, %v4682
    %v4684 = vlaneseq
    %v4685 = vshrl.u32 %v4684, 7
    %v4686 = vsub.s32 3, %v4685
    %v4687 = vrot.slane %v4559, %v4686
    %vm4688 = vcmp.eq.s32.totalorder %v4563, 1
    %vm4689 = vcmp.eq.s32.totalorder %v4567, 1
    %vm4690 = vcmp.eq.s32.totalorder %v4571, 1
    %vm4691 = vcmp.eq.s32.totalorder %v4575, 1
    %vm4692 = vcmp.eq.s32.totalorder %v4579, 1
    %vm4693 = vcmp.eq.s32.totalorder %v4583, 1
    %vm4694 = vcmp.eq.s32.totalorder %v4587, 1
    %vm4695 = vcmp.eq.s32.totalorder %v4591, 1
    %vm4696 = vcmp.eq.s32.totalorder %v4595, 1
    %vm4697 = vcmp.eq.s32.totalorder %v4599, 1
    %vm4698 = vcmp.eq.s32.totalorder %v4603, 1
    %vm4699 = vcmp.eq.s32.totalorder %v4607, 1
    %vm4700 = vcmp.eq.s32.totalorder %v4611, 1
    %vm4701 = vcmp.eq.s32.totalorder %v4615, 1
    %vm4702 = vcmp.eq.s32.totalorder %v4619, 1
    %vm4703 = vcmp.eq.s32.totalorder %v4623, 1
    %vm4704 = vcmp.eq.s32.totalorder %v4627, 1
    %vm4705 = vcmp.eq.s32.totalorder %v4631, 1
    %vm4706 = vcmp.eq.s32.totalorder %v4635, 1
    %vm4707 = vcmp.eq.s32.totalorder %v4639, 1
    %vm4708 = vcmp.eq.s32.totalorder %v4643, 1
    %vm4709 = vcmp.eq.s32.totalorder %v4647, 1
    %vm4710 = vcmp.eq.s32.totalorder %v4651, 1
    %vm4711 = vcmp.eq.s32.totalorder %v4655, 1
    %vm4712 = vcmp.eq.s32.totalorder %v4659, 1
    %vm4713 = vcmp.eq.s32.totalorder %v4663, 1
    %vm4714 = vcmp.eq.s32.totalorder %v4667, 1
    %vm4715 = vcmp.eq.s32.totalorder %v4671, 1
    %vm4716 = vcmp.eq.s32.totalorder %v4675, 1
    %vm4717 = vcmp.eq.s32.totalorder %v4679, 1
    %vm4718 = vcmp.eq.s32.totalorder %v4683, 1
    %vm4719 = vcmp.eq.s32.totalorder %v4687, 1
    %v4720 = vsel %vm4688, %v3059, -inf
    %v4721 = vsel %vm4689, %v3060, -inf
    %v4722 = vsel %vm4690, %v3061, -inf
    %v4723 = vsel %vm4691, %v3062, -inf
    %v4724 = vsel %vm4688, %v3063, -inf
    %v4725 = vsel %vm4689, %v3064, -inf
    %v4726 = vsel %vm4690, %v3065, -inf
    %v4727 = vsel %vm4691, %v3066, -inf
    %v4728 = vsel %vm4692, %v3059, -inf
    %v4729 = vsel %vm4693, %v3060, -inf
    %v4730 = vsel %vm4694, %v3061, -inf
    %v4731 = vsel %vm4695, %v3062, -inf
    %v4732 = vsel %vm4692, %v3063, -inf
    %v4733 = vsel %vm4693, %v3064, -inf
    %v4734 = vsel %vm4694, %v3065, -inf
    %v4735 = vsel %vm4695, %v3066, -inf
    %v4736 = vsel %vm4696, %v3059, -inf
    %v4737 = vsel %vm4697, %v3060, -inf
    %v4738 = vsel %vm4698, %v3061, -inf
    %v4739 = vsel %vm4699, %v3062, -inf
    %v4740 = vsel %vm4696, %v3063, -inf
    %v4741 = vsel %vm4697, %v3064, -inf
    %v4742 = vsel %vm4698, %v3065, -inf
    %v4743 = vsel %vm4699, %v3066, -inf
    %v4744 = vsel %vm4700, %v3059, -inf
    %v4745 = vsel %vm4701, %v3060, -inf
    %v4746 = vsel %vm4702, %v3061, -inf
    %v4747 = vsel %vm4703, %v3062, -inf
    %v4748 = vsel %vm4700, %v3063, -inf
    %v4749 = vsel %vm4701, %v3064, -inf
    %v4750 = vsel %vm4702, %v3065, -inf
    %v4751 = vsel %vm4703, %v3066, -inf
    %v4752 = vsel %vm4704, %v3059, -inf
    %v4753 = vsel %vm4705, %v3060, -inf
    %v4754 = vsel %vm4706, %v3061, -inf
    %v4755 = vsel %vm4707, %v3062, -inf
    %v4756 = vsel %vm4704, %v3063, -inf
    %v4757 = vsel %vm4705, %v3064, -inf
    %v4758 = vsel %vm4706, %v3065, -inf
    %v4759 = vsel %vm4707, %v3066, -inf
    %v4760 = vsel %vm4708, %v3059, -inf
    %v4761 = vsel %vm4709, %v3060, -inf
    %v4762 = vsel %vm4710, %v3061, -inf
    %v4763 = vsel %vm4711, %v3062, -inf
    %v4764 = vsel %vm4708, %v3063, -inf
    %v4765 = vsel %vm4709, %v3064, -inf
    %v4766 = vsel %vm4710, %v3065, -inf
    %v4767 = vsel %vm4711, %v3066, -inf
    %v4768 = vsel %vm4712, %v3059, -inf
    %v4769 = vsel %vm4713, %v3060, -inf
    %v4770 = vsel %vm4714, %v3061, -inf
    %v4771 = vsel %vm4715, %v3062, -inf
    %v4772 = vsel %vm4712, %v3063, -inf
    %v4773 = vsel %vm4713, %v3064, -inf
    %v4774 = vsel %vm4714, %v3065, -inf
    %v4775 = vsel %vm4715, %v3066, -inf
    %v4776 = vsel %vm4716, %v3059, -inf
    %v4777 = vsel %vm4717, %v3060, -inf
    %v4778 = vsel %vm4718, %v3061, -inf
    %v4779 = vsel %vm4719, %v3062, -inf
    %v4780 = vsel %vm4716, %v3063, -inf
    %v4781 = vsel %vm4717, %v3064, -inf
    %v4782 = vsel %vm4718, %v3065, -inf
    %v4783 = vsel %vm4719, %v3066, -inf
    %v4784 = vmax.f32 %v4720, %v4721
    %v4785 = vmax.f32 %v4784, %v4722
    %v4786 = vmax.f32 %v4785, %v4723
    %4787 = vmax.xlane.f32.xlu0 %v4786
    %v4788 = vpop.xlane.xlu0 %4787
    %v4789 = vmax.f32 %v4724, %v4725
    %v4790 = vmax.f32 %v4789, %v4726
    %v4791 = vmax.f32 %v4790, %v4727
    %4792 = vmax.xlane.f32.xlu0 %v4791
    %v4793 = vpop.xlane.xlu0 %4792
    %v4794 = vmax.f32 %v4728, %v4729
    %v4795 = vmax.f32 %v4794, %v4730
    %v4796 = vmax.f32 %v4795, %v4731
    %4797 = vmax.xlane.f32.xlu0 %v4796
    %v4798 = vpop.xlane.xlu0 %4797
    %v4799 = vmax.f32 %v4732, %v4733
    %v4800 = vmax.f32 %v4799, %v4734
    %v4801 = vmax.f32 %v4800, %v4735
    %4802 = vmax.xlane.f32.xlu0 %v4801
    %v4803 = vpop.xlane.xlu0 %4802
    %v4804 = vmax.f32 %v4736, %v4737
    %v4805 = vmax.f32 %v4804, %v4738
    %v4806 = vmax.f32 %v4805, %v4739
    %4807 = vmax.xlane.f32.xlu0 %v4806
    %v4808 = vpop.xlane.xlu0 %4807
    %v4809 = vmax.f32 %v4740, %v4741
    %v4810 = vmax.f32 %v4809, %v4742
    %v4811 = vmax.f32 %v4810, %v4743
    %4812 = vmax.xlane.f32.xlu0 %v4811
    %v4813 = vpop.xlane.xlu0 %4812
    %v4814 = vmax.f32 %v4744, %v4745
    %v4815 = vmax.f32 %v4814, %v4746
    %v4816 = vmax.f32 %v4815, %v4747
    %4817 = vmax.xlane.f32.xlu0 %v4816
    %v4818 = vpop.xlane.xlu0 %4817
    %v4819 = vmax.f32 %v4748, %v4749
    %v4820 = vmax.f32 %v4819, %v4750
    %v4821 = vmax.f32 %v4820, %v4751
    %4822 = vmax.xlane.f32.xlu0 %v4821
    %v4823 = vpop.xlane.xlu0 %4822
    %v4824 = vmax.f32 %v4752, %v4753
    %v4825 = vmax.f32 %v4824, %v4754
    %v4826 = vmax.f32 %v4825, %v4755
    %4827 = vmax.xlane.f32.xlu0 %v4826
    %v4828 = vpop.xlane.xlu0 %4827
    %v4829 = vmax.f32 %v4756, %v4757
    %v4830 = vmax.f32 %v4829, %v4758
    %v4831 = vmax.f32 %v4830, %v4759
    %4832 = vmax.xlane.f32.xlu0 %v4831
    %v4833 = vpop.xlane.xlu0 %4832
    %v4834 = vmax.f32 %v4760, %v4761
    %v4835 = vmax.f32 %v4834, %v4762
    %v4836 = vmax.f32 %v4835, %v4763
    %4837 = vmax.xlane.f32.xlu0 %v4836
    %v4838 = vpop.xlane.xlu0 %4837
    %v4839 = vmax.f32 %v4764, %v4765
    %v4840 = vmax.f32 %v4839, %v4766
    %v4841 = vmax.f32 %v4840, %v4767
    %4842 = vmax.xlane.f32.xlu0 %v4841
    %v4843 = vpop.xlane.xlu0 %4842
    %v4844 = vmax.f32 %v4768, %v4769
    %v4845 = vmax.f32 %v4844, %v4770
    %v4846 = vmax.f32 %v4845, %v4771
    %4847 = vmax.xlane.f32.xlu0 %v4846
    %v4848 = vpop.xlane.xlu0 %4847
    %v4849 = vmax.f32 %v4772, %v4773
    %v4850 = vmax.f32 %v4849, %v4774
    %v4851 = vmax.f32 %v4850, %v4775
    %4852 = vmax.xlane.f32.xlu0 %v4851
    %v4853 = vpop.xlane.xlu0 %4852
    %v4854 = vmax.f32 %v4776, %v4777
    %v4855 = vmax.f32 %v4854, %v4778
    %v4856 = vmax.f32 %v4855, %v4779
    %4857 = vmax.xlane.f32.xlu0 %v4856
    %v4858 = vpop.xlane.xlu0 %4857
    %v4859 = vmax.f32 %v4780, %v4781
    %v4860 = vmax.f32 %v4859, %v4782
    %v4861 = vmax.f32 %v4860, %v4783
    %4862 = vmax.xlane.f32.xlu0 %v4861
    %v4863 = vpop.xlane.xlu0 %4862
    %vm4864 = vmand %vm4305, %vm3717
    %vm4865 = vmand %vm4306, %vm3718
    %vm4866 = vmand %vm4307, %vm3719
    %vm4867 = vmand %vm4308, %vm3720
    %vm4868 = vmand %vm4864, %vm3730
    %vm4869 = vmand %vm4865, %vm3731
    %vm4870 = vmand %vm4866, %vm3732
    %vm4871 = vmand %vm4867, %vm3733
    %v4872 = vsel %vm4868, 1, 0
    %v4873 = vsel %vm4869, 1, 0
    %v4874 = vsel %vm4870, 1, 0
    %v4875 = vsel %vm4871, 1, 0
    %v4876 = vcvt.s32.f32 %v4872
    %v4877 = vcvt.s32.f32 %v4873
    %v4878 = vcvt.s32.f32 %v4874
    %v4879 = vcvt.s32.f32 %v4875
    %v4880 = vadd.f32 %v4876, %v4877
    %v4881 = vadd.f32 %v4880, %v4878
    %v4882 = vadd.f32 %v4881, %v4879
    %4883 = vadd.xlane.f32.xlu0 %v4882
    %v4884 = vpop.xlane.xlu0 %4883
    %v4885 = vmax.f32 %v4884, 1.0
    %v4886 = vrcp.pop %v4885
    %v4887 = vmul.f32 %v4876, %v4886
    %v4888 = vmul.f32 %v4877, %v4886
    %v4889 = vmul.f32 %v4878, %v4886
    %v4890 = vmul.f32 %v4879, %v4886
    %4891 = vmatprep.subr.mxu0 0.0
    %4892 = vmatpush1.msra.mxu0 %v2942
    %4893 = vmatprep.subr.mxu0 0.0
    %4894 = vmatpush1.msra.mxu0 %v2943
    %4895 = vmatprep.subr.mxu0 0.0
    %4896 = vmatpush1.msra.mxu0 %v2944
    %4897 = vmatprep.subr.mxu0 0.0
    %4898 = vmatpush1.msra.mxu0 %v2945
    %4899 = vmatprep.subr.mxu0 0.0
    %4900 = vmatpush1.msra.mxu0 %v2946
    %4901 = vmatprep.subr.mxu0 0.0
    %4902 = vmatpush1.msra.mxu0 %v2947
    %4903 = vmatprep.subr.mxu0 0.0
    %4904 = vmatpush1.msra.mxu0 %v2948
    %4905 = vmatprep.subr.mxu0 0.0
    %4906 = vmatpush1.msra.mxu0 %v2949
    %4907 = vmatprep.subr.mxu0 0.0
    %4908 = vmatpush1.msra.mxu0 %v2950
    %4909 = vmatprep.subr.mxu0 0.0
    %4910 = vmatpush1.msra.mxu0 %v2951
    %4911 = vmatprep.subr.mxu0 0.0
    %4912 = vmatpush1.msra.mxu0 %v2952
    %4913 = vmatprep.subr.mxu0 0.0
    %4914 = vmatpush1.msra.mxu0 %v2953
    %4915 = vmatprep.subr.mxu0 0.0
    %4916 = vmatpush1.msra.mxu0 %v2954
    %4917 = vmatprep.subr.mxu0 0.0
    %4918 = vmatpush1.msra.mxu0 %v2955
    %4919 = vmatprep.subr.mxu0 0.0
    %4920 = vmatpush1.msra.mxu0 %v2956
    %4921 = vmatprep.subr.mxu0 0.0
    %4922 = vmatpush1.msra.mxu0 %v2957
    %4923 = vmatprep.subr.mxu0 0.0
    %4924 = vmatpush1.msra.mxu0 %v2958
    %4925 = vmatprep.subr.mxu0 0.0
    %4926 = vmatpush1.msra.mxu0 %v2959
    %4927 = vmatprep.subr.mxu0 0.0
    %4928 = vmatpush1.msra.mxu0 %v2960
    %4929 = vmatprep.subr.mxu0 0.0
    %4930 = vmatpush1.msra.mxu0 %v2961
    %4931 = vmatprep.subr.mxu0 0.0
    %4932 = vmatpush1.msra.mxu0 %v2962
    %4933 = vmatprep.subr.mxu0 0.0
    %4934 = vmatpush1.msra.mxu0 %v2963
    %4935 = vmatprep.subr.mxu0 0.0
    %4936 = vmatpush1.msra.mxu0 %v2964
    %4937 = vmatprep.subr.mxu0 0.0
    %4938 = vmatpush1.msra.mxu0 %v2965
    %4939 = vmatprep.subr.mxu0 0.0
    %4940 = vmatpush1.msra.mxu0 %v2966
    %4941 = vmatprep.subr.mxu0 0.0
    %4942 = vmatpush1.msra.mxu0 %v2967
    %4943 = vmatprep.subr.mxu0 0.0
    %4944 = vmatpush1.msra.mxu0 %v2968
    %4945 = vmatprep.subr.mxu0 0.0
    %4946 = vmatpush1.msra.mxu0 %v2969
    %4947 = vmatprep.subr.mxu0 0.0
    %4948 = vmatpush1.msra.mxu0 %v2970
    %4949 = vmatprep.subr.mxu0 0.0
    %4950 = vmatpush1.msra.mxu0 %v2971
    %4951 = vmatprep.subr.mxu0 0.0
    %4952 = vmatpush1.msra.mxu0 %v2972
    %4953 = vmatprep.subr.mxu0 0.0
    %4954 = vmatpush1.msra.mxu0 %v2973
    %4955 = vmatprep.mubr.f32.mxu0 %v4888
    %4956 = vmatmul.mubr.f32.gmra.mrb[0].mxu0 %v4887
    %v4957 = vpop.f32.mrb[0].mxu0
    %v4958 = vadd.f32 0.0, %v4957
    %v4959 = vpop.f32.mrb[0].mxu0
    %4960 = vdwg.mxu0
    %4961 = vmatprep.subr.mxu0 0.0
    %4962 = vmatpush1.msra.mxu0 %v2974
    %4963 = vmatprep.subr.mxu0 0.0
    %4964 = vmatpush1.msra.mxu0 %v2975
    %4965 = vmatprep.subr.mxu0 0.0
    %4966 = vmatpush1.msra.mxu0 %v2976
    %4967 = vmatprep.subr.mxu0 0.0
    %4968 = vmatpush1.msra.mxu0 %v2977
    %4969 = vmatprep.subr.mxu0 0.0
    %4970 = vmatpush1.msra.mxu0 %v2978
    %4971 = vmatprep.subr.mxu0 0.0
    %4972 = vmatpush1.msra.mxu0 %v2979
    %4973 = vmatprep.subr.mxu0 0.0
    %4974 = vmatpush1.msra.mxu0 %v2980
    %4975 = vmatprep.subr.mxu0 0.0
    %4976 = vmatpush1.msra.mxu0 %v2981
    %4977 = vmatprep.subr.mxu0 0.0
    %4978 = vmatpush1.msra.mxu0 %v2982
    %4979 = vmatprep.subr.mxu0 0.0
    %4980 = vmatpush1.msra.mxu0 %v2983
    %4981 = vmatprep.subr.mxu0 0.0
    %4982 = vmatpush1.msra.mxu0 %v2984
    %4983 = vmatprep.subr.mxu0 0.0
    %4984 = vmatpush1.msra.mxu0 %v2985
    %4985 = vmatprep.subr.mxu0 0.0
    %4986 = vmatpush1.msra.mxu0 %v2986
    %4987 = vmatprep.subr.mxu0 0.0
    %4988 = vmatpush1.msra.mxu0 %v2987
    %4989 = vmatprep.subr.mxu0 0.0
    %4990 = vmatpush1.msra.mxu0 %v2988
    %4991 = vmatprep.subr.mxu0 0.0
    %4992 = vmatpush1.msra.mxu0 %v2989
    %4993 = vmatprep.subr.mxu0 0.0
    %4994 = vmatpush1.msra.mxu0 %v2990
    %4995 = vmatprep.subr.mxu0 0.0
    %4996 = vmatpush1.msra.mxu0 %v2991
    %4997 = vmatprep.subr.mxu0 0.0
    %4998 = vmatpush1.msra.mxu0 %v2992
    %4999 = vmatprep.subr.mxu0 0.0
    %5000 = vmatpush1.msra.mxu0 %v2993
    %5001 = vmatprep.subr.mxu0 0.0
    %5002 = vmatpush1.msra.mxu0 %v2994
    %5003 = vmatprep.subr.mxu0 0.0
    %5004 = vmatpush1.msra.mxu0 %v2995
    %5005 = vmatprep.subr.mxu0 0.0
    %5006 = vmatpush1.msra.mxu0 %v2996
    %5007 = vmatprep.subr.mxu0 0.0
    %5008 = vmatpush1.msra.mxu0 %v2997
    %5009 = vmatprep.subr.mxu0 0.0
    %5010 = vmatpush1.msra.mxu0 %v2998
    %5011 = vmatprep.subr.mxu0 0.0
    %5012 = vmatpush1.msra.mxu0 %v2999
    %5013 = vmatprep.subr.mxu0 0.0
    %5014 = vmatpush1.msra.mxu0 %v3000
    %5015 = vmatprep.subr.mxu0 0.0
    %5016 = vmatpush1.msra.mxu0 %v3001
    %5017 = vmatprep.subr.mxu0 0.0
    %5018 = vmatpush1.msra.mxu0 %v3002
    %5019 = vmatprep.subr.mxu0 0.0
    %5020 = vmatpush1.msra.mxu0 %v3003
    %5021 = vmatprep.subr.mxu0 0.0
    %5022 = vmatpush1.msra.mxu0 %v3004
    %5023 = vmatprep.subr.mxu0 0.0
    %5024 = vmatpush1.msra.mxu0 %v3005
    %5025 = vmatprep.mubr.f32.mxu0 %v4890
    %5026 = vmatmul.mubr.f32.gmra.mrb[0].mxu0 %v4889
    %v5027 = vpop.f32.mrb[0].mxu0
    %v5028 = vadd.f32 %v4958, %v5027
    %v5029 = vpop.f32.mrb[0].mxu0
    %5030 = vdwg.mxu0
    %v5031 = vcombine.low %v4872, %v4873
    %v5032 = vcombine.high %v4872, %v4873
    %v5033 = vcombine.low %v4874, %v4875
    %v5034 = vcombine.high %v4874, %v4875
    %v5036 = vunpack.c.l.s4 1966171168
    %v5037 = vunpack.c.0.s8 %v5036
    %v5038 = vlaneseq
    %v5039 = vshrl.u32 %v5038, 7
    %v5040 = vsub.s32 %v5037, %v5039
    %v5041 = vrot.slane %v5031, %v5040
    %v5043 = vunpack.c.l.s4 1966171168
    %v5044 = vunpack.c.0.s8 %v5043
    %v5045 = vlaneseq
    %v5046 = vshrl.u32 %v5045, 7
    %v5047 = vsub.s32 %v5044, %v5046
    %v5048 = vrot.slane %v5032, %v5047
    %v5050 = vunpack.c.l.s4 1966171168
    %v5051 = vunpack.c.0.s8 %v5050
    %v5052 = vlaneseq
    %v5053 = vshrl.u32 %v5052, 7
    %v5054 = vsub.s32 %v5051, %v5053
    %v5055 = vrot.slane %v5033, %v5054
    %v5057 = vunpack.c.l.s4 1966171168
    %v5058 = vunpack.c.0.s8 %v5057
    %v5059 = vlaneseq
    %v5060 = vshrl.u32 %v5059, 7
    %v5061 = vsub.s32 %v5058, %v5060
    %v5062 = vrot.slane %v5034, %v5061
    %v5063 = vcombine.low %v5041, %v5055
    %v5064 = vcombine.high %v5041, %v5055
    %v5065 = vcombine.low %v5048, %v5062
    %v5066 = vcombine.high %v5048, %v5062
    %v5068 = vunpack.c.l.s4 1966171168
    %v5069 = vunpack.c.0.s8 %v5068
    %v5070 = vlaneseq
    %v5071 = vshrl.u32 %v5070, 7
    %v5072 = vsub.s32 %v5069, %v5071
    %v5073 = vrot.slane %v5063, %v5072
    %v5075 = vunpack.c.l.s4 1966171168
    %v5076 = vunpack.c.0.s8 %v5075
    %v5077 = vlaneseq
    %v5078 = vshrl.u32 %v5077, 7
    %v5079 = vsub.s32 %v5076, %v5078
    %v5080 = vrot.slane %v5065, %v5079
    %v5082 = vunpack.c.l.s4 1966171168
    %v5083 = vunpack.c.0.s8 %v5082
    %v5084 = vlaneseq
    %v5085 = vshrl.u32 %v5084, 7
    %v5086 = vsub.s32 %v5083, %v5085
    %v5087 = vrot.slane %v5064, %v5086
    %v5089 = vunpack.c.l.s4 1966171168
    %v5090 = vunpack.c.0.s8 %v5089
    %v5091 = vlaneseq
    %v5092 = vshrl.u32 %v5091, 7
    %v5093 = vsub.s32 %v5090, %v5092
    %v5094 = vrot.slane %v5066, %v5093
    %v5095 = vcombine.high %v5073, %v5073
    %v5096 = vcombine.high %v5080, %v5080
    %v5097 = vcombine.high %v5087, %v5087
    %v5098 = vcombine.high %v5094, %v5094
    %vm5099 = vcmp.ne.s32.totalorder %v5073, 0
    %vm5100 = vcmp.ne.s32.totalorder %v5087, 0
    %vm5101 = vcmp.ne.s32.totalorder %v5095, 0
    %vm5102 = vcmp.ne.s32.totalorder %v5097, 0
    %vm5103 = vcmp.ne.s32.totalorder %v5080, 0
    %vm5104 = vcmp.ne.s32.totalorder %v5094, 0
    %vm5105 = vcmp.ne.s32.totalorder %v5096, 0
    %vm5106 = vcmp.ne.s32.totalorder %v5098, 0
    %v5107 = vsel %vm5099, 1, 0
    %v5108 = vsel %vm5100, 1, 0
    %v5109 = vsel %vm5101, 1, 0
    %v5110 = vsel %vm5102, 1, 0
    %v5111 = vsel %vm5103, 1, 0
    %v5112 = vsel %vm5104, 1, 0
    %v5113 = vsel %vm5105, 1, 0
    %v5114 = vsel %vm5106, 1, 0
    %v5115 = vlaneseq
    %v5116 = vshrl.u32 %v5115, 7
    %v5117 = vsub.s32 0, %v5116
    %v5118 = vrot.slane %v5107, %v5117
    %v5119 = vlaneseq
    %v5120 = vshrl.u32 %v5119, 7
    %v5121 = vsub.s32 1, %v5120
    %v5122 = vrot.slane %v5107, %v5121
    %v5123 = vlaneseq
    %v5124 = vshrl.u32 %v5123, 7
    %v5125 = vsub.s32 2, %v5124
    %v5126 = vrot.slane %v5107, %v5125
    %v5127 = vlaneseq
    %v5128 = vshrl.u32 %v5127, 7
    %v5129 = vsub.s32 3, %v5128
    %v5130 = vrot.slane %v5107, %v5129
    %v5131 = vlaneseq
    %v5132 = vshrl.u32 %v5131, 7
    %v5133 = vsub.s32 0, %v5132
    %v5134 = vrot.slane %v5108, %v5133
    %v5135 = vlaneseq
    %v5136 = vshrl.u32 %v5135, 7
    %v5137 = vsub.s32 1, %v5136
    %v5138 = vrot.slane %v5108, %v5137
    %v5139 = vlaneseq
    %v5140 = vshrl.u32 %v5139, 7
    %v5141 = vsub.s32 2, %v5140
    %v5142 = vrot.slane %v5108, %v5141
    %v5143 = vlaneseq
    %v5144 = vshrl.u32 %v5143, 7
    %v5145 = vsub.s32 3, %v5144
    %v5146 = vrot.slane %v5108, %v5145
    %v5147 = vlaneseq
    %v5148 = vshrl.u32 %v5147, 7
    %v5149 = vsub.s32 0, %v5148
    %v5150 = vrot.slane %v5109, %v5149
    %v5151 = vlaneseq
    %v5152 = vshrl.u32 %v5151, 7
    %v5153 = vsub.s32 1, %v5152
    %v5154 = vrot.slane %v5109, %v5153
    %v5155 = vlaneseq
    %v5156 = vshrl.u32 %v5155, 7
    %v5157 = vsub.s32 2, %v5156
    %v5158 = vrot.slane %v5109, %v5157
    %v5159 = vlaneseq
    %v5160 = vshrl.u32 %v5159, 7
    %v5161 = vsub.s32 3, %v5160
    %v5162 = vrot.slane %v5109, %v5161
    %v5163 = vlaneseq
    %v5164 = vshrl.u32 %v5163, 7
    %v5165 = vsub.s32 0, %v5164
    %v5166 = vrot.slane %v5110, %v5165
    %v5167 = vlaneseq
    %v5168 = vshrl.u32 %v5167, 7
    %v5169 = vsub.s32 1, %v5168
    %v5170 = vrot.slane %v5110, %v5169
    %v5171 = vlaneseq
    %v5172 = vshrl.u32 %v5171, 7
    %v5173 = vsub.s32 2, %v5172
    %v5174 = vrot.slane %v5110, %v5173
    %v5175 = vlaneseq
    %v5176 = vshrl.u32 %v5175, 7
    %v5177 = vsub.s32 3, %v5176
    %v5178 = vrot.slane %v5110, %v5177
    %v5179 = vlaneseq
    %v5180 = vshrl.u32 %v5179, 7
    %v5181 = vsub.s32 0, %v5180
    %v5182 = vrot.slane %v5111, %v5181
    %v5183 = vlaneseq
    %v5184 = vshrl.u32 %v5183, 7
    %v5185 = vsub.s32 1, %v5184
    %v5186 = vrot.slane %v5111, %v5185
    %v5187 = vlaneseq
    %v5188 = vshrl.u32 %v5187, 7
    %v5189 = vsub.s32 2, %v5188
    %v5190 = vrot.slane %v5111, %v5189
    %v5191 = vlaneseq
    %v5192 = vshrl.u32 %v5191, 7
    %v5193 = vsub.s32 3, %v5192
    %v5194 = vrot.slane %v5111, %v5193
    %v5195 = vlaneseq
    %v5196 = vshrl.u32 %v5195, 7
    %v5197 = vsub.s32 0, %v5196
    %v5198 = vrot.slane %v5112, %v5197
    %v5199 = vlaneseq
    %v5200 = vshrl.u32 %v5199, 7
    %v5201 = vsub.s32 1, %v5200
    %v5202 = vrot.slane %v5112, %v5201
    %v5203 = vlaneseq
    %v5204 = vshrl.u32 %v5203, 7
    %v5205 = vsub.s32 2, %v5204
    %v5206 = vrot.slane %v5112, %v5205
    %v5207 = vlaneseq
    %v5208 = vshrl.u32 %v5207, 7
    %v5209 = vsub.s32 3, %v5208
    %v5210 = vrot.slane %v5112, %v5209
    %v5211 = vlaneseq
    %v5212 = vshrl.u32 %v5211, 7
    %v5213 = vsub.s32 0, %v5212
    %v5214 = vrot.slane %v5113, %v5213
    %v5215 = vlaneseq
    %v5216 = vshrl.u32 %v5215, 7
    %v5217 = vsub.s32 1, %v5216
    %v5218 = vrot.slane %v5113, %v5217
    %v5219 = vlaneseq
    %v5220 = vshrl.u32 %v5219, 7
    %v5221 = vsub.s32 2, %v5220
    %v5222 = vrot.slane %v5113, %v5221
    %v5223 = vlaneseq
    %v5224 = vshrl.u32 %v5223, 7
    %v5225 = vsub.s32 3, %v5224
    %v5226 = vrot.slane %v5113, %v5225
    %v5227 = vlaneseq
    %v5228 = vshrl.u32 %v5227, 7
    %v5229 = vsub.s32 0, %v5228
    %v5230 = vrot.slane %v5114, %v5229
    %v5231 = vlaneseq
    %v5232 = vshrl.u32 %v5231, 7
    %v5233 = vsub.s32 1, %v5232
    %v5234 = vrot.slane %v5114, %v5233
    %v5235 = vlaneseq
    %v5236 = vshrl.u32 %v5235, 7
    %v5237 = vsub.s32 2, %v5236
    %v5238 = vrot.slane %v5114, %v5237
    %v5239 = vlaneseq
    %v5240 = vshrl.u32 %v5239, 7
    %v5241 = vsub.s32 3, %v5240
    %v5242 = vrot.slane %v5114, %v5241
    %vm5243 = vcmp.eq.s32.totalorder %v5118, 1
    %vm5244 = vcmp.eq.s32.totalorder %v5122, 1
    %vm5245 = vcmp.eq.s32.totalorder %v5126, 1
    %vm5246 = vcmp.eq.s32.totalorder %v5130, 1
    %vm5247 = vcmp.eq.s32.totalorder %v5134, 1
    %vm5248 = vcmp.eq.s32.totalorder %v5138, 1
    %vm5249 = vcmp.eq.s32.totalorder %v5142, 1
    %vm5250 = vcmp.eq.s32.totalorder %v5146, 1
    %vm5251 = vcmp.eq.s32.totalorder %v5150, 1
    %vm5252 = vcmp.eq.s32.totalorder %v5154, 1
    %vm5253 = vcmp.eq.s32.totalorder %v5158, 1
    %vm5254 = vcmp.eq.s32.totalorder %v5162, 1
    %vm5255 = vcmp.eq.s32.totalorder %v5166, 1
    %vm5256 = vcmp.eq.s32.totalorder %v5170, 1
    %vm5257 = vcmp.eq.s32.totalorder %v5174, 1
    %vm5258 = vcmp.eq.s32.totalorder %v5178, 1
    %vm5259 = vcmp.eq.s32.totalorder %v5182, 1
    %vm5260 = vcmp.eq.s32.totalorder %v5186, 1
    %vm5261 = vcmp.eq.s32.totalorder %v5190, 1
    %vm5262 = vcmp.eq.s32.totalorder %v5194, 1
    %vm5263 = vcmp.eq.s32.totalorder %v5198, 1
    %vm5264 = vcmp.eq.s32.totalorder %v5202, 1
    %vm5265 = vcmp.eq.s32.totalorder %v5206, 1
    %vm5266 = vcmp.eq.s32.totalorder %v5210, 1
    %vm5267 = vcmp.eq.s32.totalorder %v5214, 1
    %vm5268 = vcmp.eq.s32.totalorder %v5218, 1
    %vm5269 = vcmp.eq.s32.totalorder %v5222, 1
    %vm5270 = vcmp.eq.s32.totalorder %v5226, 1
    %vm5271 = vcmp.eq.s32.totalorder %v5230, 1
    %vm5272 = vcmp.eq.s32.totalorder %v5234, 1
    %vm5273 = vcmp.eq.s32.totalorder %v5238, 1
    %vm5274 = vcmp.eq.s32.totalorder %v5242, 1
    %v5275 = vsel %vm5243, %v3059, -inf
    %v5276 = vsel %vm5244, %v3060, -inf
    %v5277 = vsel %vm5245, %v3061, -inf
    %v5278 = vsel %vm5246, %v3062, -inf
    %v5279 = vsel %vm5243, %v3063, -inf
    %v5280 = vsel %vm5244, %v3064, -inf
    %v5281 = vsel %vm5245, %v3065, -inf
    %v5282 = vsel %vm5246, %v3066, -inf
    %v5283 = vsel %vm5247, %v3059, -inf
    %v5284 = vsel %vm5248, %v3060, -inf
    %v5285 = vsel %vm5249, %v3061, -inf
    %v5286 = vsel %vm5250, %v3062, -inf
    %v5287 = vsel %vm5247, %v3063, -inf
    %v5288 = vsel %vm5248, %v3064, -inf
    %v5289 = vsel %vm5249, %v3065, -inf
    %v5290 = vsel %vm5250, %v3066, -inf
    %v5291 = vsel %vm5251, %v3059, -inf
    %v5292 = vsel %vm5252, %v3060, -inf
    %v5293 = vsel %vm5253, %v3061, -inf
    %v5294 = vsel %vm5254, %v3062, -inf
    %v5295 = vsel %vm5251, %v3063, -inf
    %v5296 = vsel %vm5252, %v3064, -inf
    %v5297 = vsel %vm5253, %v3065, -inf
    %v5298 = vsel %vm5254, %v3066, -inf
    %v5299 = vsel %vm5255, %v3059, -inf
    %v5300 = vsel %vm5256, %v3060, -inf
    %v5301 = vsel %vm5257, %v3061, -inf
    %v5302 = vsel %vm5258, %v3062, -inf
    %v5303 = vsel %vm5255, %v3063, -inf
    %v5304 = vsel %vm5256, %v3064, -inf
    %v5305 = vsel %vm5257, %v3065, -inf
    %v5306 = vsel %vm5258, %v3066, -inf
    %v5307 = vsel %vm5259, %v3059, -inf
    %v5308 = vsel %vm5260, %v3060, -inf
    %v5309 = vsel %vm5261, %v3061, -inf
    %v5310 = vsel %vm5262, %v3062, -inf
    %v5311 = vsel %vm5259, %v3063, -inf
    %v5312 = vsel %vm5260, %v3064, -inf
    %v5313 = vsel %vm5261, %v3065, -inf
    %v5314 = vsel %vm5262, %v3066, -inf
    %v5315 = vsel %vm5263, %v3059, -inf
    %v5316 = vsel %vm5264, %v3060, -inf
    %v5317 = vsel %vm5265, %v3061, -inf
    %v5318 = vsel %vm5266, %v3062, -inf
    %v5319 = vsel %vm5263, %v3063, -inf
    %v5320 = vsel %vm5264, %v3064, -inf
    %v5321 = vsel %vm5265, %v3065, -inf
    %v5322 = vsel %vm5266, %v3066, -inf
    %v5323 = vsel %vm5267, %v3059, -inf
    %v5324 = vsel %vm5268, %v3060, -inf
    %v5325 = vsel %vm5269, %v3061, -inf
    %v5326 = vsel %vm5270, %v3062, -inf
    %v5327 = vsel %vm5267, %v3063, -inf
    %v5328 = vsel %vm5268, %v3064, -inf
    %v5329 = vsel %vm5269, %v3065, -inf
    %v5330 = vsel %vm5270, %v3066, -inf
    %v5331 = vsel %vm5271, %v3059, -inf
    %v5332 = vsel %vm5272, %v3060, -inf
    %v5333 = vsel %vm5273, %v3061, -inf
    %v5334 = vsel %vm5274, %v3062, -inf
    %v5335 = vsel %vm5271, %v3063, -inf
    %v5336 = vsel %vm5272, %v3064, -inf
    %v5337 = vsel %vm5273, %v3065, -inf
    %v5338 = vsel %vm5274, %v3066, -inf
    %v5339 = vmax.f32 %v5275, %v5276
    %v5340 = vmax.f32 %v5339, %v5277
    %v5341 = vmax.f32 %v5340, %v5278
    %5342 = vmax.xlane.f32.xlu0 %v5341
    %v5343 = vpop.xlane.xlu0 %5342
    %v5344 = vmax.f32 %v5279, %v5280
    %v5345 = vmax.f32 %v5344, %v5281
    %v5346 = vmax.f32 %v5345, %v5282
    %5347 = vmax.xlane.f32.xlu0 %v5346
    %v5348 = vpop.xlane.xlu0 %5347
    %v5349 = vmax.f32 %v5283, %v5284
    %v5350 = vmax.f32 %v5349, %v5285
    %v5351 = vmax.f32 %v5350, %v5286
    %5352 = vmax.xlane.f32.xlu0 %v5351
    %v5353 = vpop.xlane.xlu0 %5352
    %v5354 = vmax.f32 %v5287, %v5288
    %v5355 = vmax.f32 %v5354, %v5289
    %v5356 = vmax.f32 %v5355, %v5290
    %5357 = vmax.xlane.f32.xlu0 %v5356
    %v5358 = vpop.xlane.xlu0 %5357
    %v5359 = vmax.f32 %v5291, %v5292
    %v5360 = vmax.f32 %v5359, %v5293
    %v5361 = vmax.f32 %v5360, %v5294
    %5362 = vmax.xlane.f32.xlu0 %v5361
    %v5363 = vpop.xlane.xlu0 %5362
    %v5364 = vmax.f32 %v5295, %v5296
    %v5365 = vmax.f32 %v5364, %v5297
    %v5366 = vmax.f32 %v5365, %v5298
    %5367 = vmax.xlane.f32.xlu0 %v5366
    %v5368 = vpop.xlane.xlu0 %5367
    %v5369 = vmax.f32 %v5299, %v5300
    %v5370 = vmax.f32 %v5369, %v5301
    %v5371 = vmax.f32 %v5370, %v5302
    %5372 = vmax.xlane.f32.xlu0 %v5371
    %v5373 = vpop.xlane.xlu0 %5372
    %v5374 = vmax.f32 %v5303, %v5304
    %v5375 = vmax.f32 %v5374, %v5305
    %v5376 = vmax.f32 %v5375, %v5306
    %5377 = vmax.xlane.f32.xlu0 %v5376
    %v5378 = vpop.xlane.xlu0 %5377
    %v5379 = vmax.f32 %v5307, %v5308
    %v5380 = vmax.f32 %v5379, %v5309
    %v5381 = vmax.f32 %v5380, %v5310
    %5382 = vmax.xlane.f32.xlu0 %v5381
    %v5383 = vpop.xlane.xlu0 %5382
    %v5384 = vmax.f32 %v5311, %v5312
    %v5385 = vmax.f32 %v5384, %v5313
    %v5386 = vmax.f32 %v5385, %v5314
    %5387 = vmax.xlane.f32.xlu0 %v5386
    %v5388 = vpop.xlane.xlu0 %5387
    %v5389 = vmax.f32 %v5315, %v5316
    %v5390 = vmax.f32 %v5389, %v5317
    %v5391 = vmax.f32 %v5390, %v5318
    %5392 = vmax.xlane.f32.xlu0 %v5391
    %v5393 = vpop.xlane.xlu0 %5392
    %v5394 = vmax.f32 %v5319, %v5320
    %v5395 = vmax.f32 %v5394, %v5321
    %v5396 = vmax.f32 %v5395, %v5322
    %5397 = vmax.xlane.f32.xlu0 %v5396
    %v5398 = vpop.xlane.xlu0 %5397
    %v5399 = vmax.f32 %v5323, %v5324
    %v5400 = vmax.f32 %v5399, %v5325
    %v5401 = vmax.f32 %v5400, %v5326
    %5402 = vmax.xlane.f32.xlu0 %v5401
    %v5403 = vpop.xlane.xlu0 %5402
    %v5404 = vmax.f32 %v5327, %v5328
    %v5405 = vmax.f32 %v5404, %v5329
    %v5406 = vmax.f32 %v5405, %v5330
    %5407 = vmax.xlane.f32.xlu0 %v5406
    %v5408 = vpop.xlane.xlu0 %5407
    %v5409 = vmax.f32 %v5331, %v5332
    %v5410 = vmax.f32 %v5409, %v5333
    %v5411 = vmax.f32 %v5410, %v5334
    %5412 = vmax.xlane.f32.xlu0 %v5411
    %v5413 = vpop.xlane.xlu0 %5412
    %v5414 = vmax.f32 %v5335, %v5336
    %v5415 = vmax.f32 %v5414, %v5337
    %v5416 = vmax.f32 %v5415, %v5338
    %5417 = vmax.xlane.f32.xlu0 %v5416
    %v5418 = vpop.xlane.xlu0 %5417
    %5420 = vrot.lane.b32.xlu0 %v3894, 16
    %v5421 = vpop.permute.xlu0 %5420
    %5424 = vrot.lane.b32.xlu0 %v4473, 32
    %v5425 = vpop.permute.xlu0 %5424
    %5428 = vrot.lane.b32.xlu0 %v5028, 48
    %v5429 = vpop.permute.xlu0 %5428
    %v5447 = vadd.s32 %v3017, 4294967232
    %v5448 = vlaneseq
    %v5449 = vshrl.u32 %v5448, 7
    %v5450 = vsub.s32 %v5447, %v5449
    %v5451 = vrot.slane %v3617, %v5450
    %v5452 = vadd.s32 %v3017, 4294967224
    %v5453 = vlaneseq
    %v5454 = vshrl.u32 %v5453, 7
    %v5455 = vsub.s32 %v5452, %v5454
    %v5456 = vrot.slane %v3622, %v5455
    %vm5457 = vcmask 654912
    %v5458 = vsel %vm5457, %v5456, %v5451
    %v5459 = vlaneseq
    %v5460 = vshrl.u32 %v5459, 7
    %v5461 = vsub.s32 %v5447, %v5460
    %v5462 = vrot.slane %v3627, %v5461
    %v5463 = vlaneseq
    %v5464 = vshrl.u32 %v5463, 7
    %v5465 = vsub.s32 %v5452, %v5464
    %v5466 = vrot.slane %v3632, %v5465
    %v5467 = vsel %vm5457, %v5466, %v5462
    %v5468 = vlaneseq
    %v5469 = vshrl.u32 %v5468, 7
    %v5470 = vsub.s32 %v5447, %v5469
    %v5471 = vrot.slane %v3637, %v5470
    %v5472 = vlaneseq
    %v5473 = vshrl.u32 %v5472, 7
    %v5474 = vsub.s32 %v5452, %v5473
    %v5475 = vrot.slane %v3642, %v5474
    %v5476 = vsel %vm5457, %v5475, %v5471
    %v5477 = vlaneseq
    %v5478 = vshrl.u32 %v5477, 7
    %v5479 = vsub.s32 %v5447, %v5478
    %v5480 = vrot.slane %v3647, %v5479
    %v5481 = vlaneseq
    %v5482 = vshrl.u32 %v5481, 7
    %v5483 = vsub.s32 %v5452, %v5482
    %v5484 = vrot.slane %v3652, %v5483
    %v5485 = vsel %vm5457, %v5484, %v5480
    %v5486 = vlaneseq
    %v5487 = vshrl.u32 %v5486, 7
    %v5488 = vsub.s32 %v5447, %v5487
    %v5489 = vrot.slane %v3657, %v5488
    %v5490 = vlaneseq
    %v5491 = vshrl.u32 %v5490, 7
    %v5492 = vsub.s32 %v5452, %v5491
    %v5493 = vrot.slane %v3662, %v5492
    %v5494 = vsel %vm5457, %v5493, %v5489
    %v5495 = vlaneseq
    %v5496 = vshrl.u32 %v5495, 7
    %v5497 = vsub.s32 %v5447, %v5496
    %v5498 = vrot.slane %v3667, %v5497
    %v5499 = vlaneseq
    %v5500 = vshrl.u32 %v5499, 7
    %v5501 = vsub.s32 %v5452, %v5500
    %v5502 = vrot.slane %v3672, %v5501
    %v5503 = vsel %vm5457, %v5502, %v5498
    %v5504 = vlaneseq
    %v5505 = vshrl.u32 %v5504, 7
    %v5506 = vsub.s32 %v5447, %v5505
    %v5507 = vrot.slane %v3677, %v5506
    %v5508 = vlaneseq
    %v5509 = vshrl.u32 %v5508, 7
    %v5510 = vsub.s32 %v5452, %v5509
    %v5511 = vrot.slane %v3682, %v5510
    %v5512 = vsel %vm5457, %v5511, %v5507
    %v5513 = vlaneseq
    %v5514 = vshrl.u32 %v5513, 7
    %v5515 = vsub.s32 %v5447, %v5514
    %v5516 = vrot.slane %v3687, %v5515
    %v5517 = vlaneseq
    %v5518 = vshrl.u32 %v5517, 7
    %v5519 = vsub.s32 %v5452, %v5518
    %v5520 = vrot.slane %v3692, %v5519
    %v5521 = vsel %vm5457, %v5520, %v5516
    %vm5522 = vcmask 1041409
    %v5523 = vsel %vm5522, %v5467, %v5458
    %vm5524 = vcmask 1042434
    %v5525 = vsel %vm5524, %v5476, %v5523
    %vm5526 = vcmask 1043459
    %v5527 = vsel %vm5526, %v5485, %v5525
    %vm5528 = vcmask 1044484
    %v5529 = vsel %vm5528, %v5494, %v5527
    %vm5530 = vcmask 1045509
    %v5531 = vsel %vm5530, %v5503, %v5529
    %vm5532 = vcmask 1046534
    %v5533 = vsel %vm5532, %v5512, %v5531
    %vm5534 = vcmask 1047559
    %v5535 = vsel %vm5534, %v5521, %v5533
    %v5553 = vadd.s32 %v3017, 4294967216
    %v5554 = vlaneseq
    %v5555 = vshrl.u32 %v5554, 7
    %v5556 = vsub.s32 %v5553, %v5555
    %v5557 = vrot.slane %v4209, %v5556
    %v5558 = vadd.s32 %v3017, 4294967208
    %v5559 = vlaneseq
    %v5560 = vshrl.u32 %v5559, 7
    %v5561 = vsub.s32 %v5558, %v5560
    %v5562 = vrot.slane %v4214, %v5561
    %vm5563 = vcmask 786112
    %v5564 = vsel %vm5563, %v5562, %v5557
    %v5565 = vlaneseq
    %v5566 = vshrl.u32 %v5565, 7
    %v5567 = vsub.s32 %v5553, %v5566
    %v5568 = vrot.slane %v4219, %v5567
    %v5569 = vlaneseq
    %v5570 = vshrl.u32 %v5569, 7
    %v5571 = vsub.s32 %v5558, %v5570
    %v5572 = vrot.slane %v4224, %v5571
    %v5573 = vsel %vm5563, %v5572, %v5568
    %v5574 = vlaneseq
    %v5575 = vshrl.u32 %v5574, 7
    %v5576 = vsub.s32 %v5553, %v5575
    %v5577 = vrot.slane %v4229, %v5576
    %v5578 = vlaneseq
    %v5579 = vshrl.u32 %v5578, 7
    %v5580 = vsub.s32 %v5558, %v5579
    %v5581 = vrot.slane %v4234, %v5580
    %v5582 = vsel %vm5563, %v5581, %v5577
    %v5583 = vlaneseq
    %v5584 = vshrl.u32 %v5583, 7
    %v5585 = vsub.s32 %v5553, %v5584
    %v5586 = vrot.slane %v4239, %v5585
    %v5587 = vlaneseq
    %v5588 = vshrl.u32 %v5587, 7
    %v5589 = vsub.s32 %v5558, %v5588
    %v5590 = vrot.slane %v4244, %v5589
    %v5591 = vsel %vm5563, %v5590, %v5586
    %v5592 = vlaneseq
    %v5593 = vshrl.u32 %v5592, 7
    %v5594 = vsub.s32 %v5553, %v5593
    %v5595 = vrot.slane %v4249, %v5594
    %v5596 = vlaneseq
    %v5597 = vshrl.u32 %v5596, 7
    %v5598 = vsub.s32 %v5558, %v5597
    %v5599 = vrot.slane %v4254, %v5598
    %v5600 = vsel %vm5563, %v5599, %v5595
    %v5601 = vlaneseq
    %v5602 = vshrl.u32 %v5601, 7
    %v5603 = vsub.s32 %v5553, %v5602
    %v5604 = vrot.slane %v4259, %v5603
    %v5605 = vlaneseq
    %v5606 = vshrl.u32 %v5605, 7
    %v5607 = vsub.s32 %v5558, %v5606
    %v5608 = vrot.slane %v4264, %v5607
    %v5609 = vsel %vm5563, %v5608, %v5604
    %v5610 = vlaneseq
    %v5611 = vshrl.u32 %v5610, 7
    %v5612 = vsub.s32 %v5553, %v5611
    %v5613 = vrot.slane %v4269, %v5612
    %v5614 = vlaneseq
    %v5615 = vshrl.u32 %v5614, 7
    %v5616 = vsub.s32 %v5558, %v5615
    %v5617 = vrot.slane %v4274, %v5616
    %v5618 = vsel %vm5563, %v5617, %v5613
    %v5619 = vlaneseq
    %v5620 = vshrl.u32 %v5619, 7
    %v5621 = vsub.s32 %v5553, %v5620
    %v5622 = vrot.slane %v4279, %v5621
    %v5623 = vlaneseq
    %v5624 = vshrl.u32 %v5623, 7
    %v5625 = vsub.s32 %v5558, %v5624
    %v5626 = vrot.slane %v4284, %v5625
    %v5627 = vsel %vm5563, %v5626, %v5622
    %v5628 = vsel %vm5522, %v5573, %v5564
    %v5629 = vsel %vm5524, %v5582, %v5628
    %v5630 = vsel %vm5526, %v5591, %v5629
    %v5631 = vsel %vm5528, %v5600, %v5630
    %v5632 = vsel %vm5530, %v5609, %v5631
    %v5633 = vsel %vm5532, %v5618, %v5632
    %v5634 = vsel %vm5534, %v5627, %v5633
    %v5652 = vadd.s32 %v3017, 4294967200
    %v5653 = vlaneseq
    %v5654 = vshrl.u32 %v5653, 7
    %v5655 = vsub.s32 %v5652, %v5654
    %v5656 = vrot.slane %v4788, %v5655
    %v5657 = vadd.s32 %v3017, 4294967192
    %v5658 = vlaneseq
    %v5659 = vshrl.u32 %v5658, 7
    %v5660 = vsub.s32 %v5657, %v5659
    %v5661 = vrot.slane %v4793, %v5660
    %vm5662 = vcmask 917312
    %v5663 = vsel %vm5662, %v5661, %v5656
    %v5664 = vlaneseq
    %v5665 = vshrl.u32 %v5664, 7
    %v5666 = vsub.s32 %v5652, %v5665
    %v5667 = vrot.slane %v4798, %v5666
    %v5668 = vlaneseq
    %v5669 = vshrl.u32 %v5668, 7
    %v5670 = vsub.s32 %v5657, %v5669
    %v5671 = vrot.slane %v4803, %v5670
    %v5672 = vsel %vm5662, %v5671, %v5667
    %v5673 = vlaneseq
    %v5674 = vshrl.u32 %v5673, 7
    %v5675 = vsub.s32 %v5652, %v5674
    %v5676 = vrot.slane %v4808, %v5675
    %v5677 = vlaneseq
    %v5678 = vshrl.u32 %v5677, 7
    %v5679 = vsub.s32 %v5657, %v5678
    %v5680 = vrot.slane %v4813, %v5679
    %v5681 = vsel %vm5662, %v5680, %v5676
    %v5682 = vlaneseq
    %v5683 = vshrl.u32 %v5682, 7
    %v5684 = vsub.s32 %v5652, %v5683
    %v5685 = vrot.slane %v4818, %v5684
    %v5686 = vlaneseq
    %v5687 = vshrl.u32 %v5686, 7
    %v5688 = vsub.s32 %v5657, %v5687
    %v5689 = vrot.slane %v4823, %v5688
    %v5690 = vsel %vm5662, %v5689, %v5685
    %v5691 = vlaneseq
    %v5692 = vshrl.u32 %v5691, 7
    %v5693 = vsub.s32 %v5652, %v5692
    %v5694 = vrot.slane %v4828, %v5693
    %v5695 = vlaneseq
    %v5696 = vshrl.u32 %v5695, 7
    %v5697 = vsub.s32 %v5657, %v5696
    %v5698 = vrot.slane %v4833, %v5697
    %v5699 = vsel %vm5662, %v5698, %v5694
    %v5700 = vlaneseq
    %v5701 = vshrl.u32 %v5700, 7
    %v5702 = vsub.s32 %v5652, %v5701
    %v5703 = vrot.slane %v4838, %v5702
    %v5704 = vlaneseq
    %v5705 = vshrl.u32 %v5704, 7
    %v5706 = vsub.s32 %v5657, %v5705
    %v5707 = vrot.slane %v4843, %v5706
    %v5708 = vsel %vm5662, %v5707, %v5703
    %v5709 = vlaneseq
    %v5710 = vshrl.u32 %v5709, 7
    %v5711 = vsub.s32 %v5652, %v5710
    %v5712 = vrot.slane %v4848, %v5711
    %v5713 = vlaneseq
    %v5714 = vshrl.u32 %v5713, 7
    %v5715 = vsub.s32 %v5657, %v5714
    %v5716 = vrot.slane %v4853, %v5715
    %v5717 = vsel %vm5662, %v5716, %v5712
    %v5718 = vlaneseq
    %v5719 = vshrl.u32 %v5718, 7
    %v5720 = vsub.s32 %v5652, %v5719
    %v5721 = vrot.slane %v4858, %v5720
    %v5722 = vlaneseq
    %v5723 = vshrl.u32 %v5722, 7
    %v5724 = vsub.s32 %v5657, %v5723
    %v5725 = vrot.slane %v4863, %v5724
    %v5726 = vsel %vm5662, %v5725, %v5721
    %v5727 = vsel %vm5522, %v5672, %v5663
    %v5728 = vsel %vm5524, %v5681, %v5727
    %v5729 = vsel %vm5526, %v5690, %v5728
    %v5730 = vsel %vm5528, %v5699, %v5729
    %v5731 = vsel %vm5530, %v5708, %v5730
    %v5732 = vsel %vm5532, %v5717, %v5731
    %v5733 = vsel %vm5534, %v5726, %v5732
    %v5751 = vadd.s32 %v3017, 4294967184
    %v5752 = vlaneseq
    %v5753 = vshrl.u32 %v5752, 7
    %v5754 = vsub.s32 %v5751, %v5753
    %v5755 = vrot.slane %v5343, %v5754
    %v5756 = vadd.s32 %v3017, 4294967176
    %v5757 = vlaneseq
    %v5758 = vshrl.u32 %v5757, 7
    %v5759 = vsub.s32 %v5756, %v5758
    %v5760 = vrot.slane %v5348, %v5759
    %vm5761 = vcmask 1048512
    %v5762 = vsel %vm5761, %v5760, %v5755
    %v5763 = vlaneseq
    %v5764 = vshrl.u32 %v5763, 7
    %v5765 = vsub.s32 %v5751, %v5764
    %v5766 = vrot.slane %v5353, %v5765
    %v5767 = vlaneseq
    %v5768 = vshrl.u32 %v5767, 7
    %v5769 = vsub.s32 %v5756, %v5768
    %v5770 = vrot.slane %v5358, %v5769
    %v5771 = vsel %vm5761, %v5770, %v5766
    %v5772 = vlaneseq
    %v5773 = vshrl.u32 %v5772, 7
    %v5774 = vsub.s32 %v5751, %v5773
    %v5775 = vrot.slane %v5363, %v5774
    %v5776 = vlaneseq
    %v5777 = vshrl.u32 %v5776, 7
    %v5778 = vsub.s32 %v5756, %v5777
    %v5779 = vrot.slane %v5368, %v5778
    %v5780 = vsel %vm5761, %v5779, %v5775
    %v5781 = vlaneseq
    %v5782 = vshrl.u32 %v5781, 7
    %v5783 = vsub.s32 %v5751, %v5782
    %v5784 = vrot.slane %v5373, %v5783
    %v5785 = vlaneseq
    %v5786 = vshrl.u32 %v5785, 7
    %v5787 = vsub.s32 %v5756, %v5786
    %v5788 = vrot.slane %v5378, %v5787
    %v5789 = vsel %vm5761, %v5788, %v5784
    %v5790 = vlaneseq
    %v5791 = vshrl.u32 %v5790, 7
    %v5792 = vsub.s32 %v5751, %v5791
    %v5793 = vrot.slane %v5383, %v5792
    %v5794 = vlaneseq
    %v5795 = vshrl.u32 %v5794, 7
    %v5796 = vsub.s32 %v5756, %v5795
    %v5797 = vrot.slane %v5388, %v5796
    %v5798 = vsel %vm5761, %v5797, %v5793
    %v5799 = vlaneseq
    %v5800 = vshrl.u32 %v5799, 7
    %v5801 = vsub.s32 %v5751, %v5800
    %v5802 = vrot.slane %v5393, %v5801
    %v5803 = vlaneseq
    %v5804 = vshrl.u32 %v5803, 7
    %v5805 = vsub.s32 %v5756, %v5804
    %v5806 = vrot.slane %v5398, %v5805
    %v5807 = vsel %vm5761, %v5806, %v5802
    %v5808 = vlaneseq
    %v5809 = vshrl.u32 %v5808, 7
    %v5810 = vsub.s32 %v5751, %v5809
    %v5811 = vrot.slane %v5403, %v5810
    %v5812 = vlaneseq
    %v5813 = vshrl.u32 %v5812, 7
    %v5814 = vsub.s32 %v5756, %v5813
    %v5815 = vrot.slane %v5408, %v5814
    %v5816 = vsel %vm5761, %v5815, %v5811
    %v5817 = vlaneseq
    %v5818 = vshrl.u32 %v5817, 7
    %v5819 = vsub.s32 %v5751, %v5818
    %v5820 = vrot.slane %v5413, %v5819
    %v5821 = vlaneseq
    %v5822 = vshrl.u32 %v5821, 7
    %v5823 = vsub.s32 %v5756, %v5822
    %v5824 = vrot.slane %v5418, %v5823
    %v5825 = vsel %vm5761, %v5824, %v5820
    %v5826 = vsel %vm5522, %v5771, %v5762
    %v5827 = vsel %vm5524, %v5780, %v5826
    %v5828 = vsel %vm5526, %v5789, %v5827
    %v5829 = vsel %vm5528, %v5798, %v5828
    %v5830 = vsel %vm5530, %v5807, %v5829
    %v5831 = vsel %vm5532, %v5816, %v5830
    %v5832 = vsel %vm5534, %v5825, %v5831
    %v5834 = vsel %vm1949, %v3302, %v5421
    %v5835 = vsel %vm2014, %v5834, %v5425
    %v5836 = vsel %vm2079, %v5835, %v5429
    %v5837 = vsel %vm2144, %v5836, %v5535
    %v5838 = vsel %vm2209, %v5837, %v5634
    %v5839 = vsel %vm2274, %v5838, %v5733
    %v5840 = vsel %vm2339, %v5839, %v5832
    %v5841 = vld [vmem:[%s5] sm:$0xff]
    %v5842 = vld [vmem:[%s5 + $0x8] sm:$0xff]
    %v5843 = vld [vmem:[%s5 + $0x10] sm:$0xff]
    %v5844 = vld [vmem:[%s5 + $0x18] sm:$0xff]
    %v5845 = vld [vmem:[%s5 + $0x20] sm:$0xff]
    %v5846 = vld [vmem:[%s5 + $0x28] sm:$0xff]
    %v5847 = vld [vmem:[%s5 + $0x30] sm:$0xff]
    %v5848 = vld [vmem:[%s5 + $0x38] sm:$0xff]
    %v5849 = vld [vmem:[%s5 + $0x40] sm:$0xff]
    %v5850 = vld [vmem:[%s5 + $0x48] sm:$0xff]
    %v5851 = vld [vmem:[%s5 + $0x50] sm:$0xff]
    %v5852 = vld [vmem:[%s5 + $0x58] sm:$0xff]
    %v5853 = vld [vmem:[%s5 + $0x60] sm:$0xff]
    %v5854 = vld [vmem:[%s5 + $0x68] sm:$0xff]
    %v5855 = vld [vmem:[%s5 + $0x70] sm:$0xff]
    %v5856 = vld [vmem:[%s5 + $0x78] sm:$0xff]
    %v5857 = vld [vmem:[%s6] sm:$0x1]
    %v5859 = vlaneseq
    %v5860 = vshrl.u32 %v5859, 7
    %v5861 = vsub.s32 0, %v5860
    %v5862 = vrot.slane %v5857, %v5861
    %5864 = vmatprep.subr.mxu0 0.0
    %5865 = vmatpush1.msra.mxu0 %v5841
    %5866 = vmatprep.subr.mxu0 0.0
    %5867 = vmatpush1.msra.mxu0 %v5842
    %5868 = vmatprep.subr.mxu0 0.0
    %5869 = vmatpush1.msra.mxu0 %v5843
    %5870 = vmatprep.subr.mxu0 0.0
    %5871 = vmatpush1.msra.mxu0 %v5844
    %5872 = vmatprep.subr.mxu0 0.0
    %5873 = vmatpush1.msra.mxu0 %v5845
    %5874 = vmatprep.subr.mxu0 0.0
    %5875 = vmatpush1.msra.mxu0 %v5846
    %5876 = vmatprep.subr.mxu0 0.0
    %5877 = vmatpush1.msra.mxu0 %v5847
    %5878 = vmatprep.subr.mxu0 0.0
    %5879 = vmatpush1.msra.mxu0 %v5848
    %5880 = vmatprep.subr.mxu0 0.0
    %5881 = vmatpush1.msra.mxu0 %v5849
    %5882 = vmatprep.subr.mxu0 0.0
    %5883 = vmatpush1.msra.mxu0 %v5850
    %5884 = vmatprep.subr.mxu0 0.0
    %5885 = vmatpush1.msra.mxu0 %v5851
    %5886 = vmatprep.subr.mxu0 0.0
    %5887 = vmatpush1.msra.mxu0 %v5852
    %5888 = vmatprep.subr.mxu0 0.0
    %5889 = vmatpush1.msra.mxu0 %v5853
    %5890 = vmatprep.subr.mxu0 0.0
    %5891 = vmatpush1.msra.mxu0 %v5854
    %5892 = vmatprep.subr.mxu0 0.0
    %5893 = vmatpush1.msra.mxu0 %v5855
    %5894 = vmatprep.subr.mxu0 0.0
    %5895 = vmatpush1.msra.mxu0 %v5856
    %5896 = vmatprep.subr.mxu0 0.0
    %5897 = vmatpush1.msra.mxu0 0.0
    %5898 = vmatprep.subr.mxu0 0.0
    %5899 = vmatpush1.msra.mxu0 0.0
    %5900 = vmatprep.subr.mxu0 0.0
    %5901 = vmatpush1.msra.mxu0 0.0
    %5902 = vmatprep.subr.mxu0 0.0
    %5903 = vmatpush1.msra.mxu0 0.0
    %5904 = vmatprep.subr.mxu0 0.0
    %5905 = vmatpush1.msra.mxu0 0.0
    %5906 = vmatprep.subr.mxu0 0.0
    %5907 = vmatpush1.msra.mxu0 0.0
    %5908 = vmatprep.subr.mxu0 0.0
    %5909 = vmatpush1.msra.mxu0 0.0
    %5910 = vmatprep.subr.mxu0 0.0
    %5911 = vmatpush1.msra.mxu0 0.0
    %5912 = vmatprep.subr.mxu0 0.0
    %5913 = vmatpush1.msra.mxu0 0.0
    %5914 = vmatprep.subr.mxu0 0.0
    %5915 = vmatpush1.msra.mxu0 0.0
    %5916 = vmatprep.subr.mxu0 0.0
    %5917 = vmatpush1.msra.mxu0 0.0
    %5918 = vmatprep.subr.mxu0 0.0
    %5919 = vmatpush1.msra.mxu0 0.0
    %5920 = vmatprep.subr.mxu0 0.0
    %5921 = vmatpush1.msra.mxu0 0.0
    %5922 = vmatprep.subr.mxu0 0.0
    %5923 = vmatpush1.msra.mxu0 0.0
    %5924 = vmatprep.subr.mxu0 0.0
    %5925 = vmatpush1.msra.mxu0 0.0
    %5926 = vmatprep.subr.mxu0 0.0
    %5927 = vmatpush1.msra.mxu0 0.0
    %5928 = vmatprep.mubr.f32.mxu0 0.0
    %5929 = vmatmul.mubr.f32.gmra.mrb[0].mxu0 %v5840
    %v5930 = vpop.f32.mrb[0].mxu0
    %v5931 = vadd.f32 %v5862, %v5930
    %v5932 = vpop.f32.mrb[0].mxu0
    %5933 = vdwg.mxu0
    %v5934 = vmul.f32 %v5931, %v5931
    %v5935 = vsel %vm2144, %v5934, 0.0
    %5936 = vadd.xlane.f32.xlu0 %v5935
    %v5937 = vpop.xlane.xlu0 %5936
    %v5938 = vmax.f32 %v5937, 1e-24
    %v5939 = vrsqrt.pop %v5938
    %v5940 = vmul.f32 %v5931, %v5939
    %5941 = vst.msk [vmem:[#allocation2] sm:$0xff] %vm2144, %v5940
    // Predicated region
    $region30: #{baseline_roi_forward.1} parent=1 // pred_check
      _
    $region31: #{baseline_roi_forward.1} parent=1 // pred_check_branch
      %5943 = sbr.rel (0) target = $region33
    $region32: #{baseline_roi_forward.1} parent=1 // pred_region
      %s5945 = ssub.s32 128, 128
      %5946 = vsyncadd [#allocation3], %s5945
      %s5948 = sshll.u32 [#allocation2], 4
      %s5949 = int_to_ptr.vmem [resolvable:$true] %s5948
      %5951 = dma.vmem_to_hbm [thread:$0]  %s5949, 128, %s7, [#allocation3]
    $region33: #{baseline_roi_forward.1} parent=1 // pred_fallthru
      _
    // Predicated region
    $region34: #{baseline_roi_forward.1} parent=1 // pred_check
      _
    $region35: #{baseline_roi_forward.1} parent=1 // pred_check_branch
      %5953 = sbr.rel (0) target = $region37
    $region36: #{baseline_roi_forward.1} parent=1 // pred_region
      %5954 = dma.done [#allocation3], 128
    $region37: #{baseline_roi_forward.1} parent=1 // pred_fallthru
      _
    %5955 = vsyncpa [#allocation3], 1

</llo_original>
